<compile_context>
chip_gen: v7x
topology: tpu7x:2x2x1
jax: 0.10.0
libtpu: 0.0.40
codegen_flags: <defaults>
</compile_context>

<pallas_src>
import functools
import math

import jax
import jax.numpy as jnp
from jax.experimental import pallas as pl
from jax.experimental.pallas import tpu as pltpu


def _sigmoid(x):
    # sigmoid(x) = 1 / (1 + exp(-x)); exp + approx reciprocal both run on the EUP slot.
    return pl.reciprocal(1.0 + jnp.exp(-x), approx=True)


def homo_layer_kernel(adj_ref, h_ref, wfu_ref, whh_ref,
                      bfu_ref, bih_ref, bhh_ref, lnw_ref, lnb_ref,
                      out_ref):
    """Forward pass of HomoLayer for one block of Gb graphs (one grid step)."""
    Gb, N, D = h_ref.shape
    rows = Gb * N
    TD = 3 * D

    adj = adj_ref[...]                 # (Gb, N, N) bf16, adj[g, v, u] = 1 iff edge u -> v
    h0 = h_ref[...]                    # (Gb, N, D) f32  residual input
    wfu = wfu_ref[...]                 # (D, 3D) bf16  = W_msg^T @ W_ih^T, gates packed [r|z|n]
    whh = whh_ref[...]                 # (D, 3D) bf16  = W_hh^T

    # Loop-invariant quantities, hoisted out of the 2-step unrolled loop.
    deg = jnp.sum(adj.astype(jnp.float32), axis=-1, keepdims=True)       # (Gb, N, 1) in-degree
    gi_bias = (deg * bfu_ref[...] + bih_ref[...]).reshape(rows, TD)      # (rows, 3D)
    gh_bias = bhh_ref[...]                                               # (1, 3D)

    h0f = h0.reshape(rows, D)          # free: N = 8 is one sublane tile
    h = h0f
    # n_steps = 2 (static unroll)
    for _ in range(2):
        # a  = adj @ (h W_msg^T) + deg * b_msg  (message + sum aggregation)
        # gi = a @ W_ih^T + b_ih = (adj @ h) @ (W_msg^T W_ih^T) + deg*(b_msg W_ih^T) + b_ih
        hm = jnp.einsum('bvu,bud->bvd', adj, h.reshape(Gb, N, D).astype(jnp.bfloat16),
                        preferred_element_type=jnp.float32)              # (Gb, N, D)
        gi = jnp.dot(hm.reshape(rows, D).astype(jnp.bfloat16), wfu,
                     preferred_element_type=jnp.float32) + gi_bias       # (rows, 3D)
        gh = jnp.dot(h.astype(jnp.bfloat16), whh,
                     preferred_element_type=jnp.float32) + gh_bias       # (rows, 3D)

        # GRUCell(a, h), torch gate order [r | z | n]; r and z share one fused sigmoid.
        rz = _sigmoid(gi[:, :2 * D] + gh[:, :2 * D])                     # (rows, 2D)
        r = rz[:, :D]
        z = rz[:, D:]
        n = jnp.tanh(gi[:, 2 * D:] + r * gh[:, 2 * D:])
        h = (1.0 - z) * n + z * h

    # residual + LayerNorm over the (unpadded) feature axis
    x = h + h0f
    mean = jnp.mean(x, axis=-1, keepdims=True)
    cen = x - mean
    var = jnp.mean(cen * cen, axis=-1, keepdims=True)
    y = cen * jax.lax.rsqrt(var + 1e-5)
    y = y * lnw_ref[...] + lnb_ref[...]

    # leaky_relu (default negative_slope = 0.01)
    y = jnp.where(y > 0.0, y, 0.01 * y)

    # TODO(synk): Dropout(0.3) is identity in eval mode; training-mode RNG mask not implemented.
    out_ref[...] = y.reshape(Gb, N, D)


@functools.partial(jax.jit, static_argnames=("graphs_per_block",))
def homo_layer(h, adj, params, *, graphs_per_block=16):
    """h: (G, N, D) node features; adj: (G, N, N) dense adjacency (adj[g,v,u]=1 for edge u->v)."""
    G, N, D = h.shape
    Gb = min(graphs_per_block, G)
    num_blocks = (G + Gb - 1) // Gb
    Gp = num_blocks * Gb

    h = h.astype(jnp.float32)
    adj = adj.astype(jnp.bfloat16)        # 0/1 entries exact in bf16; halves adj DMA bytes
    if Gp != G:                           # pad graph axis only (no feature-axis pad/slice)
        h = jnp.pad(h, ((0, Gp - G), (0, 0), (0, 0)))
        adj = jnp.pad(adj, ((0, Gp - G), (0, 0), (0, 0)))

    def shared(x):                        # weights/biases: full-array blocks, constant index
        return pl.BlockSpec(x.shape, lambda g: (0,) * x.ndim)

    out = pl.pallas_call(
        homo_layer_kernel,
        out_shape=jax.ShapeDtypeStruct((Gp, N, D), jnp.float32),
        grid=(num_blocks,),
        in_specs=[
            pl.BlockSpec((Gb, N, N), lambda g: (g, 0, 0)),   # adj block (bf16)
            pl.BlockSpec((Gb, N, D), lambda g: (g, 0, 0)),   # h block (unpadded)
            shared(params["wfused_t"]),                      # fused msg+GRU-input weight (bf16)
            shared(params["whh_t"]),                         # GRU hidden weight (bf16)
            shared(params["bfused"]),                        # fused message bias
            shared(params["bih"]),                           # b_ih
            shared(params["bhh"]),                           # b_hh
            shared(params["lnw"]),                           # LayerNorm weight
            shared(params["lnb"]),                           # LayerNorm bias
        ],
        out_specs=pl.BlockSpec((Gb, N, D), lambda g: (g, 0, 0)),
        compiler_params=pltpu.CompilerParams(
            dimension_semantics=("parallel",),               # shard graph blocks across v7x TCs
            vmem_limit_bytes=32 * 1024 * 1024,
        ),
    )(adj, h,
      params["wfused_t"], params["whh_t"],
      params["bfused"], params["bih"], params["bhh"],
      params["lnw"], params["lnb"])

    return out[:G] if Gp != G else out


def make_raw_params(key, hidden_dim):
    """Parameter init mirroring the module's shapes (kaiming_uniform for dim>1, bias uniform)."""
    D = hidden_dim
    k = jax.random.split(key, 6)

    def kaiming_uniform(k_, shape, fan_in):
        bound = math.sqrt(6.0 / ((1.0 + 5.0) * fan_in))
        return jax.random.uniform(k_, shape, jnp.float32, -bound, bound)

    def bias_uniform(k_, shape, fan_in):
        bound = 1.0 / math.sqrt(fan_in)
        return jax.random.uniform(k_, shape, jnp.float32, -bound, bound)

    return {
        "w_msg": kaiming_uniform(k[0], (D, D), D),        # Linear(D, D) weight
        "b_msg": bias_uniform(k[1], (D,), D),             # Linear(D, D) bias
        "w_ih": kaiming_uniform(k[2], (3 * D, D), D),     # GRUCell W_ih  (gates r|z|n)
        "w_hh": kaiming_uniform(k[3], (3 * D, D), D),     # GRUCell W_hh
        "b_ih": bias_uniform(k[4], (3 * D,), D),
        "b_hh": bias_uniform(k[5], (3 * D,), D),
    }


def prepare_params(raw):
    """Fuse the message linear into the GRU input projection; keep gates packed ([r|z|n], 3*D lanes)."""
    D = raw["w_msg"].shape[0]
    # Gate packing assumes 3*D fits comfortably in one/few lane tiles; for D near 128 prefer
    # per-gate 128-lane slots instead.
    wmsg_t = raw["w_msg"].T                                 # (D, D)
    wih_t = raw["w_ih"].T                                   # (D, 3D)
    whh_t = raw["w_hh"].T                                   # (D, 3D)

    # gi = a @ W_ih^T + b_ih with a = adj @ (h W_msg^T) + deg * b_msg
    wfused_t = wmsg_t @ wih_t                               # (D, 3D)
    bfused = raw["b_msg"][None, :] @ wih_t                  # (1, 3D)

    return {
        "wfused_t": wfused_t.astype(jnp.bfloat16),
        "whh_t": whh_t.astype(jnp.bfloat16),
        "bfused": bfused.astype(jnp.float32),
        "bih": raw["b_ih"].reshape(1, 3 * D).astype(jnp.float32),
        "bhh": raw["b_hh"].reshape(1, 3 * D).astype(jnp.float32),
        "lnw": jnp.ones((1, D), jnp.float32),               # LayerNorm weight (ones)
        "lnb": jnp.zeros((1, D), jnp.float32),               # LayerNorm bias (zeros)
    }


def homo_layer_ref(h, adj, raw):
    """Pure-JAX f32 reference of the torch module (eval mode)."""
    G, N, D = h.shape
    h0 = h
    x = h
    for _ in range(2):
        msg = x @ raw["w_msg"].T + raw["b_msg"]
        a = jnp.einsum('gvu,gud->gvd', adj, msg)
        gi = a @ raw["w_ih"].T + raw["b_ih"]
        gh = x @ raw["w_hh"].T + raw["b_hh"]
        r = jax.nn.sigmoid(gi[..., :D] + gh[..., :D])
        z = jax.nn.sigmoid(gi[..., D:2 * D] + gh[..., D:2 * D])
        n = jnp.tanh(gi[..., 2 * D:] + r * gh[..., 2 * D:])
        x = (1.0 - z) * n + z * x
    y = x + h0
    mu = jnp.mean(y, axis=-1, keepdims=True)
    var = jnp.mean((y - mu) ** 2, axis=-1, keepdims=True)
    y = (y - mu) / jnp.sqrt(var + 1e-5)
    return jnp.where(y > 0.0, y, 0.01 * y)


if __name__ == "__main__":
    G = 32           # graphs total (grid of 2 blocks of 16 -> both v7x TensorCores busy)
    N = 8            # nodes per graph
    hidden_dim = 32  # feature dim

    key = jax.random.PRNGKey(0)
    k_h, k_adj, k_par = jax.random.split(key, 3)

    # node features, per graph
    h_g2 = jax.random.normal(k_h, (G, N, hidden_dim), jnp.float32)

    # deterministic small graphs: ring edges u -> (u+1) % N plus random extra edges, no self loops
    ring = jnp.zeros((N, N), jnp.float32)
    ring = ring.at[(jnp.arange(N) + 1) % N, jnp.arange(N)].set(1.0)
    extra = (jax.random.uniform(k_adj, (G, N, N)) < 0.2).astype(jnp.float32)
    extra = extra * (1.0 - jnp.eye(N, dtype=jnp.float32))
    adj = jnp.clip(ring[None, :, :] + extra, 0.0, 1.0)       # adj[g, v, u] = 1 iff edge u -> v

    raw = make_raw_params(k_par, hidden_dim)
    params = prepare_params(raw)

    out = homo_layer(h_g2, adj, params, graphs_per_block=16)
    jax.block_until_ready(out)

    assert out.shape == (G, N, hidden_dim) and out.dtype == jnp.float32
    assert bool(jnp.all(jnp.isfinite(out)))

    # loose tolerance: kernel uses bf16 MXU operands and an approximate EUP reciprocal
    ref = homo_layer_ref(h_g2, adj, raw)
    max_err = float(jnp.max(jnp.abs(out - ref)))
    assert max_err < 0.25, f"max abs error vs f32 reference too large: {max_err}"

    print("KERNEL_OK")
</pallas_src>

<mosaic_0001>
module attributes {stable_mosaic.version = 11 : i64} {
  func.func @homo_layer_kernel(%arg0: i32, %arg1: memref<16x8x8xbf16, #tpu.memory_space<vmem>>, %arg2: memref<16x8x32xf32, #tpu.memory_space<vmem>>, %arg3: memref<32x96xbf16, #tpu.memory_space<vmem>>, %arg4: memref<32x96xbf16, #tpu.memory_space<vmem>>, %arg5: memref<1x96xf32, #tpu.memory_space<vmem>>, %arg6: memref<1x96xf32, #tpu.memory_space<vmem>>, %arg7: memref<1x96xf32, #tpu.memory_space<vmem>>, %arg8: memref<1x32xf32, #tpu.memory_space<vmem>>, %arg9: memref<1x32xf32, #tpu.memory_space<vmem>>, %arg10: memref<16x8x32xf32, #tpu.memory_space<vmem>>) attributes {dimension_semantics = [#tpu.dimension_semantics<parallel>], iteration_bounds = array<i64: 2>, scalar_prefetch = 0 : i64, scratch_operands = 0 : i64, tpu.core_type = #tpu.core_type<tc>, window_params = [{transform_indices = @transform_0, window_bounds = array<i64: 16, 8, 8>}, {transform_indices = @transform_1, window_bounds = array<i64: 16, 8, 32>}, {pipeline_mode = #tpu.pipeline_mode<synchronous>, transform_indices = @transform_2, window_bounds = array<i64: 32, 96>}, {pipeline_mode = #tpu.pipeline_mode<synchronous>, transform_indices = @transform_3, window_bounds = array<i64: 32, 96>}, {pipeline_mode = #tpu.pipeline_mode<synchronous>, transform_indices = @transform_4, window_bounds = array<i64: 1, 96>}, {pipeline_mode = #tpu.pipeline_mode<synchronous>, transform_indices = @transform_5, window_bounds = array<i64: 1, 96>}, {pipeline_mode = #tpu.pipeline_mode<synchronous>, transform_indices = @transform_6, window_bounds = array<i64: 1, 96>}, {pipeline_mode = #tpu.pipeline_mode<synchronous>, transform_indices = @transform_7, window_bounds = array<i64: 1, 32>}, {pipeline_mode = #tpu.pipeline_mode<synchronous>, transform_indices = @transform_8, window_bounds = array<i64: 1, 32>}, {transform_indices = @transform_9, window_bounds = array<i64: 16, 8, 32>}]} {
    %c0 = arith.constant 0 : index
    %c0_0 = arith.constant 0 : index
    %c0_1 = arith.constant 0 : index
    %0 = vector.load %arg1[%c0, %c0_0, %c0_1] : memref<16x8x8xbf16, #tpu.memory_space<vmem>>, vector<16x8x8xbf16>
    %c0_2 = arith.constant 0 : index
    %c0_3 = arith.constant 0 : index
    %c0_4 = arith.constant 0 : index
    %1 = vector.load %arg2[%c0_2, %c0_3, %c0_4] : memref<16x8x32xf32, #tpu.memory_space<vmem>>, vector<16x8x32xf32>
    %c0_5 = arith.constant 0 : index
    %c0_6 = arith.constant 0 : index
    %2 = vector.load %arg3[%c0_5, %c0_6] : memref<32x96xbf16, #tpu.memory_space<vmem>>, vector<32x96xbf16>
    %c0_7 = arith.constant 0 : index
    %c0_8 = arith.constant 0 : index
    %3 = vector.load %arg4[%c0_7, %c0_8] : memref<32x96xbf16, #tpu.memory_space<vmem>>, vector<32x96xbf16>
    %4 = arith.extf %0 : vector<16x8x8xbf16> to vector<16x8x8xf32>
    %cst = arith.constant dense<0.000000e+00> : vector<16x8xf32>
    %5 = vector.multi_reduction <add>, %4, %cst [2] : vector<16x8x8xf32> to vector<16x8xf32>
    %6 = vector.shape_cast %5 : vector<16x8xf32> to vector<16x8x1xf32>
    %c0_9 = arith.constant 0 : index
    %c0_10 = arith.constant 0 : index
    %7 = vector.load %arg5[%c0_9, %c0_10] : memref<1x96xf32, #tpu.memory_space<vmem>>, vector<1x96xf32>
    %8 = vector.shape_cast %7 : vector<1x96xf32> to vector<1x1x96xf32>
    %9 = vector.broadcast %6 : vector<16x8x1xf32> to vector<16x8x96xf32>
    %10 = vector.broadcast %8 : vector<1x1x96xf32> to vector<16x8x96xf32>
    %11 = arith.mulf %9, %10 : vector<16x8x96xf32>
    %c0_11 = arith.constant 0 : index
    %c0_12 = arith.constant 0 : index
    %12 = vector.load %arg6[%c0_11, %c0_12] : memref<1x96xf32, #tpu.memory_space<vmem>>, vector<1x96xf32>
    %13 = vector.shape_cast %12 : vector<1x96xf32> to vector<1x1x96xf32>
    %14 = vector.broadcast %13 : vector<1x1x96xf32> to vector<16x8x96xf32>
    %15 = arith.addf %11, %14 : vector<16x8x96xf32>
    %16 = vector.shape_cast %15 : vector<16x8x96xf32> to vector<128x96xf32>
    %c0_13 = arith.constant 0 : index
    %c0_14 = arith.constant 0 : index
    %17 = vector.load %arg7[%c0_13, %c0_14] : memref<1x96xf32, #tpu.memory_space<vmem>>, vector<1x96xf32>
    %18 = vector.shape_cast %1 : vector<16x8x32xf32> to vector<128x32xf32>
    %19 = vector.shape_cast %18 : vector<128x32xf32> to vector<16x8x32xf32>
    %20 = arith.truncf %19 : vector<16x8x32xf32> to vector<16x8x32xbf16>
    "tpu.trace_start"() <{level = 10 : i32, message = "bvu,bud->bvd"}> : () -> ()
    %cst_15 = arith.constant dense<0.000000e+00> : vector<16x8x32xf32>
    %21 = tpu.matmul %0, %20, %cst_15 {dimension_numbers = #tpu.dot_dimension_numbers<[2], [1], [1], [2], [0, 0, 0, 1, 1, 2], [0], [0]>} : vector<16x8x8xbf16>, vector<16x8x32xbf16>, vector<16x8x32xf32> -> vector<16x8x32xf32>
    "tpu.trace_stop"() : () -> ()
    %22 = vector.shape_cast %21 : vector<16x8x32xf32> to vector<128x32xf32>
    %23 = arith.truncf %22 : vector<128x32xf32> to vector<128x32xbf16>
    %cst_16 = arith.constant dense<0.000000e+00> : vector<128x96xf32>
    %24 = tpu.matmul %23, %2, %cst_16 {dimension_numbers = #tpu.dot_dimension_numbers<[1], [0], [0], [1], [0, 0, 1, 1], [], []>} : vector<128x32xbf16>, vector<32x96xbf16>, vector<128x96xf32> -> vector<128x96xf32>
    %25 = arith.addf %24, %16 : vector<128x96xf32>
    %26 = arith.truncf %18 : vector<128x32xf32> to vector<128x32xbf16>
    %cst_17 = arith.constant dense<0.000000e+00> : vector<128x96xf32>
    %27 = tpu.matmul %26, %3, %cst_17 {dimension_numbers = #tpu.dot_dimension_numbers<[1], [0], [0], [1], [0, 0, 1, 1], [], []>} : vector<128x32xbf16>, vector<32x96xbf16>, vector<128x96xf32> -> vector<128x96xf32>
    %28 = vector.broadcast %17 : vector<1x96xf32> to vector<128x96xf32>
    %29 = arith.addf %27, %28 : vector<128x96xf32>
    %30 = vector.extract_strided_slice %25 {offsets = [0, 0], sizes = [128, 64], strides = [1, 1]} : vector<128x96xf32> to vector<128x64xf32>
    %31 = vector.extract_strided_slice %29 {offsets = [0, 0], sizes = [128, 64], strides = [1, 1]} : vector<128x96xf32> to vector<128x64xf32>
    %32 = arith.addf %30, %31 : vector<128x64xf32>
    %cst_18 = arith.constant 0.000000e+00 : f32
    %33 = vector.broadcast %cst_18 : f32 to vector<128x64xf32>
    %34 = arith.subf %33, %32 : vector<128x64xf32>
    %35 = math.exp %34 : vector<128x64xf32>
    %cst_19 = arith.constant 1.000000e+00 : f32
    %36 = vector.broadcast %cst_19 : f32 to vector<128x64xf32>
    %37 = arith.addf %36, %35 : vector<128x64xf32>
    %38 = tpu.reciprocal %37 {approx = true} : vector<128x64xf32> -> vector<128x64xf32>
    %39 = vector.extract_strided_slice %38 {offsets = [0, 0], sizes = [128, 32], strides = [1, 1]} : vector<128x64xf32> to vector<128x32xf32>
    %40 = vector.extract_strided_slice %38 {offsets = [0, 32], sizes = [128, 32], strides = [1, 1]} : vector<128x64xf32> to vector<128x32xf32>
    %41 = vector.extract_strided_slice %25 {offsets = [0, 64], sizes = [128, 32], strides = [1, 1]} : vector<128x96xf32> to vector<128x32xf32>
    %42 = vector.extract_strided_slice %29 {offsets = [0, 64], sizes = [128, 32], strides = [1, 1]} : vector<128x96xf32> to vector<128x32xf32>
    %43 = arith.mulf %39, %42 : vector<128x32xf32>
    %44 = arith.addf %41, %43 : vector<128x32xf32>
    %45 = math.tanh %44 : vector<128x32xf32>
    %cst_20 = arith.constant 1.000000e+00 : f32
    %46 = vector.broadcast %cst_20 : f32 to vector<128x32xf32>
    %47 = arith.subf %46, %40 : vector<128x32xf32>
    %48 = arith.mulf %47, %45 : vector<128x32xf32>
    %49 = arith.mulf %40, %18 : vector<128x32xf32>
    %50 = arith.addf %48, %49 : vector<128x32xf32>
    %51 = vector.shape_cast %50 : vector<128x32xf32> to vector<16x8x32xf32>
    %52 = arith.truncf %51 : vector<16x8x32xf32> to vector<16x8x32xbf16>
    "tpu.trace_start"() <{level = 10 : i32, message = "bvu,bud->bvd"}> : () -> ()
    %cst_21 = arith.constant dense<0.000000e+00> : vector<16x8x32xf32>
    %53 = tpu.matmul %0, %52, %cst_21 {dimension_numbers = #tpu.dot_dimension_numbers<[2], [1], [1], [2], [0, 0, 0, 1, 1, 2], [0], [0]>} : vector<16x8x8xbf16>, vector<16x8x32xbf16>, vector<16x8x32xf32> -> vector<16x8x32xf32>
    "tpu.trace_stop"() : () -> ()
    %54 = vector.shape_cast %53 : vector<16x8x32xf32> to vector<128x32xf32>
    %55 = arith.truncf %54 : vector<128x32xf32> to vector<128x32xbf16>
    %cst_22 = arith.constant dense<0.000000e+00> : vector<128x96xf32>
    %56 = tpu.matmul %55, %2, %cst_22 {dimension_numbers = #tpu.dot_dimension_numbers<[1], [0], [0], [1], [0, 0, 1, 1], [], []>} : vector<128x32xbf16>, vector<32x96xbf16>, vector<128x96xf32> -> vector<128x96xf32>
    %57 = arith.addf %56, %16 : vector<128x96xf32>
    %58 = arith.truncf %50 : vector<128x32xf32> to vector<128x32xbf16>
    %cst_23 = arith.constant dense<0.000000e+00> : vector<128x96xf32>
    %59 = tpu.matmul %58, %3, %cst_23 {dimension_numbers = #tpu.dot_dimension_numbers<[1], [0], [0], [1], [0, 0, 1, 1], [], []>} : vector<128x32xbf16>, vector<32x96xbf16>, vector<128x96xf32> -> vector<128x96xf32>
    %60 = vector.broadcast %17 : vector<1x96xf32> to vector<128x96xf32>
    %61 = arith.addf %59, %60 : vector<128x96xf32>
    %62 = vector.extract_strided_slice %57 {offsets = [0, 0], sizes = [128, 64], strides = [1, 1]} : vector<128x96xf32> to vector<128x64xf32>
    %63 = vector.extract_strided_slice %61 {offsets = [0, 0], sizes = [128, 64], strides = [1, 1]} : vector<128x96xf32> to vector<128x64xf32>
    %64 = arith.addf %62, %63 : vector<128x64xf32>
    %cst_24 = arith.constant 0.000000e+00 : f32
    %65 = vector.broadcast %cst_24 : f32 to vector<128x64xf32>
    %66 = arith.subf %65, %64 : vector<128x64xf32>
    %67 = math.exp %66 : vector<128x64xf32>
    %cst_25 = arith.constant 1.000000e+00 : f32
    %68 = vector.broadcast %cst_25 : f32 to vector<128x64xf32>
    %69 = arith.addf %68, %67 : vector<128x64xf32>
    %70 = tpu.reciprocal %69 {approx = true} : vector<128x64xf32> -> vector<128x64xf32>
    %71 = vector.extract_strided_slice %70 {offsets = [0, 0], sizes = [128, 32], strides = [1, 1]} : vector<128x64xf32> to vector<128x32xf32>
    %72 = vector.extract_strided_slice %70 {offsets = [0, 32], sizes = [128, 32], strides = [1, 1]} : vector<128x64xf32> to vector<128x32xf32>
    %73 = vector.extract_strided_slice %57 {offsets = [0, 64], sizes = [128, 32], strides = [1, 1]} : vector<128x96xf32> to vector<128x32xf32>
    %74 = vector.extract_strided_slice %61 {offsets = [0, 64], sizes = [128, 32], strides = [1, 1]} : vector<128x96xf32> to vector<128x32xf32>
    %75 = arith.mulf %71, %74 : vector<128x32xf32>
    %76 = arith.addf %73, %75 : vector<128x32xf32>
    %77 = math.tanh %76 : vector<128x32xf32>
    %cst_26 = arith.constant 1.000000e+00 : f32
    %78 = vector.broadcast %cst_26 : f32 to vector<128x32xf32>
    %79 = arith.subf %78, %72 : vector<128x32xf32>
    %80 = arith.mulf %79, %77 : vector<128x32xf32>
    %81 = arith.mulf %72, %50 : vector<128x32xf32>
    %82 = arith.addf %80, %81 : vector<128x32xf32>
    %83 = arith.addf %82, %18 : vector<128x32xf32>
    %cst_27 = arith.constant dense<0.000000e+00> : vector<128xf32>
    %84 = vector.multi_reduction <add>, %83, %cst_27 [1] : vector<128x32xf32> to vector<128xf32>
    %85 = vector.shape_cast %84 : vector<128xf32> to vector<128x1xf32>
    %cst_28 = arith.constant 3.200000e+01 : f32
    %86 = vector.broadcast %cst_28 : f32 to vector<128x1xf32>
    %87 = arith.divf %85, %86 : vector<128x1xf32>
    %88 = vector.broadcast %87 : vector<128x1xf32> to vector<128x32xf32>
    %89 = arith.subf %83, %88 : vector<128x32xf32>
    %90 = arith.mulf %89, %89 : vector<128x32xf32>
    %cst_29 = arith.constant dense<0.000000e+00> : vector<128xf32>
    %91 = vector.multi_reduction <add>, %90, %cst_29 [1] : vector<128x32xf32> to vector<128xf32>
    %92 = vector.shape_cast %91 : vector<128xf32> to vector<128x1xf32>
    %cst_30 = arith.constant 3.200000e+01 : f32
    %93 = vector.broadcast %cst_30 : f32 to vector<128x1xf32>
    %94 = arith.divf %92, %93 : vector<128x1xf32>
    %cst_31 = arith.constant 9.99999974E-6 : f32
    %95 = vector.broadcast %cst_31 : f32 to vector<128x1xf32>
    %96 = arith.addf %94, %95 : vector<128x1xf32>
    %97 = math.rsqrt %96 : vector<128x1xf32>
    %98 = vector.broadcast %97 : vector<128x1xf32> to vector<128x32xf32>
    %99 = arith.mulf %89, %98 : vector<128x32xf32>
    %c0_32 = arith.constant 0 : index
    %c0_33 = arith.constant 0 : index
    %100 = vector.load %arg8[%c0_32, %c0_33] : memref<1x32xf32, #tpu.memory_space<vmem>>, vector<1x32xf32>
    %101 = vector.broadcast %100 : vector<1x32xf32> to vector<128x32xf32>
    %102 = arith.mulf %99, %101 : vector<128x32xf32>
    %c0_34 = arith.constant 0 : index
    %c0_35 = arith.constant 0 : index
    %103 = vector.load %arg9[%c0_34, %c0_35] : memref<1x32xf32, #tpu.memory_space<vmem>>, vector<1x32xf32>
    %104 = vector.broadcast %103 : vector<1x32xf32> to vector<128x32xf32>
    %105 = arith.addf %102, %104 : vector<128x32xf32>
    %cst_36 = arith.constant 0.000000e+00 : f32
    %106 = vector.broadcast %cst_36 : f32 to vector<128x32xf32>
    %107 = arith.cmpf ogt, %105, %106 : vector<128x32xf32>
    %cst_37 = arith.constant 0.00999999977 : f32
    %108 = vector.broadcast %cst_37 : f32 to vector<128x32xf32>
    %109 = arith.mulf %108, %105 : vector<128x32xf32>
    %110 = arith.select %107, %105, %109 : vector<128x32xi1>, vector<128x32xf32>
    %111 = vector.shape_cast %110 : vector<128x32xf32> to vector<16x8x32xf32>
    %c0_38 = arith.constant 0 : index
    %c0_39 = arith.constant 0 : index
    %c0_40 = arith.constant 0 : index
    %112 = vector.load %arg10[%c0_38, %c0_39, %c0_40] : memref<16x8x32xf32, #tpu.memory_space<vmem>>, vector<16x8x32xf32>
    tpu.vector_store %arg10[%c0_38, %c0_39, %c0_40], %111 {strides = array<i32>} : memref<16x8x32xf32, #tpu.memory_space<vmem>>, vector<16x8x32xf32>,
    return
  }
  func.func @transform_0(%arg0: i32) -> (i32, i32, i32) {
    %c0_i32 = arith.constant 0 : i32
    %c0_i32_0 = arith.constant 0 : i32
    %c0_i32_1 = arith.constant 0 : i32
    return %arg0, %c0_i32, %c0_i32_0 : i32, i32, i32
  }
  func.func @transform_1(%arg0: i32) -> (i32, i32, i32) {
    %c0_i32 = arith.constant 0 : i32
    %c0_i32_0 = arith.constant 0 : i32
    %c0_i32_1 = arith.constant 0 : i32
    return %arg0, %c0_i32, %c0_i32_0 : i32, i32, i32
  }
  func.func @transform_2(%arg0: i32) -> (i32, i32) {
    %c0_i32 = arith.constant 0 : i32
    %c0_i32_0 = arith.constant 0 : i32
    %c0_i32_1 = arith.constant 0 : i32
    return %c0_i32, %c0_i32_0 : i32, i32
  }
  func.func @transform_3(%arg0: i32) -> (i32, i32) {
    %c0_i32 = arith.constant 0 : i32
    %c0_i32_0 = arith.constant 0 : i32
    %c0_i32_1 = arith.constant 0 : i32
    return %c0_i32, %c0_i32_0 : i32, i32
  }
  func.func @transform_4(%arg0: i32) -> (i32, i32) {
    %c0_i32 = arith.constant 0 : i32
    %c0_i32_0 = arith.constant 0 : i32
    %c0_i32_1 = arith.constant 0 : i32
    return %c0_i32, %c0_i32_0 : i32, i32
  }
  func.func @transform_5(%arg0: i32) -> (i32, i32) {
    %c0_i32 = arith.constant 0 : i32
    %c0_i32_0 = arith.constant 0 : i32
    %c0_i32_1 = arith.constant 0 : i32
    return %c0_i32, %c0_i32_0 : i32, i32
  }
  func.func @transform_6(%arg0: i32) -> (i32, i32) {
    %c0_i32 = arith.constant 0 : i32
    %c0_i32_0 = arith.constant 0 : i32
    %c0_i32_1 = arith.constant 0 : i32
    return %c0_i32, %c0_i32_0 : i32, i32
  }
  func.func @transform_7(%arg0: i32) -> (i32, i32) {
    %c0_i32 = arith.constant 0 : i32
    %c0_i32_0 = arith.constant 0 : i32
    %c0_i32_1 = arith.constant 0 : i32
    return %c0_i32, %c0_i32_0 : i32, i32
  }
  func.func @transform_8(%arg0: i32) -> (i32, i32) {
    %c0_i32 = arith.constant 0 : i32
    %c0_i32_0 = arith.constant 0 : i32
    %c0_i32_1 = arith.constant 0 : i32
    return %c0_i32, %c0_i32_0 : i32, i32
  }
  func.func @transform_9(%arg0: i32) -> (i32, i32, i32) {
    %c0_i32 = arith.constant 0 : i32
    %c0_i32_0 = arith.constant 0 : i32
    %c0_i32_1 = arith.constant 0 : i32
    return %arg0, %c0_i32, %c0_i32_0 : i32, i32, i32
  }
}

</mosaic_0001>

<llo_original>
// kernel: homo_layer.1
$region0: #{homo_layer.1}
  #allocation0 [shape = 'u32[]', space=smem, size = 0x4, offset = 0x4, fixed_abs, tag = 'smem constant byte address 0x4 - core index']
  #allocation1 [shape = 'u32[144,128]{1,0:T(1,128)}', space=vmem, size = 0x12000, scoped, tag = 'internal scratch']
  %s0 = inlined_call_operand.vmem [shape: bf16[32,8,8], index: 0, kind: input, shape index: {}]
  %s1 = inlined_call_operand.vmem [shape: f32[32,8,32], index: 1, kind: input, shape index: {}]
  %s2 = inlined_call_operand.vmem [shape: bf16[32,96], index: 2, kind: input, shape index: {}]
  %s3 = inlined_call_operand.hbm [shape: bf16[32,96], index: 3, kind: input, shape index: {}]
  %s4 = inlined_call_operand.vmem [shape: f32[1,96], index: 4, kind: input, shape index: {}]
  %s5 = inlined_call_operand.vmem [shape: f32[1,96], index: 5, kind: input, shape index: {}]
  %s6 = inlined_call_operand.hbm [shape: f32[1,96], index: 6, kind: input, shape index: {}]
  %s7 = inlined_call_operand.vmem [shape: f32[1,32], index: 7, kind: input, shape index: {}]
  %s8 = inlined_call_operand.hbm [shape: f32[1,32], index: 8, kind: input, shape index: {}]
  %s9 = inlined_call_operand.hbm [shape: f32[32,8,32], index: 9, kind: output, shape index: {}]
  %s10 = sld [smem:[#allocation0]]
  $region81: #{homo_layer.1} parent=0
    _
  %s12 = ssub.s32 1, %s10
  %s13 = scalar_select 0, %s12, %s10
  $region1: #{homo_layer.1} parent=0
    #allocation2 [shape = 'u8[8192]{0}', space=vmem, size = 0x2000, scoped, tag = 'input window, operand 3, single buffered']
    #allocation3 [shape = 's32[2]{0}', space=sflag, size = 0x8, scoped, tag = 'scoped memory for homo_layer.1']
    #allocation4 [shape = 's32[2]{0}', space=sflag, size = 0x8, scoped, tag = 'scoped memory for homo_layer.1']
    #allocation5 [shape = 'u8[512]{0}', space=vmem, size = 0x400, scoped, tag = 'input window, operand 6, single buffered']
    #allocation6 [shape = 's32[1]{0}', space=sflag, size = 0x4, scoped, tag = 'scoped memory for homo_layer.1']
    #allocation7 [shape = 'u8[512]{0}', space=vmem, size = 0x400, scoped, tag = 'input window, operand 8, single buffered']
    #allocation8 [shape = 'u8[131072]{0}', space=vmem, size = 0x20000, scoped, tag = 'output window, operand 0']
    %14 = vsyncpa [#allocation3], 0
    %15 = vsyncpa [#allocation6], 0
    %16 = vsyncpa [#allocation4], 0
    %s17 = scalar_lea.sflag [#allocation4], 1
    %18 = vsyncpa %s17, 0
    loop: start=0, step=1, limit=4
    $region2: #{homo_layer.1} parent=1 // loop_pre_header
      _
    $region3: #{homo_layer.1} parent=1 // loop_header
      %s20 = sphi 0, %s24
      %p21 = scmp.ge.s32.totalorder %s20, 4
      %s30 = sphi 0, %s32
      %s33 = sphi 0, %s30
      %s34 = sphi 0, %s33
      %s50 = sphi 0, %s34
      %s56 = sphi 0, %s58
      %s59 = sphi 0, %s56
      %s60 = sphi 0, %s59
      %s76 = sphi 0, %s60
      %s80 = sphi 0, %s80
      %s82 = sphi 0, %s80
      %s83 = sphi 0, %s82
      %s97 = sphi 0, %s83
      %s101 = sphi 0, %s101
      %s103 = sphi 0, %s101
      %s104 = sphi 0, %s103
      %s118 = sphi 0, %s104
      %s122 = sphi 0, %s122
      %s124 = sphi 0, %s122
      %s125 = sphi 0, %s124
      %s139 = sphi 0, %s125
      %s143 = sphi 0, %s143
      %s145 = sphi 0, %s143
      %s146 = sphi 0, %s145
      %s160 = sphi 0, %s146
      %s164 = sphi 0, %s164
      %s166 = sphi 0, %s164
      %s167 = sphi 0, %s166
      %s181 = sphi 0, %s167
      %s185 = sphi 0, %s185
      %s187 = sphi 0, %s185
      %s188 = sphi 0, %s187
      %s202 = sphi 0, %s188
      %s206 = sphi 0, %s206
      %s208 = sphi 0, %s206
      %s209 = sphi 0, %s208
      %s223 = sphi 0, %s209
      %s229 = sphi 0, %s231
      %s232 = sphi 0, %s229
      %s233 = sphi 0, %s232
      %s249 = sphi 0, %s233
    $region4: #{homo_layer.1} parent=1 // loop_header_branch
      %23 = sbr.rel (%p21) target = $region8
    $region5: #{homo_layer.1} parent=1 // loop_body
      %s25 = ssub.s32 %s20, 1
      %s26 = ssub.s32 %s20, 2
      %s27 = sadd.s32 %s20, 1
      %s28 = ssub.s32 %s20, %s27
      %p29 = scmp.eq.s32.totalorder %s28, 0
      %s31 = sadd.s32 %s30, 1
      %s32 = scalar_select %p29, %s30, %s31
      %p35 = pneg %p29
      %p36 = scmp.eq.s32.totalorder %s20, 1
      %p37 = por %p35, %p36
      %p38 = scmp.ne.s32.totalorder %s30, %s33
      %p39 = scmp.eq.s32.totalorder %s20, 0
      %p40 = por %p38, %p39
      %p41 = scmp.ne.s32.totalorder %s30, %s33
      %p42 = scmp.eq.s32.totalorder %s25, 1
      %p43 = por %p41, %p42
      %p44 = scmp.ne.s32.totalorder %s33, %s34
      %p45 = scmp.eq.s32.totalorder %s25, 0
      %p46 = por %p44, %p45
      %p47 = scmp.ne.s32.totalorder %s33, %s34
      %p48 = scmp.eq.s32.totalorder %s26, 1
      %p49 = por %p47, %p48
      %p51 = scmp.ne.s32.totalorder %s34, %s50
      %p52 = scmp.eq.s32.totalorder %s26, 0
      %p53 = por %p51, %p52
      %s54 = ssub.s32 %s20, %s27
      %p55 = scmp.eq.s32.totalorder %s54, 0
      %s57 = sadd.s32 %s56, 1
      %s58 = scalar_select %p55, %s56, %s57
      %p61 = pneg %p55
      %p62 = scmp.eq.s32.totalorder %s20, 1
      %p63 = por %p61, %p62
      %p64 = scmp.ne.s32.totalorder %s56, %s59
      %p65 = scmp.eq.s32.totalorder %s20, 0
      %p66 = por %p64, %p65
      %p67 = scmp.ne.s32.totalorder %s56, %s59
      %p68 = scmp.eq.s32.totalorder %s25, 1
      %p69 = por %p67, %p68
      %p70 = scmp.ne.s32.totalorder %s59, %s60
      %p71 = scmp.eq.s32.totalorder %s25, 0
      %p72 = por %p70, %p71
      %p73 = scmp.ne.s32.totalorder %s59, %s60
      %p74 = scmp.eq.s32.totalorder %s26, 1
      %p75 = por %p73, %p74
      %p77 = scmp.ne.s32.totalorder %s60, %s76
      %p78 = scmp.eq.s32.totalorder %s26, 0
      %p79 = por %p77, %p78
      %s81 = sadd.s32 %s80, 1
      %p84 = scmp.eq.s32.totalorder %s20, 1
      %p85 = scmp.ne.s32.totalorder %s80, %s82
      %p86 = scmp.eq.s32.totalorder %s20, 0
      %p87 = por %p85, %p86
      %p88 = scmp.ne.s32.totalorder %s80, %s82
      %p89 = scmp.eq.s32.totalorder %s25, 1
      %p90 = por %p88, %p89
      %p91 = scmp.ne.s32.totalorder %s82, %s83
      %p92 = scmp.eq.s32.totalorder %s25, 0
      %p93 = por %p91, %p92
      %p94 = scmp.ne.s32.totalorder %s82, %s83
      %p95 = scmp.eq.s32.totalorder %s26, 1
      %p96 = por %p94, %p95
      %p98 = scmp.ne.s32.totalorder %s83, %s97
      %p99 = scmp.eq.s32.totalorder %s26, 0
      %p100 = por %p98, %p99
      %s102 = sadd.s32 %s101, 1
      %p105 = scmp.eq.s32.totalorder %s20, 1
      %p106 = scmp.ne.s32.totalorder %s101, %s103
      %p107 = scmp.eq.s32.totalorder %s20, 0
      %p108 = por %p106, %p107
      %p109 = scmp.ne.s32.totalorder %s101, %s103
      %p110 = scmp.eq.s32.totalorder %s25, 1
      %p111 = por %p109, %p110
      %p112 = scmp.ne.s32.totalorder %s103, %s104
      %p113 = scmp.eq.s32.totalorder %s25, 0
      %p114 = por %p112, %p113
      %p115 = scmp.ne.s32.totalorder %s103, %s104
      %p116 = scmp.eq.s32.totalorder %s26, 1
      %p117 = por %p115, %p116
      %p119 = scmp.ne.s32.totalorder %s104, %s118
      %p120 = scmp.eq.s32.totalorder %s26, 0
      %p121 = por %p119, %p120
      %s123 = sadd.s32 %s122, 1
      %p126 = scmp.eq.s32.totalorder %s20, 1
      %p127 = scmp.ne.s32.totalorder %s122, %s124
      %p128 = scmp.eq.s32.totalorder %s20, 0
      %p129 = por %p127, %p128
      %p130 = scmp.ne.s32.totalorder %s122, %s124
      %p131 = scmp.eq.s32.totalorder %s25, 1
      %p132 = por %p130, %p131
      %p133 = scmp.ne.s32.totalorder %s124, %s125
      %p134 = scmp.eq.s32.totalorder %s25, 0
      %p135 = por %p133, %p134
      %p136 = scmp.ne.s32.totalorder %s124, %s125
      %p137 = scmp.eq.s32.totalorder %s26, 1
      %p138 = por %p136, %p137
      %p140 = scmp.ne.s32.totalorder %s125, %s139
      %p141 = scmp.eq.s32.totalorder %s26, 0
      %p142 = por %p140, %p141
      %s144 = sadd.s32 %s143, 1
      %p147 = scmp.eq.s32.totalorder %s20, 1
      %p148 = scmp.ne.s32.totalorder %s143, %s145
      %p149 = scmp.eq.s32.totalorder %s20, 0
      %p150 = por %p148, %p149
      %p151 = scmp.ne.s32.totalorder %s143, %s145
      %p152 = scmp.eq.s32.totalorder %s25, 1
      %p153 = por %p151, %p152
      %p154 = scmp.ne.s32.totalorder %s145, %s146
      %p155 = scmp.eq.s32.totalorder %s25, 0
      %p156 = por %p154, %p155
      %p157 = scmp.ne.s32.totalorder %s145, %s146
      %p158 = scmp.eq.s32.totalorder %s26, 1
      %p159 = por %p157, %p158
      %p161 = scmp.ne.s32.totalorder %s146, %s160
      %p162 = scmp.eq.s32.totalorder %s26, 0
      %p163 = por %p161, %p162
      %s165 = sadd.s32 %s164, 1
      %p168 = scmp.eq.s32.totalorder %s20, 1
      %p169 = scmp.ne.s32.totalorder %s164, %s166
      %p170 = scmp.eq.s32.totalorder %s20, 0
      %p171 = por %p169, %p170
      %p172 = scmp.ne.s32.totalorder %s164, %s166
      %p173 = scmp.eq.s32.totalorder %s25, 1
      %p174 = por %p172, %p173
      %p175 = scmp.ne.s32.totalorder %s166, %s167
      %p176 = scmp.eq.s32.totalorder %s25, 0
      %p177 = por %p175, %p176
      %p178 = scmp.ne.s32.totalorder %s166, %s167
      %p179 = scmp.eq.s32.totalorder %s26, 1
      %p180 = por %p178, %p179
      %p182 = scmp.ne.s32.totalorder %s167, %s181
      %p183 = scmp.eq.s32.totalorder %s26, 0
      %p184 = por %p182, %p183
      %s186 = sadd.s32 %s185, 1
      %p189 = scmp.eq.s32.totalorder %s20, 1
      %p190 = scmp.ne.s32.totalorder %s185, %s187
      %p191 = scmp.eq.s32.totalorder %s20, 0
      %p192 = por %p190, %p191
      %p193 = scmp.ne.s32.totalorder %s185, %s187
      %p194 = scmp.eq.s32.totalorder %s25, 1
      %p195 = por %p193, %p194
      %p196 = scmp.ne.s32.totalorder %s187, %s188
      %p197 = scmp.eq.s32.totalorder %s25, 0
      %p198 = por %p196, %p197
      %p199 = scmp.ne.s32.totalorder %s187, %s188
      %p200 = scmp.eq.s32.totalorder %s26, 1
      %p201 = por %p199, %p200
      %p203 = scmp.ne.s32.totalorder %s188, %s202
      %p204 = scmp.eq.s32.totalorder %s26, 0
      %p205 = por %p203, %p204
      %s207 = sadd.s32 %s206, 1
      %p210 = scmp.eq.s32.totalorder %s20, 1
      %p211 = scmp.ne.s32.totalorder %s206, %s208
      %p212 = scmp.eq.s32.totalorder %s20, 0
      %p213 = por %p211, %p212
      %p214 = scmp.ne.s32.totalorder %s206, %s208
      %p215 = scmp.eq.s32.totalorder %s25, 1
      %p216 = por %p214, %p215
      %p217 = scmp.ne.s32.totalorder %s208, %s209
      %p218 = scmp.eq.s32.totalorder %s25, 0
      %p219 = por %p217, %p218
      %p220 = scmp.ne.s32.totalorder %s208, %s209
      %p221 = scmp.eq.s32.totalorder %s26, 1
      %p222 = por %p220, %p221
      %p224 = scmp.ne.s32.totalorder %s209, %s223
      %p225 = scmp.eq.s32.totalorder %s26, 0
      %p226 = por %p224, %p225
      %s227 = ssub.s32 %s20, %s27
      %p228 = scmp.eq.s32.totalorder %s227, 0
      %s230 = sadd.s32 %s229, 1
      %s231 = scalar_select %p228, %s229, %s230
      %p234 = pneg %p228
      %p235 = scmp.eq.s32.totalorder %s20, 1
      %p236 = por %p234, %p235
      %p237 = scmp.ne.s32.totalorder %s229, %s232
      %p238 = scmp.eq.s32.totalorder %s20, 0
      %p239 = por %p237, %p238
      %p240 = scmp.ne.s32.totalorder %s229, %s232
      %p241 = scmp.eq.s32.totalorder %s25, 1
      %p242 = por %p240, %p241
      %p243 = scmp.ne.s32.totalorder %s232, %s233
      %p244 = scmp.eq.s32.totalorder %s25, 0
      %p245 = por %p243, %p244
      %p246 = scmp.ne.s32.totalorder %s232, %s233
      %p247 = scmp.eq.s32.totalorder %s26, 1
      %p248 = por %p246, %p247
      %p250 = scmp.ne.s32.totalorder %s233, %s249
      %p251 = scmp.eq.s32.totalorder %s26, 0
      %p252 = por %p250, %p251
      %p253 = scmp.le.s32.totalorder 1, %s20
      %p254 = scmp.lt.s32.totalorder %s20, 3
      %p255 = pnand %p253, %p254
      %p256 = pneg %p255
      // Predicated region
      $region9: #{homo_layer.1} parent=5 // pred_check
        _
      $region10: #{homo_layer.1} parent=5 // pred_check_branch
        %258 = sbr.rel (%p255) target = $region12
      $region11: #{homo_layer.1} parent=5 // pred_region
        %s259 = ssub.s32 %s20, 1
        // Predicated region
        $region13: #{homo_layer.1} parent=11 // pred_check
          %p260 = pneg %p93
        $region14: #{homo_layer.1} parent=11 // pred_check_branch
          %262 = sbr.rel (%p260) target = $region16
        $region15: #{homo_layer.1} parent=11 // pred_region
          _
        $region16: #{homo_layer.1} parent=11 // pred_fallthru
          _
        // Predicated region
        $region17: #{homo_layer.1} parent=11 // pred_check
          %p263 = pneg %p114
        $region18: #{homo_layer.1} parent=11 // pred_check_branch
          %265 = sbr.rel (%p263) target = $region20
        $region19: #{homo_layer.1} parent=11 // pred_region
          %s267 = ssub.s32 256, 256
          %268 = vsyncadd [#allocation3], %s267
          %s269 = sshll.u32 [#allocation2], 4
          %s270 = int_to_ptr.vmem [resolvable:$true] %s269
          %275 = dma.hbm_to_vmem [thread:$0]  %s3, 256, %s270, [#allocation3], 64, 64, 4
        $region20: #{homo_layer.1} parent=11 // pred_fallthru
          _
        // Predicated region
        $region21: #{homo_layer.1} parent=11 // pred_check
          %p276 = pneg %p135
        $region22: #{homo_layer.1} parent=11 // pred_check_branch
          %278 = sbr.rel (%p276) target = $region24
        $region23: #{homo_layer.1} parent=11 // pred_region
          _
        $region24: #{homo_layer.1} parent=11 // pred_fallthru
          _
        // Predicated region
        $region25: #{homo_layer.1} parent=11 // pred_check
          %p279 = pneg %p156
        $region26: #{homo_layer.1} parent=11 // pred_check_branch
          %281 = sbr.rel (%p279) target = $region28
        $region27: #{homo_layer.1} parent=11 // pred_region
          _
        $region28: #{homo_layer.1} parent=11 // pred_fallthru
          _
        // Predicated region
        $region29: #{homo_layer.1} parent=11 // pred_check
          %p282 = pneg %p177
        $region30: #{homo_layer.1} parent=11 // pred_check_branch
          %284 = sbr.rel (%p282) target = $region32
        $region31: #{homo_layer.1} parent=11 // pred_region
          %s286 = ssub.s32 16, 16
          %287 = vsyncadd [#allocation6], %s286
          %s289 = sshll.u32 [#allocation5], 4
          %s290 = int_to_ptr.vmem [resolvable:$true] %s289
          %292 = dma.hbm_to_vmem [thread:$0]  %s6, 16, %s290, [#allocation6]
        $region32: #{homo_layer.1} parent=11 // pred_fallthru
          _
        // Predicated region
        $region33: #{homo_layer.1} parent=11 // pred_check
          %p293 = pneg %p198
        $region34: #{homo_layer.1} parent=11 // pred_check_branch
          %295 = sbr.rel (%p293) target = $region36
        $region35: #{homo_layer.1} parent=11 // pred_region
          _
        $region36: #{homo_layer.1} parent=11 // pred_fallthru
          _
        // Predicated region
        $region37: #{homo_layer.1} parent=11 // pred_check
          %p296 = pneg %p219
        $region38: #{homo_layer.1} parent=11 // pred_check_branch
          %298 = sbr.rel (%p296) target = $region40
        $region39: #{homo_layer.1} parent=11 // pred_region
          %s300 = ssub.s32 16, 16
          %301 = vsyncadd [#allocation6], %s300
          %s303 = sshll.u32 [#allocation7], 4
          %s304 = int_to_ptr.vmem [resolvable:$true] %s303
          %306 = dma.hbm_to_vmem [thread:$0]  %s8, 16, %s304, [#allocation6]
        $region40: #{homo_layer.1} parent=11 // pred_fallthru
          _
      $region12: #{homo_layer.1} parent=5 // pred_fallthru
        _
      %p307 = scmp.lt.s32.totalorder %s20, 2
      // Predicated region
      $region41: #{homo_layer.1} parent=5 // pred_check
        %p308 = pneg %p307
      $region42: #{homo_layer.1} parent=5 // pred_check_branch
        %310 = sbr.rel (%p308) target = $region44
      $region43: #{homo_layer.1} parent=5 // pred_region
        // Predicated region
        $region45: #{homo_layer.1} parent=43 // pred_check
          %p311 = pneg %p40
        $region46: #{homo_layer.1} parent=43 // pred_check_branch
          %313 = sbr.rel (%p311) target = $region48
        $region47: #{homo_layer.1} parent=43 // pred_region
          %s314 = smul.u32 16, %s20
          %p315 = scmp.lt.s32.totalorder %s314, 31
          %s316 = scalar_select %p315, %s314, 31
          %s317 = smul.addr %s316, 4
          %s318 = scalar_lea.vmem %s0, %s317
          %s319 = smul.u32 16, %s20
        $region48: #{homo_layer.1} parent=43 // pred_fallthru
          _
        // Predicated region
        $region49: #{homo_layer.1} parent=43 // pred_check
          %p320 = pneg %p66
        $region50: #{homo_layer.1} parent=43 // pred_check_branch
          %322 = sbr.rel (%p320) target = $region52
        $region51: #{homo_layer.1} parent=43 // pred_region
          %s323 = smul.u32 16, %s20
          %p324 = scmp.lt.s32.totalorder %s323, 31
          %s325 = scalar_select %p324, %s323, 31
          %s326 = smul.addr %s325, 8
          %s327 = scalar_lea.vmem %s1, %s326
          %s328 = smul.u32 16, %s20
        $region52: #{homo_layer.1} parent=43 // pred_fallthru
          _
      $region44: #{homo_layer.1} parent=5 // pred_fallthru
        _
      %p329 = scmp.le.s32.totalorder 1, %s20
      %p330 = scmp.lt.s32.totalorder %s20, 3
      %p331 = pnand %p329, %p330
      %p332 = pneg %p331
      // Predicated region
      $region53: #{homo_layer.1} parent=5 // pred_check
        _
      $region54: #{homo_layer.1} parent=5 // pred_check_branch
        %334 = sbr.rel (%p331) target = $region56
      $region55: #{homo_layer.1} parent=5 // pred_region
        %s335 = ssub.s32 %s20, 1
        // Predicated region
        $region57: #{homo_layer.1} parent=55 // pred_check
          %p336 = pneg %p114
        $region58: #{homo_layer.1} parent=55 // pred_check_branch
          %338 = sbr.rel (%p336) target = $region60
        $region59: #{homo_layer.1} parent=55 // pred_region
          %339 = dma.done [#allocation3], 256
        $region60: #{homo_layer.1} parent=55 // pred_fallthru
          _
        // Predicated region
        $region61: #{homo_layer.1} parent=55 // pred_check
          %p340 = pneg %p177
        $region62: #{homo_layer.1} parent=55 // pred_check_branch
          %342 = sbr.rel (%p340) target = $region64
        $region63: #{homo_layer.1} parent=55 // pred_region
          %343 = dma.done [#allocation6], 16
        $region64: #{homo_layer.1} parent=55 // pred_fallthru
          _
        // Predicated region
        $region65: #{homo_layer.1} parent=55 // pred_check
          %p344 = pneg %p219
        $region66: #{homo_layer.1} parent=55 // pred_check_branch
          %346 = sbr.rel (%p344) target = $region68
        $region67: #{homo_layer.1} parent=55 // pred_region
          %347 = dma.done [#allocation6], 16
        $region68: #{homo_layer.1} parent=55 // pred_fallthru
          _
        %s348 = smul.u32 16, %s25
        %p349 = scmp.lt.s32.totalorder %s348, 31
        %s350 = scalar_select %p349, %s348, 31
        %s351 = smul.addr %s350, 4
        %s352 = scalar_lea.vmem %s0, %s351
        %p353 = pneg %p46
        %p354 = pneg %p43
        %s355 = smul.u32 16, %s25
        %p356 = scmp.lt.s32.totalorder %s355, 31
        %s357 = scalar_select %p356, %s355, 31
        %s358 = smul.addr %s357, 8
        %s359 = scalar_lea.vmem %s1, %s358
        %p360 = pneg %p72
        %p361 = pneg %p69
        %p362 = pneg %p93
        %p363 = pneg %p90
        %p364 = pneg %p114
        %p365 = pneg %p111
        %p366 = pneg %p135
        %p367 = pneg %p132
        %p368 = pneg %p156
        %p369 = pneg %p153
        %p370 = pneg %p177
        %p371 = pneg %p174
        %p372 = pneg %p198
        %p373 = pneg %p195
        %p374 = pneg %p219
        %p375 = pneg %p216
        %p376 = pneg %p245
        %p377 = pneg %p242
        %s378 = sand.u32 %s232, 1
        %s379 = scalar_lea.sflag [#allocation4], %s378
        %s380 = sand.u32 %s232, 1
        %s381 = smul.addr %s380, 128
        %s382 = scalar_lea.vmem [#allocation8], %s381
        %s383 = smul.u32 16, %s25
        %p384 = scmp.lt.s32.totalorder %s383, 31
        %s385 = scalar_select %p384, %s383, 31
        %s386 = smul.addr %s385, 4
        %s387 = scalar_lea.vmem %s0, %s386
        %s388 = smul.u32 16, %s25
        %s389 = smul.u32 16, %s25
        %p390 = scmp.lt.s32.totalorder %s389, 31
        %s391 = scalar_select %p390, %s389, 31
        %s392 = smul.addr %s391, 8
        %s393 = scalar_lea.vmem %s1, %s392
        %s394 = smul.u32 16, %s25
        %s395 = smul.u32 16, %s25
        %v397 = vld [vmem:[%s387] sm:$0xf]
        %v398 = vld [vmem:[%s387 + $0x4] sm:$0xf]
        %v399 = vld [vmem:[%s387 + $0x8] sm:$0xf]
        %v400 = vld [vmem:[%s387 + $0xc] sm:$0xf]
        %v401 = vld [vmem:[%s387 + $0x10] sm:$0xf]
        %v402 = vld [vmem:[%s387 + $0x14] sm:$0xf]
        %v403 = vld [vmem:[%s387 + $0x18] sm:$0xf]
        %v404 = vld [vmem:[%s387 + $0x1c] sm:$0xf]
        %v405 = vld [vmem:[%s387 + $0x20] sm:$0xf]
        %v406 = vld [vmem:[%s387 + $0x24] sm:$0xf]
        %v407 = vld [vmem:[%s387 + $0x28] sm:$0xf]
        %v408 = vld [vmem:[%s387 + $0x2c] sm:$0xf]
        %v409 = vld [vmem:[%s387 + $0x30] sm:$0xf]
        %v410 = vld [vmem:[%s387 + $0x34] sm:$0xf]
        %v411 = vld [vmem:[%s387 + $0x38] sm:$0xf]
        %v412 = vld [vmem:[%s387 + $0x3c] sm:$0xf]
        %v413 = vld [vmem:[%s393] sm:$0xff]
        %v414 = vld [vmem:[%s393 + $0x8] sm:$0xff]
        %v415 = vld [vmem:[%s393 + $0x10] sm:$0xff]
        %v416 = vld [vmem:[%s393 + $0x18] sm:$0xff]
        %v417 = vld [vmem:[%s393 + $0x20] sm:$0xff]
        %v418 = vld [vmem:[%s393 + $0x28] sm:$0xff]
        %v419 = vld [vmem:[%s393 + $0x30] sm:$0xff]
        %v420 = vld [vmem:[%s393 + $0x38] sm:$0xff]
        %v421 = vld [vmem:[%s393 + $0x40] sm:$0xff]
        %v422 = vld [vmem:[%s393 + $0x48] sm:$0xff]
        %v423 = vld [vmem:[%s393 + $0x50] sm:$0xff]
        %v424 = vld [vmem:[%s393 + $0x58] sm:$0xff]
        %v425 = vld [vmem:[%s393 + $0x60] sm:$0xff]
        %v426 = vld [vmem:[%s393 + $0x68] sm:$0xff]
        %v427 = vld [vmem:[%s393 + $0x70] sm:$0xff]
        %v428 = vld [vmem:[%s393 + $0x78] sm:$0xff]
        %v429 = vld [vmem:[%s2] sm:$0xf]
        %v430 = vld [vmem:[%s2 + $0x4] sm:$0xf]
        %v431 = vld [vmem:[%s2 + $0x8] sm:$0xf]
        %v432 = vld [vmem:[%s2 + $0xc] sm:$0xf]
        %v433 = vld [vmem:[#allocation2] sm:$0xf]
        %v434 = vld [vmem:[#allocation2 + $0x4] sm:$0xf]
        %v435 = vld [vmem:[#allocation2 + $0x8] sm:$0xf]
        %v436 = vld [vmem:[#allocation2 + $0xc] sm:$0xf]
        %v437 = vunpack.c.l.bf16 %v397
        %v438 = vunpack.c.l.bf16 %v398
        %v439 = vunpack.c.l.bf16 %v399
        %v440 = vunpack.c.l.bf16 %v400
        %v441 = vunpack.c.l.bf16 %v401
        %v442 = vunpack.c.l.bf16 %v402
        %v443 = vunpack.c.l.bf16 %v403
        %v444 = vunpack.c.l.bf16 %v404
        %v445 = vunpack.c.l.bf16 %v405
        %v446 = vunpack.c.l.bf16 %v406
        %v447 = vunpack.c.l.bf16 %v407
        %v448 = vunpack.c.l.bf16 %v408
        %v449 = vunpack.c.l.bf16 %v409
        %v450 = vunpack.c.l.bf16 %v410
        %v451 = vunpack.c.l.bf16 %v411
        %v452 = vunpack.c.l.bf16 %v412
        %vm453 = vcmask 64512
        %v454 = vsel %vm453, %v437, 0.0
        %455 = vadd.xlane.f32.xlu0 %v454
        %v456 = vpop.xlane.xlu0 %455
        %v457 = vsel %vm453, %v438, 0.0
        %458 = vadd.xlane.f32.xlu0 %v457
        %v459 = vpop.xlane.xlu0 %458
        %v460 = vsel %vm453, %v439, 0.0
        %461 = vadd.xlane.f32.xlu0 %v460
        %v462 = vpop.xlane.xlu0 %461
        %v463 = vsel %vm453, %v440, 0.0
        %464 = vadd.xlane.f32.xlu0 %v463
        %v465 = vpop.xlane.xlu0 %464
        %v466 = vsel %vm453, %v441, 0.0
        %467 = vadd.xlane.f32.xlu0 %v466
        %v468 = vpop.xlane.xlu0 %467
        %v469 = vsel %vm453, %v442, 0.0
        %470 = vadd.xlane.f32.xlu0 %v469
        %v471 = vpop.xlane.xlu0 %470
        %v472 = vsel %vm453, %v443, 0.0
        %473 = vadd.xlane.f32.xlu0 %v472
        %v474 = vpop.xlane.xlu0 %473
        %v475 = vsel %vm453, %v444, 0.0
        %476 = vadd.xlane.f32.xlu0 %v475
        %v477 = vpop.xlane.xlu0 %476
        %v478 = vsel %vm453, %v445, 0.0
        %479 = vadd.xlane.f32.xlu0 %v478
        %v480 = vpop.xlane.xlu0 %479
        %v481 = vsel %vm453, %v446, 0.0
        %482 = vadd.xlane.f32.xlu0 %v481
        %v483 = vpop.xlane.xlu0 %482
        %v484 = vsel %vm453, %v447, 0.0
        %485 = vadd.xlane.f32.xlu0 %v484
        %v486 = vpop.xlane.xlu0 %485
        %v487 = vsel %vm453, %v448, 0.0
        %488 = vadd.xlane.f32.xlu0 %v487
        %v489 = vpop.xlane.xlu0 %488
        %v490 = vsel %vm453, %v449, 0.0
        %491 = vadd.xlane.f32.xlu0 %v490
        %v492 = vpop.xlane.xlu0 %491
        %v493 = vsel %vm453, %v450, 0.0
        %494 = vadd.xlane.f32.xlu0 %v493
        %v495 = vpop.xlane.xlu0 %494
        %v496 = vsel %vm453, %v451, 0.0
        %497 = vadd.xlane.f32.xlu0 %v496
        %v498 = vpop.xlane.xlu0 %497
        %v499 = vsel %vm453, %v452, 0.0
        %500 = vadd.xlane.f32.xlu0 %v499
        %v501 = vpop.xlane.xlu0 %500
        %v502 = vld [vmem:[%s4] sm:$0x1]
        %v504 = vlaneseq
        %v505 = vshrl.u32 %v504, 7
        %v506 = vsub.s32 0, %v505
        %v507 = vrot.slane %v502, %v506
        %v509 = vmul.f32 %v456, %v507
        %v510 = vmul.f32 %v459, %v507
        %v511 = vmul.f32 %v462, %v507
        %v512 = vmul.f32 %v465, %v507
        %v513 = vmul.f32 %v468, %v507
        %v514 = vmul.f32 %v471, %v507
        %v515 = vmul.f32 %v474, %v507
        %v516 = vmul.f32 %v477, %v507
        %v517 = vmul.f32 %v480, %v507
        %v518 = vmul.f32 %v483, %v507
        %v519 = vmul.f32 %v486, %v507
        %v520 = vmul.f32 %v489, %v507
        %v521 = vmul.f32 %v492, %v507
        %v522 = vmul.f32 %v495, %v507
        %v523 = vmul.f32 %v498, %v507
        %v524 = vmul.f32 %v501, %v507
        %v525 = vld [vmem:[%s5] sm:$0x1]
        %v527 = vlaneseq
        %v528 = vshrl.u32 %v527, 7
        %v529 = vsub.s32 0, %v528
        %v530 = vrot.slane %v525, %v529
        %v532 = vadd.f32 %v509, %v530
        %v533 = vadd.f32 %v510, %v530
        %v534 = vadd.f32 %v511, %v530
        %v535 = vadd.f32 %v512, %v530
        %v536 = vadd.f32 %v513, %v530
        %v537 = vadd.f32 %v514, %v530
        %v538 = vadd.f32 %v515, %v530
        %v539 = vadd.f32 %v516, %v530
        %v540 = vadd.f32 %v517, %v530
        %v541 = vadd.f32 %v518, %v530
        %v542 = vadd.f32 %v519, %v530
        %v543 = vadd.f32 %v520, %v530
        %v544 = vadd.f32 %v521, %v530
        %v545 = vadd.f32 %v522, %v530
        %v546 = vadd.f32 %v523, %v530
        %v547 = vadd.f32 %v524, %v530
        %v548 = vld [vmem:[#allocation5] sm:$0x1]
        %v549 = vpack.c.bf16 %v413, %v413
        %v550 = vpack.c.bf16 %v414, %v414
        %v551 = vpack.c.bf16 %v415, %v415
        %v552 = vpack.c.bf16 %v416, %v416
        %v553 = vpack.c.bf16 %v417, %v417
        %v554 = vpack.c.bf16 %v418, %v418
        %v555 = vpack.c.bf16 %v419, %v419
        %v556 = vpack.c.bf16 %v420, %v420
        %v557 = vpack.c.bf16 %v421, %v421
        %v558 = vpack.c.bf16 %v422, %v422
        %v559 = vpack.c.bf16 %v423, %v423
        %v560 = vpack.c.bf16 %v424, %v424
        %v561 = vpack.c.bf16 %v425, %v425
        %v562 = vpack.c.bf16 %v426, %v426
        %v563 = vpack.c.bf16 %v427, %v427
        %v564 = vpack.c.bf16 %v428, %v428
        %v566 = vsel %vm453, %v397, 0
        %vm568 = vcmask 1043456
        %v570 = vsel %vm568, %v549, 0
        %572 = vmatprep.subr.bf16.mxu0 0
        %573 = vmatpush1.bf16.msra.mxu0 %v570
        %574 = vmatprep.subr.bf16.mxu0 0
        %575 = vmatpush1.bf16.msra.mxu0 0
        %576 = vmatprep.subr.bf16.mxu0 0
        %577 = vmatpush1.bf16.msra.mxu0 0
        %578 = vmatprep.subr.bf16.mxu0 0
        %579 = vmatpush1.bf16.msra.mxu0 0
        %580 = vmatprep.subr.bf16.mxu0 0
        %581 = vmatpush1.bf16.msra.mxu0 0
        %582 = vmatprep.subr.bf16.mxu0 0
        %583 = vmatpush1.bf16.msra.mxu0 0
        %584 = vmatprep.subr.bf16.mxu0 0
        %585 = vmatpush1.bf16.msra.mxu0 0
        %586 = vmatprep.subr.bf16.mxu0 0
        %587 = vmatpush1.bf16.msra.mxu0 0
        %588 = vmatprep.subr.bf16.mxu0 0
        %589 = vmatpush1.bf16.msra.mxu0 0
        %590 = vmatprep.subr.bf16.mxu0 0
        %591 = vmatpush1.bf16.msra.mxu0 0
        %592 = vmatprep.subr.bf16.mxu0 0
        %593 = vmatpush1.bf16.msra.mxu0 0
        %594 = vmatprep.subr.bf16.mxu0 0
        %595 = vmatpush1.bf16.msra.mxu0 0
        %596 = vmatprep.subr.bf16.mxu0 0
        %597 = vmatpush1.bf16.msra.mxu0 0
        %598 = vmatprep.subr.bf16.mxu0 0
        %599 = vmatpush1.bf16.msra.mxu0 0
        %600 = vmatprep.subr.bf16.mxu0 0
        %601 = vmatpush1.bf16.msra.mxu0 0
        %602 = vmatprep.subr.bf16.mxu0 0
        %603 = vmatpush1.bf16.msra.mxu0 0
        %604 = vmatprep.mubr.bf16.mxu0 0
        %605 = vmatmul.mubr.bf16.gmra.mrb[0].mxu0 %v566
        %v606 = vpop.f32.mrb[0].mxu0
        %v607 = vadd.f32 0.0, %v606
        %v608 = vpop.f32.mrb[0].mxu0
        %v609 = vpop.f32.mrb[0].mxu0
        %v610 = vpop.f32.mrb[0].mxu0
        %611 = vdwg.mxu0
        %v613 = vsel %vm453, %v398, 0
        %v616 = vsel %vm568, %v550, 0
        %618 = vmatprep.subr.bf16.mxu0 0
        %619 = vmatpush1.bf16.msra.mxu0 %v616
        %620 = vmatprep.subr.bf16.mxu0 0
        %621 = vmatpush1.bf16.msra.mxu0 0
        %622 = vmatprep.subr.bf16.mxu0 0
        %623 = vmatpush1.bf16.msra.mxu0 0
        %624 = vmatprep.subr.bf16.mxu0 0
        %625 = vmatpush1.bf16.msra.mxu0 0
        %626 = vmatprep.subr.bf16.mxu0 0
        %627 = vmatpush1.bf16.msra.mxu0 0
        %628 = vmatprep.subr.bf16.mxu0 0
        %629 = vmatpush1.bf16.msra.mxu0 0
        %630 = vmatprep.subr.bf16.mxu0 0
        %631 = vmatpush1.bf16.msra.mxu0 0
        %632 = vmatprep.subr.bf16.mxu0 0
        %633 = vmatpush1.bf16.msra.mxu0 0
        %634 = vmatprep.subr.bf16.mxu0 0
        %635 = vmatpush1.bf16.msra.mxu0 0
        %636 = vmatprep.subr.bf16.mxu0 0
        %637 = vmatpush1.bf16.msra.mxu0 0
        %638 = vmatprep.subr.bf16.mxu0 0
        %639 = vmatpush1.bf16.msra.mxu0 0
        %640 = vmatprep.subr.bf16.mxu0 0
        %641 = vmatpush1.bf16.msra.mxu0 0
        %642 = vmatprep.subr.bf16.mxu0 0
        %643 = vmatpush1.bf16.msra.mxu0 0
        %644 = vmatprep.subr.bf16.mxu0 0
        %645 = vmatpush1.bf16.msra.mxu0 0
        %646 = vmatprep.subr.bf16.mxu0 0
        %647 = vmatpush1.bf16.msra.mxu0 0
        %648 = vmatprep.subr.bf16.mxu0 0
        %649 = vmatpush1.bf16.msra.mxu0 0
        %650 = vmatprep.mubr.bf16.mxu0 0
        %651 = vmatmul.mubr.bf16.gmra.mrb[0].mxu0 %v613
        %v652 = vpop.f32.mrb[0].mxu0
        %v653 = vadd.f32 0.0, %v652
        %v654 = vpop.f32.mrb[0].mxu0
        %v655 = vpop.f32.mrb[0].mxu0
        %v656 = vpop.f32.mrb[0].mxu0
        %657 = vdwg.mxu0
        %v659 = vsel %vm453, %v399, 0
        %v662 = vsel %vm568, %v551, 0
        %664 = vmatprep.subr.bf16.mxu0 0
        %665 = vmatpush1.bf16.msra.mxu0 %v662
        %666 = vmatprep.subr.bf16.mxu0 0
        %667 = vmatpush1.bf16.msra.mxu0 0
        %668 = vmatprep.subr.bf16.mxu0 0
        %669 = vmatpush1.bf16.msra.mxu0 0
        %670 = vmatprep.subr.bf16.mxu0 0
        %671 = vmatpush1.bf16.msra.mxu0 0
        %672 = vmatprep.subr.bf16.mxu0 0
        %673 = vmatpush1.bf16.msra.mxu0 0
        %674 = vmatprep.subr.bf16.mxu0 0
        %675 = vmatpush1.bf16.msra.mxu0 0
        %676 = vmatprep.subr.bf16.mxu0 0
        %677 = vmatpush1.bf16.msra.mxu0 0
        %678 = vmatprep.subr.bf16.mxu0 0
        %679 = vmatpush1.bf16.msra.mxu0 0
        %680 = vmatprep.subr.bf16.mxu0 0
        %681 = vmatpush1.bf16.msra.mxu0 0
        %682 = vmatprep.subr.bf16.mxu0 0
        %683 = vmatpush1.bf16.msra.mxu0 0
        %684 = vmatprep.subr.bf16.mxu0 0
        %685 = vmatpush1.bf16.msra.mxu0 0
        %686 = vmatprep.subr.bf16.mxu0 0
        %687 = vmatpush1.bf16.msra.mxu0 0
        %688 = vmatprep.subr.bf16.mxu0 0
        %689 = vmatpush1.bf16.msra.mxu0 0
        %690 = vmatprep.subr.bf16.mxu0 0
        %691 = vmatpush1.bf16.msra.mxu0 0
        %692 = vmatprep.subr.bf16.mxu0 0
        %693 = vmatpush1.bf16.msra.mxu0 0
        %694 = vmatprep.subr.bf16.mxu0 0
        %695 = vmatpush1.bf16.msra.mxu0 0
        %696 = vmatprep.mubr.bf16.mxu0 0
        %697 = vmatmul.mubr.bf16.gmra.mrb[0].mxu0 %v659
        %v698 = vpop.f32.mrb[0].mxu0
        %v699 = vadd.f32 0.0, %v698
        %v700 = vpop.f32.mrb[0].mxu0
        %v701 = vpop.f32.mrb[0].mxu0
        %v702 = vpop.f32.mrb[0].mxu0
        %703 = vdwg.mxu0
        %v705 = vsel %vm453, %v400, 0
        %v708 = vsel %vm568, %v552, 0
        %710 = vmatprep.subr.bf16.mxu0 0
        %711 = vmatpush1.bf16.msra.mxu0 %v708
        %712 = vmatprep.subr.bf16.mxu0 0
        %713 = vmatpush1.bf16.msra.mxu0 0
        %714 = vmatprep.subr.bf16.mxu0 0
        %715 = vmatpush1.bf16.msra.mxu0 0
        %716 = vmatprep.subr.bf16.mxu0 0
        %717 = vmatpush1.bf16.msra.mxu0 0
        %718 = vmatprep.subr.bf16.mxu0 0
        %719 = vmatpush1.bf16.msra.mxu0 0
        %720 = vmatprep.subr.bf16.mxu0 0
        %721 = vmatpush1.bf16.msra.mxu0 0
        %722 = vmatprep.subr.bf16.mxu0 0
        %723 = vmatpush1.bf16.msra.mxu0 0
        %724 = vmatprep.subr.bf16.mxu0 0
        %725 = vmatpush1.bf16.msra.mxu0 0
        %726 = vmatprep.subr.bf16.mxu0 0
        %727 = vmatpush1.bf16.msra.mxu0 0
        %728 = vmatprep.subr.bf16.mxu0 0
        %729 = vmatpush1.bf16.msra.mxu0 0
        %730 = vmatprep.subr.bf16.mxu0 0
        %731 = vmatpush1.bf16.msra.mxu0 0
        %732 = vmatprep.subr.bf16.mxu0 0
        %733 = vmatpush1.bf16.msra.mxu0 0
        %734 = vmatprep.subr.bf16.mxu0 0
        %735 = vmatpush1.bf16.msra.mxu0 0
        %736 = vmatprep.subr.bf16.mxu0 0
        %737 = vmatpush1.bf16.msra.mxu0 0
        %738 = vmatprep.subr.bf16.mxu0 0
        %739 = vmatpush1.bf16.msra.mxu0 0
        %740 = vmatprep.subr.bf16.mxu0 0
        %741 = vmatpush1.bf16.msra.mxu0 0
        %742 = vmatprep.mubr.bf16.mxu0 0
        %743 = vmatmul.mubr.bf16.gmra.mrb[0].mxu0 %v705
        %v744 = vpop.f32.mrb[0].mxu0
        %v745 = vadd.f32 0.0, %v744
        %v746 = vpop.f32.mrb[0].mxu0
        %v747 = vpop.f32.mrb[0].mxu0
        %v748 = vpop.f32.mrb[0].mxu0
        %749 = vdwg.mxu0
        %v751 = vsel %vm453, %v401, 0
        %v754 = vsel %vm568, %v553, 0
        %756 = vmatprep.subr.bf16.mxu0 0
        %757 = vmatpush1.bf16.msra.mxu0 %v754
        %758 = vmatprep.subr.bf16.mxu0 0
        %759 = vmatpush1.bf16.msra.mxu0 0
        %760 = vmatprep.subr.bf16.mxu0 0
        %761 = vmatpush1.bf16.msra.mxu0 0
        %762 = vmatprep.subr.bf16.mxu0 0
        %763 = vmatpush1.bf16.msra.mxu0 0
        %764 = vmatprep.subr.bf16.mxu0 0
        %765 = vmatpush1.bf16.msra.mxu0 0
        %766 = vmatprep.subr.bf16.mxu0 0
        %767 = vmatpush1.bf16.msra.mxu0 0
        %768 = vmatprep.subr.bf16.mxu0 0
        %769 = vmatpush1.bf16.msra.mxu0 0
        %770 = vmatprep.subr.bf16.mxu0 0
        %771 = vmatpush1.bf16.msra.mxu0 0
        %772 = vmatprep.subr.bf16.mxu0 0
        %773 = vmatpush1.bf16.msra.mxu0 0
        %774 = vmatprep.subr.bf16.mxu0 0
        %775 = vmatpush1.bf16.msra.mxu0 0
        %776 = vmatprep.subr.bf16.mxu0 0
        %777 = vmatpush1.bf16.msra.mxu0 0
        %778 = vmatprep.subr.bf16.mxu0 0
        %779 = vmatpush1.bf16.msra.mxu0 0
        %780 = vmatprep.subr.bf16.mxu0 0
        %781 = vmatpush1.bf16.msra.mxu0 0
        %782 = vmatprep.subr.bf16.mxu0 0
        %783 = vmatpush1.bf16.msra.mxu0 0
        %784 = vmatprep.subr.bf16.mxu0 0
        %785 = vmatpush1.bf16.msra.mxu0 0
        %786 = vmatprep.subr.bf16.mxu0 0
        %787 = vmatpush1.bf16.msra.mxu0 0
        %788 = vmatprep.mubr.bf16.mxu0 0
        %789 = vmatmul.mubr.bf16.gmra.mrb[0].mxu0 %v751
        %v790 = vpop.f32.mrb[0].mxu0
        %v791 = vadd.f32 0.0, %v790
        %v792 = vpop.f32.mrb[0].mxu0
        %v793 = vpop.f32.mrb[0].mxu0
        %v794 = vpop.f32.mrb[0].mxu0
        %795 = vdwg.mxu0
        %v797 = vsel %vm453, %v402, 0
        %v800 = vsel %vm568, %v554, 0
        %802 = vmatprep.subr.bf16.mxu0 0
        %803 = vmatpush1.bf16.msra.mxu0 %v800
        %804 = vmatprep.subr.bf16.mxu0 0
        %805 = vmatpush1.bf16.msra.mxu0 0
        %806 = vmatprep.subr.bf16.mxu0 0
        %807 = vmatpush1.bf16.msra.mxu0 0
        %808 = vmatprep.subr.bf16.mxu0 0
        %809 = vmatpush1.bf16.msra.mxu0 0
        %810 = vmatprep.subr.bf16.mxu0 0
        %811 = vmatpush1.bf16.msra.mxu0 0
        %812 = vmatprep.subr.bf16.mxu0 0
        %813 = vmatpush1.bf16.msra.mxu0 0
        %814 = vmatprep.subr.bf16.mxu0 0
        %815 = vmatpush1.bf16.msra.mxu0 0
        %816 = vmatprep.subr.bf16.mxu0 0
        %817 = vmatpush1.bf16.msra.mxu0 0
        %818 = vmatprep.subr.bf16.mxu0 0
        %819 = vmatpush1.bf16.msra.mxu0 0
        %820 = vmatprep.subr.bf16.mxu0 0
        %821 = vmatpush1.bf16.msra.mxu0 0
        %822 = vmatprep.subr.bf16.mxu0 0
        %823 = vmatpush1.bf16.msra.mxu0 0
        %824 = vmatprep.subr.bf16.mxu0 0
        %825 = vmatpush1.bf16.msra.mxu0 0
        %826 = vmatprep.subr.bf16.mxu0 0
        %827 = vmatpush1.bf16.msra.mxu0 0
        %828 = vmatprep.subr.bf16.mxu0 0
        %829 = vmatpush1.bf16.msra.mxu0 0
        %830 = vmatprep.subr.bf16.mxu0 0
        %831 = vmatpush1.bf16.msra.mxu0 0
        %832 = vmatprep.subr.bf16.mxu0 0
        %833 = vmatpush1.bf16.msra.mxu0 0
        %834 = vmatprep.mubr.bf16.mxu0 0
        %835 = vmatmul.mubr.bf16.gmra.mrb[0].mxu0 %v797
        %v836 = vpop.f32.mrb[0].mxu0
        %v837 = vadd.f32 0.0, %v836
        %v838 = vpop.f32.mrb[0].mxu0
        %v839 = vpop.f32.mrb[0].mxu0
        %v840 = vpop.f32.mrb[0].mxu0
        %841 = vdwg.mxu0
        %v843 = vsel %vm453, %v403, 0
        %v846 = vsel %vm568, %v555, 0
        %848 = vmatprep.subr.bf16.mxu0 0
        %849 = vmatpush1.bf16.msra.mxu0 %v846
        %850 = vmatprep.subr.bf16.mxu0 0
        %851 = vmatpush1.bf16.msra.mxu0 0
        %852 = vmatprep.subr.bf16.mxu0 0
        %853 = vmatpush1.bf16.msra.mxu0 0
        %854 = vmatprep.subr.bf16.mxu0 0
        %855 = vmatpush1.bf16.msra.mxu0 0
        %856 = vmatprep.subr.bf16.mxu0 0
        %857 = vmatpush1.bf16.msra.mxu0 0
        %858 = vmatprep.subr.bf16.mxu0 0
        %859 = vmatpush1.bf16.msra.mxu0 0
        %860 = vmatprep.subr.bf16.mxu0 0
        %861 = vmatpush1.bf16.msra.mxu0 0
        %862 = vmatprep.subr.bf16.mxu0 0
        %863 = vmatpush1.bf16.msra.mxu0 0
        %864 = vmatprep.subr.bf16.mxu0 0
        %865 = vmatpush1.bf16.msra.mxu0 0
        %866 = vmatprep.subr.bf16.mxu0 0
        %867 = vmatpush1.bf16.msra.mxu0 0
        %868 = vmatprep.subr.bf16.mxu0 0
        %869 = vmatpush1.bf16.msra.mxu0 0
        %870 = vmatprep.subr.bf16.mxu0 0
        %871 = vmatpush1.bf16.msra.mxu0 0
        %872 = vmatprep.subr.bf16.mxu0 0
        %873 = vmatpush1.bf16.msra.mxu0 0
        %874 = vmatprep.subr.bf16.mxu0 0
        %875 = vmatpush1.bf16.msra.mxu0 0
        %876 = vmatprep.subr.bf16.mxu0 0
        %877 = vmatpush1.bf16.msra.mxu0 0
        %878 = vmatprep.subr.bf16.mxu0 0
        %879 = vmatpush1.bf16.msra.mxu0 0
        %880 = vmatprep.mubr.bf16.mxu0 0
        %881 = vmatmul.mubr.bf16.gmra.mrb[0].mxu0 %v843
        %v882 = vpop.f32.mrb[0].mxu0
        %v883 = vadd.f32 0.0, %v882
        %v884 = vpop.f32.mrb[0].mxu0
        %v885 = vpop.f32.mrb[0].mxu0
        %v886 = vpop.f32.mrb[0].mxu0
        %887 = vdwg.mxu0
        %v889 = vsel %vm453, %v404, 0
        %v892 = vsel %vm568, %v556, 0
        %894 = vmatprep.subr.bf16.mxu0 0
        %895 = vmatpush1.bf16.msra.mxu0 %v892
        %896 = vmatprep.subr.bf16.mxu0 0
        %897 = vmatpush1.bf16.msra.mxu0 0
        %898 = vmatprep.subr.bf16.mxu0 0
        %899 = vmatpush1.bf16.msra.mxu0 0
        %900 = vmatprep.subr.bf16.mxu0 0
        %901 = vmatpush1.bf16.msra.mxu0 0
        %902 = vmatprep.subr.bf16.mxu0 0
        %903 = vmatpush1.bf16.msra.mxu0 0
        %904 = vmatprep.subr.bf16.mxu0 0
        %905 = vmatpush1.bf16.msra.mxu0 0
        %906 = vmatprep.subr.bf16.mxu0 0
        %907 = vmatpush1.bf16.msra.mxu0 0
        %908 = vmatprep.subr.bf16.mxu0 0
        %909 = vmatpush1.bf16.msra.mxu0 0
        %910 = vmatprep.subr.bf16.mxu0 0
        %911 = vmatpush1.bf16.msra.mxu0 0
        %912 = vmatprep.subr.bf16.mxu0 0
        %913 = vmatpush1.bf16.msra.mxu0 0
        %914 = vmatprep.subr.bf16.mxu0 0
        %915 = vmatpush1.bf16.msra.mxu0 0
        %916 = vmatprep.subr.bf16.mxu0 0
        %917 = vmatpush1.bf16.msra.mxu0 0
        %918 = vmatprep.subr.bf16.mxu0 0
        %919 = vmatpush1.bf16.msra.mxu0 0
        %920 = vmatprep.subr.bf16.mxu0 0
        %921 = vmatpush1.bf16.msra.mxu0 0
        %922 = vmatprep.subr.bf16.mxu0 0
        %923 = vmatpush1.bf16.msra.mxu0 0
        %924 = vmatprep.subr.bf16.mxu0 0
        %925 = vmatpush1.bf16.msra.mxu0 0
        %926 = vmatprep.mubr.bf16.mxu0 0
        %927 = vmatmul.mubr.bf16.gmra.mrb[0].mxu0 %v889
        %v928 = vpop.f32.mrb[0].mxu0
        %v929 = vadd.f32 0.0, %v928
        %v930 = vpop.f32.mrb[0].mxu0
        %v931 = vpop.f32.mrb[0].mxu0
        %v932 = vpop.f32.mrb[0].mxu0
        %933 = vdwg.mxu0
        %v935 = vsel %vm453, %v405, 0
        %v938 = vsel %vm568, %v557, 0
        %940 = vmatprep.subr.bf16.mxu0 0
        %941 = vmatpush1.bf16.msra.mxu0 %v938
        %942 = vmatprep.subr.bf16.mxu0 0
        %943 = vmatpush1.bf16.msra.mxu0 0
        %944 = vmatprep.subr.bf16.mxu0 0
        %945 = vmatpush1.bf16.msra.mxu0 0
        %946 = vmatprep.subr.bf16.mxu0 0
        %947 = vmatpush1.bf16.msra.mxu0 0
        %948 = vmatprep.subr.bf16.mxu0 0
        %949 = vmatpush1.bf16.msra.mxu0 0
        %950 = vmatprep.subr.bf16.mxu0 0
        %951 = vmatpush1.bf16.msra.mxu0 0
        %952 = vmatprep.subr.bf16.mxu0 0
        %953 = vmatpush1.bf16.msra.mxu0 0
        %954 = vmatprep.subr.bf16.mxu0 0
        %955 = vmatpush1.bf16.msra.mxu0 0
        %956 = vmatprep.subr.bf16.mxu0 0
        %957 = vmatpush1.bf16.msra.mxu0 0
        %958 = vmatprep.subr.bf16.mxu0 0
        %959 = vmatpush1.bf16.msra.mxu0 0
        %960 = vmatprep.subr.bf16.mxu0 0
        %961 = vmatpush1.bf16.msra.mxu0 0
        %962 = vmatprep.subr.bf16.mxu0 0
        %963 = vmatpush1.bf16.msra.mxu0 0
        %964 = vmatprep.subr.bf16.mxu0 0
        %965 = vmatpush1.bf16.msra.mxu0 0
        %966 = vmatprep.subr.bf16.mxu0 0
        %967 = vmatpush1.bf16.msra.mxu0 0
        %968 = vmatprep.subr.bf16.mxu0 0
        %969 = vmatpush1.bf16.msra.mxu0 0
        %970 = vmatprep.subr.bf16.mxu0 0
        %971 = vmatpush1.bf16.msra.mxu0 0
        %972 = vmatprep.mubr.bf16.mxu0 0
        %973 = vmatmul.mubr.bf16.gmra.mrb[0].mxu0 %v935
        %v974 = vpop.f32.mrb[0].mxu0
        %v975 = vadd.f32 0.0, %v974
        %v976 = vpop.f32.mrb[0].mxu0
        %v977 = vpop.f32.mrb[0].mxu0
        %v978 = vpop.f32.mrb[0].mxu0
        %979 = vdwg.mxu0
        %v981 = vsel %vm453, %v406, 0
        %v984 = vsel %vm568, %v558, 0
        %986 = vmatprep.subr.bf16.mxu0 0
        %987 = vmatpush1.bf16.msra.mxu0 %v984
        %988 = vmatprep.subr.bf16.mxu0 0
        %989 = vmatpush1.bf16.msra.mxu0 0
        %990 = vmatprep.subr.bf16.mxu0 0
        %991 = vmatpush1.bf16.msra.mxu0 0
        %992 = vmatprep.subr.bf16.mxu0 0
        %993 = vmatpush1.bf16.msra.mxu0 0
        %994 = vmatprep.subr.bf16.mxu0 0
        %995 = vmatpush1.bf16.msra.mxu0 0
        %996 = vmatprep.subr.bf16.mxu0 0
        %997 = vmatpush1.bf16.msra.mxu0 0
        %998 = vmatprep.subr.bf16.mxu0 0
        %999 = vmatpush1.bf16.msra.mxu0 0
        %1000 = vmatprep.subr.bf16.mxu0 0
        %1001 = vmatpush1.bf16.msra.mxu0 0
        %1002 = vmatprep.subr.bf16.mxu0 0
        %1003 = vmatpush1.bf16.msra.mxu0 0
        %1004 = vmatprep.subr.bf16.mxu0 0
        %1005 = vmatpush1.bf16.msra.mxu0 0
        %1006 = vmatprep.subr.bf16.mxu0 0
        %1007 = vmatpush1.bf16.msra.mxu0 0
        %1008 = vmatprep.subr.bf16.mxu0 0
        %1009 = vmatpush1.bf16.msra.mxu0 0
        %1010 = vmatprep.subr.bf16.mxu0 0
        %1011 = vmatpush1.bf16.msra.mxu0 0
        %1012 = vmatprep.subr.bf16.mxu0 0
        %1013 = vmatpush1.bf16.msra.mxu0 0
        %1014 = vmatprep.subr.bf16.mxu0 0
        %1015 = vmatpush1.bf16.msra.mxu0 0
        %1016 = vmatprep.subr.bf16.mxu0 0
        %1017 = vmatpush1.bf16.msra.mxu0 0
        %1018 = vmatprep.mubr.bf16.mxu0 0
        %1019 = vmatmul.mubr.bf16.gmra.mrb[0].mxu0 %v981
        %v1020 = vpop.f32.mrb[0].mxu0
        %v1021 = vadd.f32 0.0, %v1020
        %v1022 = vpop.f32.mrb[0].mxu0
        %v1023 = vpop.f32.mrb[0].mxu0
        %v1024 = vpop.f32.mrb[0].mxu0
        %1025 = vdwg.mxu0
        %v1027 = vsel %vm453, %v407, 0
        %v1030 = vsel %vm568, %v559, 0
        %1032 = vmatprep.subr.bf16.mxu0 0
        %1033 = vmatpush1.bf16.msra.mxu0 %v1030
        %1034 = vmatprep.subr.bf16.mxu0 0
        %1035 = vmatpush1.bf16.msra.mxu0 0
        %1036 = vmatprep.subr.bf16.mxu0 0
        %1037 = vmatpush1.bf16.msra.mxu0 0
        %1038 = vmatprep.subr.bf16.mxu0 0
        %1039 = vmatpush1.bf16.msra.mxu0 0
        %1040 = vmatprep.subr.bf16.mxu0 0
        %1041 = vmatpush1.bf16.msra.mxu0 0
        %1042 = vmatprep.subr.bf16.mxu0 0
        %1043 = vmatpush1.bf16.msra.mxu0 0
        %1044 = vmatprep.subr.bf16.mxu0 0
        %1045 = vmatpush1.bf16.msra.mxu0 0
        %1046 = vmatprep.subr.bf16.mxu0 0
        %1047 = vmatpush1.bf16.msra.mxu0 0
        %1048 = vmatprep.subr.bf16.mxu0 0
        %1049 = vmatpush1.bf16.msra.mxu0 0
        %1050 = vmatprep.subr.bf16.mxu0 0
        %1051 = vmatpush1.bf16.msra.mxu0 0
        %1052 = vmatprep.subr.bf16.mxu0 0
        %1053 = vmatpush1.bf16.msra.mxu0 0
        %1054 = vmatprep.subr.bf16.mxu0 0
        %1055 = vmatpush1.bf16.msra.mxu0 0
        %1056 = vmatprep.subr.bf16.mxu0 0
        %1057 = vmatpush1.bf16.msra.mxu0 0
        %1058 = vmatprep.subr.bf16.mxu0 0
        %1059 = vmatpush1.bf16.msra.mxu0 0
        %1060 = vmatprep.subr.bf16.mxu0 0
        %1061 = vmatpush1.bf16.msra.mxu0 0
        %1062 = vmatprep.subr.bf16.mxu0 0
        %1063 = vmatpush1.bf16.msra.mxu0 0
        %1064 = vmatprep.mubr.bf16.mxu0 0
        %1065 = vmatmul.mubr.bf16.gmra.mrb[0].mxu0 %v1027
        %v1066 = vpop.f32.mrb[0].mxu0
        %v1067 = vadd.f32 0.0, %v1066
        %v1068 = vpop.f32.mrb[0].mxu0
        %v1069 = vpop.f32.mrb[0].mxu0
        %v1070 = vpop.f32.mrb[0].mxu0
        %1071 = vdwg.mxu0
        %v1073 = vsel %vm453, %v408, 0
        %v1076 = vsel %vm568, %v560, 0
        %1078 = vmatprep.subr.bf16.mxu0 0
        %1079 = vmatpush1.bf16.msra.mxu0 %v1076
        %1080 = vmatprep.subr.bf16.mxu0 0
        %1081 = vmatpush1.bf16.msra.mxu0 0
        %1082 = vmatprep.subr.bf16.mxu0 0
        %1083 = vmatpush1.bf16.msra.mxu0 0
        %1084 = vmatprep.subr.bf16.mxu0 0
        %1085 = vmatpush1.bf16.msra.mxu0 0
        %1086 = vmatprep.subr.bf16.mxu0 0
        %1087 = vmatpush1.bf16.msra.mxu0 0
        %1088 = vmatprep.subr.bf16.mxu0 0
        %1089 = vmatpush1.bf16.msra.mxu0 0
        %1090 = vmatprep.subr.bf16.mxu0 0
        %1091 = vmatpush1.bf16.msra.mxu0 0
        %1092 = vmatprep.subr.bf16.mxu0 0
        %1093 = vmatpush1.bf16.msra.mxu0 0
        %1094 = vmatprep.subr.bf16.mxu0 0
        %1095 = vmatpush1.bf16.msra.mxu0 0
        %1096 = vmatprep.subr.bf16.mxu0 0
        %1097 = vmatpush1.bf16.msra.mxu0 0
        %1098 = vmatprep.subr.bf16.mxu0 0
        %1099 = vmatpush1.bf16.msra.mxu0 0
        %1100 = vmatprep.subr.bf16.mxu0 0
        %1101 = vmatpush1.bf16.msra.mxu0 0
        %1102 = vmatprep.subr.bf16.mxu0 0
        %1103 = vmatpush1.bf16.msra.mxu0 0
        %1104 = vmatprep.subr.bf16.mxu0 0
        %1105 = vmatpush1.bf16.msra.mxu0 0
        %1106 = vmatprep.subr.bf16.mxu0 0
        %1107 = vmatpush1.bf16.msra.mxu0 0
        %1108 = vmatprep.subr.bf16.mxu0 0
        %1109 = vmatpush1.bf16.msra.mxu0 0
        %1110 = vmatprep.mubr.bf16.mxu0 0
        %1111 = vmatmul.mubr.bf16.gmra.mrb[0].mxu0 %v1073
        %v1112 = vpop.f32.mrb[0].mxu0
        %v1113 = vadd.f32 0.0, %v1112
        %v1114 = vpop.f32.mrb[0].mxu0
        %v1115 = vpop.f32.mrb[0].mxu0
        %v1116 = vpop.f32.mrb[0].mxu0
        %1117 = vdwg.mxu0
        %v1119 = vsel %vm453, %v409, 0
        %v1122 = vsel %vm568, %v561, 0
        %1124 = vmatprep.subr.bf16.mxu0 0
        %1125 = vmatpush1.bf16.msra.mxu0 %v1122
        %1126 = vmatprep.subr.bf16.mxu0 0
        %1127 = vmatpush1.bf16.msra.mxu0 0
        %1128 = vmatprep.subr.bf16.mxu0 0
        %1129 = vmatpush1.bf16.msra.mxu0 0
        %1130 = vmatprep.subr.bf16.mxu0 0
        %1131 = vmatpush1.bf16.msra.mxu0 0
        %1132 = vmatprep.subr.bf16.mxu0 0
        %1133 = vmatpush1.bf16.msra.mxu0 0
        %1134 = vmatprep.subr.bf16.mxu0 0
        %1135 = vmatpush1.bf16.msra.mxu0 0
        %1136 = vmatprep.subr.bf16.mxu0 0
        %1137 = vmatpush1.bf16.msra.mxu0 0
        %1138 = vmatprep.subr.bf16.mxu0 0
        %1139 = vmatpush1.bf16.msra.mxu0 0
        %1140 = vmatprep.subr.bf16.mxu0 0
        %1141 = vmatpush1.bf16.msra.mxu0 0
        %1142 = vmatprep.subr.bf16.mxu0 0
        %1143 = vmatpush1.bf16.msra.mxu0 0
        %1144 = vmatprep.subr.bf16.mxu0 0
        %1145 = vmatpush1.bf16.msra.mxu0 0
        %1146 = vmatprep.subr.bf16.mxu0 0
        %1147 = vmatpush1.bf16.msra.mxu0 0
        %1148 = vmatprep.subr.bf16.mxu0 0
        %1149 = vmatpush1.bf16.msra.mxu0 0
        %1150 = vmatprep.subr.bf16.mxu0 0
        %1151 = vmatpush1.bf16.msra.mxu0 0
        %1152 = vmatprep.subr.bf16.mxu0 0
        %1153 = vmatpush1.bf16.msra.mxu0 0
        %1154 = vmatprep.subr.bf16.mxu0 0
        %1155 = vmatpush1.bf16.msra.mxu0 0
        %1156 = vmatprep.mubr.bf16.mxu0 0
        %1157 = vmatmul.mubr.bf16.gmra.mrb[0].mxu0 %v1119
        %v1158 = vpop.f32.mrb[0].mxu0
        %v1159 = vadd.f32 0.0, %v1158
        %v1160 = vpop.f32.mrb[0].mxu0
        %v1161 = vpop.f32.mrb[0].mxu0
        %v1162 = vpop.f32.mrb[0].mxu0
        %1163 = vdwg.mxu0
        %v1165 = vsel %vm453, %v410, 0
        %v1168 = vsel %vm568, %v562, 0
        %1170 = vmatprep.subr.bf16.mxu0 0
        %1171 = vmatpush1.bf16.msra.mxu0 %v1168
        %1172 = vmatprep.subr.bf16.mxu0 0
        %1173 = vmatpush1.bf16.msra.mxu0 0
        %1174 = vmatprep.subr.bf16.mxu0 0
        %1175 = vmatpush1.bf16.msra.mxu0 0
        %1176 = vmatprep.subr.bf16.mxu0 0
        %1177 = vmatpush1.bf16.msra.mxu0 0
        %1178 = vmatprep.subr.bf16.mxu0 0
        %1179 = vmatpush1.bf16.msra.mxu0 0
        %1180 = vmatprep.subr.bf16.mxu0 0
        %1181 = vmatpush1.bf16.msra.mxu0 0
        %1182 = vmatprep.subr.bf16.mxu0 0
        %1183 = vmatpush1.bf16.msra.mxu0 0
        %1184 = vmatprep.subr.bf16.mxu0 0
        %1185 = vmatpush1.bf16.msra.mxu0 0
        %1186 = vmatprep.subr.bf16.mxu0 0
        %1187 = vmatpush1.bf16.msra.mxu0 0
        %1188 = vmatprep.subr.bf16.mxu0 0
        %1189 = vmatpush1.bf16.msra.mxu0 0
        %1190 = vmatprep.subr.bf16.mxu0 0
        %1191 = vmatpush1.bf16.msra.mxu0 0
        %1192 = vmatprep.subr.bf16.mxu0 0
        %1193 = vmatpush1.bf16.msra.mxu0 0
        %1194 = vmatprep.subr.bf16.mxu0 0
        %1195 = vmatpush1.bf16.msra.mxu0 0
        %1196 = vmatprep.subr.bf16.mxu0 0
        %1197 = vmatpush1.bf16.msra.mxu0 0
        %1198 = vmatprep.subr.bf16.mxu0 0
        %1199 = vmatpush1.bf16.msra.mxu0 0
        %1200 = vmatprep.subr.bf16.mxu0 0
        %1201 = vmatpush1.bf16.msra.mxu0 0
        %1202 = vmatprep.mubr.bf16.mxu0 0
        %1203 = vmatmul.mubr.bf16.gmra.mrb[0].mxu0 %v1165
        %v1204 = vpop.f32.mrb[0].mxu0
        %v1205 = vadd.f32 0.0, %v1204
        %v1206 = vpop.f32.mrb[0].mxu0
        %v1207 = vpop.f32.mrb[0].mxu0
        %v1208 = vpop.f32.mrb[0].mxu0
        %1209 = vdwg.mxu0
        %v1211 = vsel %vm453, %v411, 0
        %v1214 = vsel %vm568, %v563, 0
        %1216 = vmatprep.subr.bf16.mxu0 0
        %1217 = vmatpush1.bf16.msra.mxu0 %v1214
        %1218 = vmatprep.subr.bf16.mxu0 0
        %1219 = vmatpush1.bf16.msra.mxu0 0
        %1220 = vmatprep.subr.bf16.mxu0 0
        %1221 = vmatpush1.bf16.msra.mxu0 0
        %1222 = vmatprep.subr.bf16.mxu0 0
        %1223 = vmatpush1.bf16.msra.mxu0 0
        %1224 = vmatprep.subr.bf16.mxu0 0
        %1225 = vmatpush1.bf16.msra.mxu0 0
        %1226 = vmatprep.subr.bf16.mxu0 0
        %1227 = vmatpush1.bf16.msra.mxu0 0
        %1228 = vmatprep.subr.bf16.mxu0 0
        %1229 = vmatpush1.bf16.msra.mxu0 0
        %1230 = vmatprep.subr.bf16.mxu0 0
        %1231 = vmatpush1.bf16.msra.mxu0 0
        %1232 = vmatprep.subr.bf16.mxu0 0
        %1233 = vmatpush1.bf16.msra.mxu0 0
        %1234 = vmatprep.subr.bf16.mxu0 0
        %1235 = vmatpush1.bf16.msra.mxu0 0
        %1236 = vmatprep.subr.bf16.mxu0 0
        %1237 = vmatpush1.bf16.msra.mxu0 0
        %1238 = vmatprep.subr.bf16.mxu0 0
        %1239 = vmatpush1.bf16.msra.mxu0 0
        %1240 = vmatprep.subr.bf16.mxu0 0
        %1241 = vmatpush1.bf16.msra.mxu0 0
        %1242 = vmatprep.subr.bf16.mxu0 0
        %1243 = vmatpush1.bf16.msra.mxu0 0
        %1244 = vmatprep.subr.bf16.mxu0 0
        %1245 = vmatpush1.bf16.msra.mxu0 0
        %1246 = vmatprep.subr.bf16.mxu0 0
        %1247 = vmatpush1.bf16.msra.mxu0 0
        %1248 = vmatprep.mubr.bf16.mxu0 0
        %1249 = vmatmul.mubr.bf16.gmra.mrb[0].mxu0 %v1211
        %v1250 = vpop.f32.mrb[0].mxu0
        %v1251 = vadd.f32 0.0, %v1250
        %v1252 = vpop.f32.mrb[0].mxu0
        %v1253 = vpop.f32.mrb[0].mxu0
        %v1254 = vpop.f32.mrb[0].mxu0
        %1255 = vdwg.mxu0
        %v1257 = vsel %vm453, %v412, 0
        %v1260 = vsel %vm568, %v564, 0
        %1262 = vmatprep.subr.bf16.mxu0 0
        %1263 = vmatpush1.bf16.msra.mxu0 %v1260
        %1264 = vmatprep.subr.bf16.mxu0 0
        %1265 = vmatpush1.bf16.msra.mxu0 0
        %1266 = vmatprep.subr.bf16.mxu0 0
        %1267 = vmatpush1.bf16.msra.mxu0 0
        %1268 = vmatprep.subr.bf16.mxu0 0
        %1269 = vmatpush1.bf16.msra.mxu0 0
        %1270 = vmatprep.subr.bf16.mxu0 0
        %1271 = vmatpush1.bf16.msra.mxu0 0
        %1272 = vmatprep.subr.bf16.mxu0 0
        %1273 = vmatpush1.bf16.msra.mxu0 0
        %1274 = vmatprep.subr.bf16.mxu0 0
        %1275 = vmatpush1.bf16.msra.mxu0 0
        %1276 = vmatprep.subr.bf16.mxu0 0
        %1277 = vmatpush1.bf16.msra.mxu0 0
        %1278 = vmatprep.subr.bf16.mxu0 0
        %1279 = vmatpush1.bf16.msra.mxu0 0
        %1280 = vmatprep.subr.bf16.mxu0 0
        %1281 = vmatpush1.bf16.msra.mxu0 0
        %1282 = vmatprep.subr.bf16.mxu0 0
        %1283 = vmatpush1.bf16.msra.mxu0 0
        %1284 = vmatprep.subr.bf16.mxu0 0
        %1285 = vmatpush1.bf16.msra.mxu0 0
        %1286 = vmatprep.subr.bf16.mxu0 0
        %1287 = vmatpush1.bf16.msra.mxu0 0
        %1288 = vmatprep.subr.bf16.mxu0 0
        %1289 = vmatpush1.bf16.msra.mxu0 0
        %1290 = vmatprep.subr.bf16.mxu0 0
        %1291 = vmatpush1.bf16.msra.mxu0 0
        %1292 = vmatprep.subr.bf16.mxu0 0
        %1293 = vmatpush1.bf16.msra.mxu0 0
        %1294 = vmatprep.mubr.bf16.mxu0 0
        %1295 = vmatmul.mubr.bf16.gmra.mrb[0].mxu0 %v1257
        %v1296 = vpop.f32.mrb[0].mxu0
        %v1297 = vadd.f32 0.0, %v1296
        %v1298 = vpop.f32.mrb[0].mxu0
        %v1299 = vpop.f32.mrb[0].mxu0
        %v1300 = vpop.f32.mrb[0].mxu0
        %1301 = vdwg.mxu0
        %v1302 = vpack.c.bf16 %v653, %v607
        %v1303 = vpack.c.bf16 %v745, %v699
        %v1304 = vpack.c.bf16 %v837, %v791
        %v1305 = vpack.c.bf16 %v929, %v883
        %v1306 = vpack.c.bf16 %v1021, %v975
        %v1307 = vpack.c.bf16 %v1113, %v1067
        %v1308 = vpack.c.bf16 %v1205, %v1159
        %v1309 = vpack.c.bf16 %v1297, %v1251
        %v1314 = vunpack.c.l.b16 %v429
        %v1315 = vunpack.c.l.b16 %v430
        %v1316 = vunpack.c.l.b16 %v431
        %v1317 = vunpack.c.l.b16 %v432
        %v1318 = vpack.c.b16 %v1315, %v1314
        %v1319 = vpack.c.b16 %v1317, %v1316
        %vm1322 = vcmask 261120
        %v1324 = vsel %vm1322, %v1302, 0
        %v1327 = vsel %vm1322, %v1303, 0
        %v1330 = vsel %vm1322, %v1304, 0
        %v1333 = vsel %vm1322, %v1305, 0
        %v1336 = vsel %vm1322, %v1306, 0
        %v1339 = vsel %vm1322, %v1307, 0
        %v1342 = vsel %vm1322, %v1308, 0
        %v1345 = vsel %vm1322, %v1309, 0
        %1347 = vmatprep.subr.bf16.mxu0 0
        %1348 = vmatpush1.bf16.msra.mxu0 %v1318
        %1349 = vmatprep.subr.bf16.mxu0 0
        %1350 = vmatpush1.bf16.msra.mxu0 %v1319
        %1351 = vmatprep.subr.bf16.mxu0 0
        %1352 = vmatpush1.bf16.msra.mxu0 0
        %1353 = vmatprep.subr.bf16.mxu0 0
        %1354 = vmatpush1.bf16.msra.mxu0 0
        %1355 = vmatprep.subr.bf16.mxu0 0
        %1356 = vmatpush1.bf16.msra.mxu0 0
        %1357 = vmatprep.subr.bf16.mxu0 0
        %1358 = vmatpush1.bf16.msra.mxu0 0
        %1359 = vmatprep.subr.bf16.mxu0 0
        %1360 = vmatpush1.bf16.msra.mxu0 0
        %1361 = vmatprep.subr.bf16.mxu0 0
        %1362 = vmatpush1.bf16.msra.mxu0 0
        %1363 = vmatprep.subr.bf16.mxu0 0
        %1364 = vmatpush1.bf16.msra.mxu0 0
        %1365 = vmatprep.subr.bf16.mxu0 0
        %1366 = vmatpush1.bf16.msra.mxu0 0
        %1367 = vmatprep.subr.bf16.mxu0 0
        %1368 = vmatpush1.bf16.msra.mxu0 0
        %1369 = vmatprep.subr.bf16.mxu0 0
        %1370 = vmatpush1.bf16.msra.mxu0 0
        %1371 = vmatprep.subr.bf16.mxu0 0
        %1372 = vmatpush1.bf16.msra.mxu0 0
        %1373 = vmatprep.subr.bf16.mxu0 0
        %1374 = vmatpush1.bf16.msra.mxu0 0
        %1375 = vmatprep.subr.bf16.mxu0 0
        %1376 = vmatpush1.bf16.msra.mxu0 0
        %1377 = vmatprep.subr.bf16.mxu0 0
        %1378 = vmatpush1.bf16.msra.mxu0 0
        %1379 = vmatprep.mubr.bf16.mxu0 0
        %1380 = vmatmul.mubr.bf16.gmra.mrb[0].mxu0 %v1324
        %v1381 = vpop.f32.mrb[0].mxu0
        %v1382 = vadd.f32 %v532, %v1381
        %v1383 = vpop.f32.mrb[0].mxu0
        %v1384 = vpop.f32.mrb[0].mxu0
        %v1385 = vadd.f32 %v533, %v1384
        %v1386 = vpop.f32.mrb[0].mxu0
        %1387 = vmatprep.mubr.bf16.mxu0 0
        %1388 = vmatmul.mubr.bf16.gmra.mrb[0].mxu0 %v1327
        %v1389 = vpop.f32.mrb[0].mxu0
        %v1390 = vadd.f32 %v534, %v1389
        %v1391 = vpop.f32.mrb[0].mxu0
        %v1392 = vpop.f32.mrb[0].mxu0
        %v1393 = vadd.f32 %v535, %v1392
        %v1394 = vpop.f32.mrb[0].mxu0
        %1395 = vmatprep.mubr.bf16.mxu0 0
        %1396 = vmatmul.mubr.bf16.gmra.mrb[0].mxu0 %v1330
        %v1397 = vpop.f32.mrb[0].mxu0
        %v1398 = vadd.f32 %v536, %v1397
        %v1399 = vpop.f32.mrb[0].mxu0
        %v1400 = vpop.f32.mrb[0].mxu0
        %v1401 = vadd.f32 %v537, %v1400
        %v1402 = vpop.f32.mrb[0].mxu0
        %1403 = vmatprep.mubr.bf16.mxu0 0
        %1404 = vmatmul.mubr.bf16.gmra.mrb[0].mxu0 %v1333
        %v1405 = vpop.f32.mrb[0].mxu0
        %v1406 = vadd.f32 %v538, %v1405
        %v1407 = vpop.f32.mrb[0].mxu0
        %v1408 = vpop.f32.mrb[0].mxu0
        %v1409 = vadd.f32 %v539, %v1408
        %v1410 = vpop.f32.mrb[0].mxu0
        %1411 = vmatprep.mubr.bf16.mxu0 0
        %1412 = vmatmul.mubr.bf16.gmra.mrb[0].mxu0 %v1336
        %v1413 = vpop.f32.mrb[0].mxu0
        %v1414 = vadd.f32 %v540, %v1413
        %v1415 = vpop.f32.mrb[0].mxu0
        %v1416 = vpop.f32.mrb[0].mxu0
        %v1417 = vadd.f32 %v541, %v1416
        %v1418 = vpop.f32.mrb[0].mxu0
        %1419 = vmatprep.mubr.bf16.mxu0 0
        %1420 = vmatmul.mubr.bf16.gmra.mrb[0].mxu0 %v1339
        %v1421 = vpop.f32.mrb[0].mxu0
        %v1422 = vadd.f32 %v542, %v1421
        %v1423 = vpop.f32.mrb[0].mxu0
        %v1424 = vpop.f32.mrb[0].mxu0
        %v1425 = vadd.f32 %v543, %v1424
        %v1426 = vpop.f32.mrb[0].mxu0
        %1427 = vmatprep.mubr.bf16.mxu0 0
        %1428 = vmatmul.mubr.bf16.gmra.mrb[0].mxu0 %v1342
        %v1429 = vpop.f32.mrb[0].mxu0
        %v1430 = vadd.f32 %v544, %v1429
        %v1431 = vpop.f32.mrb[0].mxu0
        %v1432 = vpop.f32.mrb[0].mxu0
        %v1433 = vadd.f32 %v545, %v1432
        %v1434 = vpop.f32.mrb[0].mxu0
        %1435 = vmatprep.mubr.bf16.mxu0 0
        %1436 = vmatmul.mubr.bf16.gmra.mrb[0].mxu0 %v1345
        %v1437 = vpop.f32.mrb[0].mxu0
        %v1438 = vadd.f32 %v546, %v1437
        %v1439 = vpop.f32.mrb[0].mxu0
        %v1440 = vpop.f32.mrb[0].mxu0
        %v1441 = vadd.f32 %v547, %v1440
        %v1442 = vpop.f32.mrb[0].mxu0
        %1443 = vdwg.mxu0
        %v1444 = vpack.c.bf16 %v414, %v413
        %v1445 = vpack.c.bf16 %v416, %v415
        %v1446 = vpack.c.bf16 %v418, %v417
        %v1447 = vpack.c.bf16 %v420, %v419
        %v1448 = vpack.c.bf16 %v422, %v421
        %v1449 = vpack.c.bf16 %v424, %v423
        %v1450 = vpack.c.bf16 %v426, %v425
        %v1451 = vpack.c.bf16 %v428, %v427
        %v1453 = vlaneseq
        %v1454 = vshrl.u32 %v1453, 7
        %v1455 = vsub.s32 0, %v1454
        %v1456 = vrot.slane %v548, %v1455
        %v1462 = vunpack.c.l.b16 %v433
        %v1463 = vunpack.c.l.b16 %v434
        %v1464 = vunpack.c.l.b16 %v435
        %v1465 = vunpack.c.l.b16 %v436
        %v1466 = vpack.c.b16 %v1463, %v1462
        %v1467 = vpack.c.b16 %v1465, %v1464
        %v1471 = vsel %vm1322, %v1444, 0
        %v1474 = vsel %vm1322, %v1445, 0
        %v1477 = vsel %vm1322, %v1446, 0
        %v1480 = vsel %vm1322, %v1447, 0
        %v1483 = vsel %vm1322, %v1448, 0
        %v1486 = vsel %vm1322, %v1449, 0
        %v1489 = vsel %vm1322, %v1450, 0
        %v1492 = vsel %vm1322, %v1451, 0
        %1494 = vmatprep.subr.bf16.mxu0 0
        %1495 = vmatpush1.bf16.msra.mxu0 %v1466
        %1496 = vmatprep.subr.bf16.mxu0 0
        %1497 = vmatpush1.bf16.msra.mxu0 %v1467
        %1498 = vmatprep.subr.bf16.mxu0 0
        %1499 = vmatpush1.bf16.msra.mxu0 0
        %1500 = vmatprep.subr.bf16.mxu0 0
        %1501 = vmatpush1.bf16.msra.mxu0 0
        %1502 = vmatprep.subr.bf16.mxu0 0
        %1503 = vmatpush1.bf16.msra.mxu0 0
        %1504 = vmatprep.subr.bf16.mxu0 0
        %1505 = vmatpush1.bf16.msra.mxu0 0
        %1506 = vmatprep.subr.bf16.mxu0 0
        %1507 = vmatpush1.bf16.msra.mxu0 0
        %1508 = vmatprep.subr.bf16.mxu0 0
        %1509 = vmatpush1.bf16.msra.mxu0 0
        %1510 = vmatprep.subr.bf16.mxu0 0
        %1511 = vmatpush1.bf16.msra.mxu0 0
        %1512 = vmatprep.subr.bf16.mxu0 0
        %1513 = vmatpush1.bf16.msra.mxu0 0
        %1514 = vmatprep.subr.bf16.mxu0 0
        %1515 = vmatpush1.bf16.msra.mxu0 0
        %1516 = vmatprep.subr.bf16.mxu0 0
        %1517 = vmatpush1.bf16.msra.mxu0 0
        %1518 = vmatprep.subr.bf16.mxu0 0
        %1519 = vmatpush1.bf16.msra.mxu0 0
        %1520 = vmatprep.subr.bf16.mxu0 0
        %1521 = vmatpush1.bf16.msra.mxu0 0
        %1522 = vmatprep.subr.bf16.mxu0 0
        %1523 = vmatpush1.bf16.msra.mxu0 0
        %1524 = vmatprep.subr.bf16.mxu0 0
        %1525 = vmatpush1.bf16.msra.mxu0 0
        %1526 = vmatprep.mubr.bf16.mxu0 0
        %1527 = vmatmul.mubr.bf16.gmra.mrb[0].mxu0 %v1471
        %v1528 = vpop.f32.mrb[0].mxu0
        %v1529 = vadd.f32 %v1456, %v1528
        %v1530 = vpop.f32.mrb[0].mxu0
        %v1531 = vpop.f32.mrb[0].mxu0
        %v1532 = vadd.f32 %v1456, %v1531
        %v1533 = vpop.f32.mrb[0].mxu0
        %1534 = vmatprep.mubr.bf16.mxu0 0
        %1535 = vmatmul.mubr.bf16.gmra.mrb[0].mxu0 %v1474
        %v1536 = vpop.f32.mrb[0].mxu0
        %v1537 = vadd.f32 %v1456, %v1536
        %v1538 = vpop.f32.mrb[0].mxu0
        %v1539 = vpop.f32.mrb[0].mxu0
        %v1540 = vadd.f32 %v1456, %v1539
        %v1541 = vpop.f32.mrb[0].mxu0
        %1542 = vmatprep.mubr.bf16.mxu0 0
        %1543 = vmatmul.mubr.bf16.gmra.mrb[0].mxu0 %v1477
        %v1544 = vpop.f32.mrb[0].mxu0
        %v1545 = vadd.f32 %v1456, %v1544
        %v1546 = vpop.f32.mrb[0].mxu0
        %v1547 = vpop.f32.mrb[0].mxu0
        %v1548 = vadd.f32 %v1456, %v1547
        %v1549 = vpop.f32.mrb[0].mxu0
        %1550 = vmatprep.mubr.bf16.mxu0 0
        %1551 = vmatmul.mubr.bf16.gmra.mrb[0].mxu0 %v1480
        %v1552 = vpop.f32.mrb[0].mxu0
        %v1553 = vadd.f32 %v1456, %v1552
        %v1554 = vpop.f32.mrb[0].mxu0
        %v1555 = vpop.f32.mrb[0].mxu0
        %v1556 = vadd.f32 %v1456, %v1555
        %v1557 = vpop.f32.mrb[0].mxu0
        %1558 = vmatprep.mubr.bf16.mxu0 0
        %1559 = vmatmul.mubr.bf16.gmra.mrb[0].mxu0 %v1483
        %v1560 = vpop.f32.mrb[0].mxu0
        %v1561 = vadd.f32 %v1456, %v1560
        %v1562 = vpop.f32.mrb[0].mxu0
        %v1563 = vpop.f32.mrb[0].mxu0
        %v1564 = vadd.f32 %v1456, %v1563
        %v1565 = vpop.f32.mrb[0].mxu0
        %1566 = vmatprep.mubr.bf16.mxu0 0
        %1567 = vmatmul.mubr.bf16.gmra.mrb[0].mxu0 %v1486
        %v1568 = vpop.f32.mrb[0].mxu0
        %v1569 = vadd.f32 %v1456, %v1568
        %v1570 = vpop.f32.mrb[0].mxu0
        %v1571 = vpop.f32.mrb[0].mxu0
        %v1572 = vadd.f32 %v1456, %v1571
        %v1573 = vpop.f32.mrb[0].mxu0
        %1574 = vmatprep.mubr.bf16.mxu0 0
        %1575 = vmatmul.mubr.bf16.gmra.mrb[0].mxu0 %v1489
        %v1576 = vpop.f32.mrb[0].mxu0
        %v1577 = vadd.f32 %v1456, %v1576
        %v1578 = vpop.f32.mrb[0].mxu0
        %v1579 = vpop.f32.mrb[0].mxu0
        %v1580 = vadd.f32 %v1456, %v1579
        %v1581 = vpop.f32.mrb[0].mxu0
        %1582 = vmatprep.mubr.bf16.mxu0 0
        %1583 = vmatmul.mubr.bf16.gmra.mrb[0].mxu0 %v1492
        %v1584 = vpop.f32.mrb[0].mxu0
        %v1585 = vadd.f32 %v1456, %v1584
        %v1586 = vpop.f32.mrb[0].mxu0
        %v1587 = vpop.f32.mrb[0].mxu0
        %v1588 = vadd.f32 %v1456, %v1587
        %v1589 = vpop.f32.mrb[0].mxu0
        %1590 = vdwg.mxu0
        %v1591 = vadd.f32 %v1382, %v1529
        %v1592 = vadd.f32 %v1385, %v1532
        %v1593 = vadd.f32 %v1390, %v1537
        %v1594 = vadd.f32 %v1393, %v1540
        %v1595 = vadd.f32 %v1398, %v1545
        %v1596 = vadd.f32 %v1401, %v1548
        %v1597 = vadd.f32 %v1406, %v1553
        %v1598 = vadd.f32 %v1409, %v1556
        %v1599 = vadd.f32 %v1414, %v1561
        %v1600 = vadd.f32 %v1417, %v1564
        %v1601 = vadd.f32 %v1422, %v1569
        %v1602 = vadd.f32 %v1425, %v1572
        %v1603 = vadd.f32 %v1430, %v1577
        %v1604 = vadd.f32 %v1433, %v1580
        %v1605 = vadd.f32 %v1438, %v1585
        %v1606 = vadd.f32 %v1441, %v1588
        %v1607 = vsub.f32 0.0, %v1591
        %v1608 = vsub.f32 0.0, %v1592
        %v1609 = vsub.f32 0.0, %v1593
        %v1610 = vsub.f32 0.0, %v1594
        %v1611 = vsub.f32 0.0, %v1595
        %v1612 = vsub.f32 0.0, %v1596
        %v1613 = vsub.f32 0.0, %v1597
        %v1614 = vsub.f32 0.0, %v1598
        %v1615 = vsub.f32 0.0, %v1599
        %v1616 = vsub.f32 0.0, %v1600
        %v1617 = vsub.f32 0.0, %v1601
        %v1618 = vsub.f32 0.0, %v1602
        %v1619 = vsub.f32 0.0, %v1603
        %v1620 = vsub.f32 0.0, %v1604
        %v1621 = vsub.f32 0.0, %v1605
        %v1622 = vsub.f32 0.0, %v1606
        %v1623 = vmul.f32 %v1607, 1.442695
        %v1624 = vpow.pop %v1623
        %v1625 = vmul.f32 %v1608, 1.442695
        %v1626 = vpow.pop %v1625
        %v1627 = vmul.f32 %v1609, 1.442695
        %v1628 = vpow.pop %v1627
        %v1629 = vmul.f32 %v1610, 1.442695
        %v1630 = vpow.pop %v1629
        %v1631 = vmul.f32 %v1611, 1.442695
        %v1632 = vpow.pop %v1631
        %v1633 = vmul.f32 %v1612, 1.442695
        %v1634 = vpow.pop %v1633
        %v1635 = vmul.f32 %v1613, 1.442695
        %v1636 = vpow.pop %v1635
        %v1637 = vmul.f32 %v1614, 1.442695
        %v1638 = vpow.pop %v1637
        %v1639 = vmul.f32 %v1615, 1.442695
        %v1640 = vpow.pop %v1639
        %v1641 = vmul.f32 %v1616, 1.442695
        %v1642 = vpow.pop %v1641
        %v1643 = vmul.f32 %v1617, 1.442695
        %v1644 = vpow.pop %v1643
        %v1645 = vmul.f32 %v1618, 1.442695
        %v1646 = vpow.pop %v1645
        %v1647 = vmul.f32 %v1619, 1.442695
        %v1648 = vpow.pop %v1647
        %v1649 = vmul.f32 %v1620, 1.442695
        %v1650 = vpow.pop %v1649
        %v1651 = vmul.f32 %v1621, 1.442695
        %v1652 = vpow.pop %v1651
        %v1653 = vmul.f32 %v1622, 1.442695
        %v1654 = vpow.pop %v1653
        %v1655 = vadd.f32 %v1624, 1.0
        %v1656 = vadd.f32 %v1626, 1.0
        %v1657 = vadd.f32 %v1628, 1.0
        %v1658 = vadd.f32 %v1630, 1.0
        %v1659 = vadd.f32 %v1632, 1.0
        %v1660 = vadd.f32 %v1634, 1.0
        %v1661 = vadd.f32 %v1636, 1.0
        %v1662 = vadd.f32 %v1638, 1.0
        %v1663 = vadd.f32 %v1640, 1.0
        %v1664 = vadd.f32 %v1642, 1.0
        %v1665 = vadd.f32 %v1644, 1.0
        %v1666 = vadd.f32 %v1646, 1.0
        %v1667 = vadd.f32 %v1648, 1.0
        %v1668 = vadd.f32 %v1650, 1.0
        %v1669 = vadd.f32 %v1652, 1.0
        %v1670 = vadd.f32 %v1654, 1.0
        %v1671 = vrcp.pop %v1655
        %v1672 = vrcp.pop %v1656
        %v1673 = vrcp.pop %v1657
        %v1674 = vrcp.pop %v1658
        %v1675 = vrcp.pop %v1659
        %v1676 = vrcp.pop %v1660
        %v1677 = vrcp.pop %v1661
        %v1678 = vrcp.pop %v1662
        %v1679 = vrcp.pop %v1663
        %v1680 = vrcp.pop %v1664
        %v1681 = vrcp.pop %v1665
        %v1682 = vrcp.pop %v1666
        %v1683 = vrcp.pop %v1667
        %v1684 = vrcp.pop %v1668
        %v1685 = vrcp.pop %v1669
        %v1686 = vrcp.pop %v1670
        %1703 = vrot.lane.b32.xlu0 %v1529, 64
        %v1704 = vpop.permute.xlu0 %1703
        %1705 = vrot.lane.b32.xlu0 %v1532, 64
        %v1706 = vpop.permute.xlu0 %1705
        %1707 = vrot.lane.b32.xlu0 %v1537, 64
        %v1708 = vpop.permute.xlu0 %1707
        %1709 = vrot.lane.b32.xlu0 %v1540, 64
        %v1710 = vpop.permute.xlu0 %1709
        %1711 = vrot.lane.b32.xlu0 %v1545, 64
        %v1712 = vpop.permute.xlu0 %1711
        %1713 = vrot.lane.b32.xlu0 %v1548, 64
        %v1714 = vpop.permute.xlu0 %1713
        %1715 = vrot.lane.b32.xlu0 %v1553, 64
        %v1716 = vpop.permute.xlu0 %1715
        %1717 = vrot.lane.b32.xlu0 %v1556, 64
        %v1718 = vpop.permute.xlu0 %1717
        %1719 = vrot.lane.b32.xlu0 %v1561, 64
        %v1720 = vpop.permute.xlu0 %1719
        %1721 = vrot.lane.b32.xlu0 %v1564, 64
        %v1722 = vpop.permute.xlu0 %1721
        %1723 = vrot.lane.b32.xlu0 %v1569, 64
        %v1724 = vpop.permute.xlu0 %1723
        %1725 = vrot.lane.b32.xlu0 %v1572, 64
        %v1726 = vpop.permute.xlu0 %1725
        %1727 = vrot.lane.b32.xlu0 %v1577, 64
        %v1728 = vpop.permute.xlu0 %1727
        %1729 = vrot.lane.b32.xlu0 %v1580, 64
        %v1730 = vpop.permute.xlu0 %1729
        %1731 = vrot.lane.b32.xlu0 %v1585, 64
        %v1732 = vpop.permute.xlu0 %1731
        %1733 = vrot.lane.b32.xlu0 %v1588, 64
        %v1734 = vpop.permute.xlu0 %1733
        %v1751 = vmul.f32 %v1671, %v1704
        %v1752 = vmul.f32 %v1672, %v1706
        %v1753 = vmul.f32 %v1673, %v1708
        %v1754 = vmul.f32 %v1674, %v1710
        %v1755 = vmul.f32 %v1675, %v1712
        %v1756 = vmul.f32 %v1676, %v1714
        %v1757 = vmul.f32 %v1677, %v1716
        %v1758 = vmul.f32 %v1678, %v1718
        %v1759 = vmul.f32 %v1679, %v1720
        %v1760 = vmul.f32 %v1680, %v1722
        %v1761 = vmul.f32 %v1681, %v1724
        %v1762 = vmul.f32 %v1682, %v1726
        %v1763 = vmul.f32 %v1683, %v1728
        %v1764 = vmul.f32 %v1684, %v1730
        %v1765 = vmul.f32 %v1685, %v1732
        %v1766 = vmul.f32 %v1686, %v1734
        %1783 = vrot.lane.b32.xlu0 %v1751, 64
        %v1784 = vpop.permute.xlu0 %1783
        %1785 = vrot.lane.b32.xlu0 %v1752, 64
        %v1786 = vpop.permute.xlu0 %1785
        %1787 = vrot.lane.b32.xlu0 %v1753, 64
        %v1788 = vpop.permute.xlu0 %1787
        %1789 = vrot.lane.b32.xlu0 %v1754, 64
        %v1790 = vpop.permute.xlu0 %1789
        %1791 = vrot.lane.b32.xlu0 %v1755, 64
        %v1792 = vpop.permute.xlu0 %1791
        %1793 = vrot.lane.b32.xlu0 %v1756, 64
        %v1794 = vpop.permute.xlu0 %1793
        %1795 = vrot.lane.b32.xlu0 %v1757, 64
        %v1796 = vpop.permute.xlu0 %1795
        %1797 = vrot.lane.b32.xlu0 %v1758, 64
        %v1798 = vpop.permute.xlu0 %1797
        %1799 = vrot.lane.b32.xlu0 %v1759, 64
        %v1800 = vpop.permute.xlu0 %1799
        %1801 = vrot.lane.b32.xlu0 %v1760, 64
        %v1802 = vpop.permute.xlu0 %1801
        %1803 = vrot.lane.b32.xlu0 %v1761, 64
        %v1804 = vpop.permute.xlu0 %1803
        %1805 = vrot.lane.b32.xlu0 %v1762, 64
        %v1806 = vpop.permute.xlu0 %1805
        %1807 = vrot.lane.b32.xlu0 %v1763, 64
        %v1808 = vpop.permute.xlu0 %1807
        %1809 = vrot.lane.b32.xlu0 %v1764, 64
        %v1810 = vpop.permute.xlu0 %1809
        %1811 = vrot.lane.b32.xlu0 %v1765, 64
        %v1812 = vpop.permute.xlu0 %1811
        %1813 = vrot.lane.b32.xlu0 %v1766, 64
        %v1814 = vpop.permute.xlu0 %1813
        %v1831 = vadd.f32 %v1382, %v1784
        %v1832 = vadd.f32 %v1385, %v1786
        %v1833 = vadd.f32 %v1390, %v1788
        %v1834 = vadd.f32 %v1393, %v1790
        %v1835 = vadd.f32 %v1398, %v1792
        %v1836 = vadd.f32 %v1401, %v1794
        %v1837 = vadd.f32 %v1406, %v1796
        %v1838 = vadd.f32 %v1409, %v1798
        %v1839 = vadd.f32 %v1414, %v1800
        %v1840 = vadd.f32 %v1417, %v1802
        %v1841 = vadd.f32 %v1422, %v1804
        %v1842 = vadd.f32 %v1425, %v1806
        %v1843 = vadd.f32 %v1430, %v1808
        %v1844 = vadd.f32 %v1433, %v1810
        %v1845 = vadd.f32 %v1438, %v1812
        %v1846 = vadd.f32 %v1441, %v1814
        %v1847 = vtanh.pop %v1831
        %v1848 = vtanh.pop %v1832
        %v1849 = vtanh.pop %v1833
        %v1850 = vtanh.pop %v1834
        %v1851 = vtanh.pop %v1835
        %v1852 = vtanh.pop %v1836
        %v1853 = vtanh.pop %v1837
        %v1854 = vtanh.pop %v1838
        %v1855 = vtanh.pop %v1839
        %v1856 = vtanh.pop %v1840
        %v1857 = vtanh.pop %v1841
        %v1858 = vtanh.pop %v1842
        %v1859 = vtanh.pop %v1843
        %v1860 = vtanh.pop %v1844
        %v1861 = vtanh.pop %v1845
        %v1862 = vtanh.pop %v1846
        %v1863 = vsub.f32 1.0, %v1671
        %v1864 = vsub.f32 1.0, %v1672
        %v1865 = vsub.f32 1.0, %v1673
        %v1866 = vsub.f32 1.0, %v1674
        %v1867 = vsub.f32 1.0, %v1675
        %v1868 = vsub.f32 1.0, %v1676
        %v1869 = vsub.f32 1.0, %v1677
        %v1870 = vsub.f32 1.0, %v1678
        %v1871 = vsub.f32 1.0, %v1679
        %v1872 = vsub.f32 1.0, %v1680
        %v1873 = vsub.f32 1.0, %v1681
        %v1874 = vsub.f32 1.0, %v1682
        %v1875 = vsub.f32 1.0, %v1683
        %v1876 = vsub.f32 1.0, %v1684
        %v1877 = vsub.f32 1.0, %v1685
        %v1878 = vsub.f32 1.0, %v1686
        %1895 = vrot.lane.b32.xlu0 %v1847, 96
        %v1896 = vpop.permute.xlu0 %1895
        %1897 = vrot.lane.b32.xlu0 %v1848, 96
        %v1898 = vpop.permute.xlu0 %1897
        %1899 = vrot.lane.b32.xlu0 %v1849, 96
        %v1900 = vpop.permute.xlu0 %1899
        %1901 = vrot.lane.b32.xlu0 %v1850, 96
        %v1902 = vpop.permute.xlu0 %1901
        %1903 = vrot.lane.b32.xlu0 %v1851, 96
        %v1904 = vpop.permute.xlu0 %1903
        %1905 = vrot.lane.b32.xlu0 %v1852, 96
        %v1906 = vpop.permute.xlu0 %1905
        %1907 = vrot.lane.b32.xlu0 %v1853, 96
        %v1908 = vpop.permute.xlu0 %1907
        %1909 = vrot.lane.b32.xlu0 %v1854, 96
        %v1910 = vpop.permute.xlu0 %1909
        %1911 = vrot.lane.b32.xlu0 %v1855, 96
        %v1912 = vpop.permute.xlu0 %1911
        %1913 = vrot.lane.b32.xlu0 %v1856, 96
        %v1914 = vpop.permute.xlu0 %1913
        %1915 = vrot.lane.b32.xlu0 %v1857, 96
        %v1916 = vpop.permute.xlu0 %1915
        %1917 = vrot.lane.b32.xlu0 %v1858, 96
        %v1918 = vpop.permute.xlu0 %1917
        %1919 = vrot.lane.b32.xlu0 %v1859, 96
        %v1920 = vpop.permute.xlu0 %1919
        %1921 = vrot.lane.b32.xlu0 %v1860, 96
        %v1922 = vpop.permute.xlu0 %1921
        %1923 = vrot.lane.b32.xlu0 %v1861, 96
        %v1924 = vpop.permute.xlu0 %1923
        %1925 = vrot.lane.b32.xlu0 %v1862, 96
        %v1926 = vpop.permute.xlu0 %1925
        %v1943 = vmul.f32 %v1863, %v1896
        %v1944 = vmul.f32 %v1864, %v1898
        %v1945 = vmul.f32 %v1865, %v1900
        %v1946 = vmul.f32 %v1866, %v1902
        %v1947 = vmul.f32 %v1867, %v1904
        %v1948 = vmul.f32 %v1868, %v1906
        %v1949 = vmul.f32 %v1869, %v1908
        %v1950 = vmul.f32 %v1870, %v1910
        %v1951 = vmul.f32 %v1871, %v1912
        %v1952 = vmul.f32 %v1872, %v1914
        %v1953 = vmul.f32 %v1873, %v1916
        %v1954 = vmul.f32 %v1874, %v1918
        %v1955 = vmul.f32 %v1875, %v1920
        %v1956 = vmul.f32 %v1876, %v1922
        %v1957 = vmul.f32 %v1877, %v1924
        %v1958 = vmul.f32 %v1878, %v1926
        %1975 = vrot.lane.b32.xlu0 %v413, 32
        %v1976 = vpop.permute.xlu0 %1975
        %1977 = vrot.lane.b32.xlu0 %v414, 32
        %v1978 = vpop.permute.xlu0 %1977
        %1979 = vrot.lane.b32.xlu0 %v415, 32
        %v1980 = vpop.permute.xlu0 %1979
        %1981 = vrot.lane.b32.xlu0 %v416, 32
        %v1982 = vpop.permute.xlu0 %1981
        %1983 = vrot.lane.b32.xlu0 %v417, 32
        %v1984 = vpop.permute.xlu0 %1983
        %1985 = vrot.lane.b32.xlu0 %v418, 32
        %v1986 = vpop.permute.xlu0 %1985
        %1987 = vrot.lane.b32.xlu0 %v419, 32
        %v1988 = vpop.permute.xlu0 %1987
        %1989 = vrot.lane.b32.xlu0 %v420, 32
        %v1990 = vpop.permute.xlu0 %1989
        %1991 = vrot.lane.b32.xlu0 %v421, 32
        %v1992 = vpop.permute.xlu0 %1991
        %1993 = vrot.lane.b32.xlu0 %v422, 32
        %v1994 = vpop.permute.xlu0 %1993
        %1995 = vrot.lane.b32.xlu0 %v423, 32
        %v1996 = vpop.permute.xlu0 %1995
        %1997 = vrot.lane.b32.xlu0 %v424, 32
        %v1998 = vpop.permute.xlu0 %1997
        %1999 = vrot.lane.b32.xlu0 %v425, 32
        %v2000 = vpop.permute.xlu0 %1999
        %2001 = vrot.lane.b32.xlu0 %v426, 32
        %v2002 = vpop.permute.xlu0 %2001
        %2003 = vrot.lane.b32.xlu0 %v427, 32
        %v2004 = vpop.permute.xlu0 %2003
        %2005 = vrot.lane.b32.xlu0 %v428, 32
        %v2006 = vpop.permute.xlu0 %2005
        %v2023 = vmul.f32 %v1671, %v1976
        %v2024 = vmul.f32 %v1672, %v1978
        %v2025 = vmul.f32 %v1673, %v1980
        %v2026 = vmul.f32 %v1674, %v1982
        %v2027 = vmul.f32 %v1675, %v1984
        %v2028 = vmul.f32 %v1676, %v1986
        %v2029 = vmul.f32 %v1677, %v1988
        %v2030 = vmul.f32 %v1678, %v1990
        %v2031 = vmul.f32 %v1679, %v1992
        %v2032 = vmul.f32 %v1680, %v1994
        %v2033 = vmul.f32 %v1681, %v1996
        %v2034 = vmul.f32 %v1682, %v1998
        %v2035 = vmul.f32 %v1683, %v2000
        %v2036 = vmul.f32 %v1684, %v2002
        %v2037 = vmul.f32 %v1685, %v2004
        %v2038 = vmul.f32 %v1686, %v2006
        %v2039 = vadd.f32 %v1943, %v2023
        %v2040 = vadd.f32 %v1944, %v2024
        %v2041 = vadd.f32 %v1945, %v2025
        %v2042 = vadd.f32 %v1946, %v2026
        %v2043 = vadd.f32 %v1947, %v2027
        %v2044 = vadd.f32 %v1948, %v2028
        %v2045 = vadd.f32 %v1949, %v2029
        %v2046 = vadd.f32 %v1950, %v2030
        %v2047 = vadd.f32 %v1951, %v2031
        %v2048 = vadd.f32 %v1952, %v2032
        %v2049 = vadd.f32 %v1953, %v2033
        %v2050 = vadd.f32 %v1954, %v2034
        %v2051 = vadd.f32 %v1955, %v2035
        %v2052 = vadd.f32 %v1956, %v2036
        %v2053 = vadd.f32 %v1957, %v2037
        %v2054 = vadd.f32 %v1958, %v2038
        %v2055 = vpack.c.bf16 %v2039, %v2039
        %v2056 = vpack.c.bf16 %v2040, %v2040
        %v2057 = vpack.c.bf16 %v2041, %v2041
        %v2058 = vpack.c.bf16 %v2042, %v2042
        %v2059 = vpack.c.bf16 %v2043, %v2043
        %v2060 = vpack.c.bf16 %v2044, %v2044
        %v2061 = vpack.c.bf16 %v2045, %v2045
        %v2062 = vpack.c.bf16 %v2046, %v2046
        %v2063 = vpack.c.bf16 %v2047, %v2047
        %v2064 = vpack.c.bf16 %v2048, %v2048
        %v2065 = vpack.c.bf16 %v2049, %v2049
        %v2066 = vpack.c.bf16 %v2050, %v2050
        %v2067 = vpack.c.bf16 %v2051, %v2051
        %v2068 = vpack.c.bf16 %v2052, %v2052
        %v2069 = vpack.c.bf16 %v2053, %v2053
        %v2070 = vpack.c.bf16 %v2054, %v2054
        %2072 = vrot.lane.b32.xlu0 %v2055, 96
        %v2073 = vpop.permute.xlu0 %2072
        %v2075 = vsel %vm568, %v2073, 0
        %2077 = vmatprep.subr.bf16.mxu0 0
        %2078 = vmatpush1.bf16.msra.mxu0 %v2075
        %2079 = vmatprep.subr.bf16.mxu0 0
        %2080 = vmatpush1.bf16.msra.mxu0 0
        %2081 = vmatprep.subr.bf16.mxu0 0
        %2082 = vmatpush1.bf16.msra.mxu0 0
        %2083 = vmatprep.subr.bf16.mxu0 0
        %2084 = vmatpush1.bf16.msra.mxu0 0
        %2085 = vmatprep.subr.bf16.mxu0 0
        %2086 = vmatpush1.bf16.msra.mxu0 0
        %2087 = vmatprep.subr.bf16.mxu0 0
        %2088 = vmatpush1.bf16.msra.mxu0 0
        %2089 = vmatprep.subr.bf16.mxu0 0
        %2090 = vmatpush1.bf16.msra.mxu0 0
        %2091 = vmatprep.subr.bf16.mxu0 0
        %2092 = vmatpush1.bf16.msra.mxu0 0
        %2093 = vmatprep.subr.bf16.mxu0 0
        %2094 = vmatpush1.bf16.msra.mxu0 0
        %2095 = vmatprep.subr.bf16.mxu0 0
        %2096 = vmatpush1.bf16.msra.mxu0 0
        %2097 = vmatprep.subr.bf16.mxu0 0
        %2098 = vmatpush1.bf16.msra.mxu0 0
        %2099 = vmatprep.subr.bf16.mxu0 0
        %2100 = vmatpush1.bf16.msra.mxu0 0
        %2101 = vmatprep.subr.bf16.mxu0 0
        %2102 = vmatpush1.bf16.msra.mxu0 0
        %2103 = vmatprep.subr.bf16.mxu0 0
        %2104 = vmatpush1.bf16.msra.mxu0 0
        %2105 = vmatprep.subr.bf16.mxu0 0
        %2106 = vmatpush1.bf16.msra.mxu0 0
        %2107 = vmatprep.subr.bf16.mxu0 0
        %2108 = vmatpush1.bf16.msra.mxu0 0
        %2109 = vmatprep.mubr.bf16.mxu0 0
        %2110 = vmatmul.mubr.bf16.gmra.mrb[0].mxu0 %v566
        %v2111 = vpop.f32.mrb[0].mxu0
        %v2112 = vadd.f32 0.0, %v2111
        %v2113 = vpop.f32.mrb[0].mxu0
        %v2114 = vpop.f32.mrb[0].mxu0
        %v2115 = vpop.f32.mrb[0].mxu0
        %2116 = vdwg.mxu0
        %2118 = vrot.lane.b32.xlu0 %v2056, 96
        %v2119 = vpop.permute.xlu0 %2118
        %v2121 = vsel %vm568, %v2119, 0
        %2123 = vmatprep.subr.bf16.mxu0 0
        %2124 = vmatpush1.bf16.msra.mxu0 %v2121
        %2125 = vmatprep.subr.bf16.mxu0 0
        %2126 = vmatpush1.bf16.msra.mxu0 0
        %2127 = vmatprep.subr.bf16.mxu0 0
        %2128 = vmatpush1.bf16.msra.mxu0 0
        %2129 = vmatprep.subr.bf16.mxu0 0
        %2130 = vmatpush1.bf16.msra.mxu0 0
        %2131 = vmatprep.subr.bf16.mxu0 0
        %2132 = vmatpush1.bf16.msra.mxu0 0
        %2133 = vmatprep.subr.bf16.mxu0 0
        %2134 = vmatpush1.bf16.msra.mxu0 0
        %2135 = vmatprep.subr.bf16.mxu0 0
        %2136 = vmatpush1.bf16.msra.mxu0 0
        %2137 = vmatprep.subr.bf16.mxu0 0
        %2138 = vmatpush1.bf16.msra.mxu0 0
        %2139 = vmatprep.subr.bf16.mxu0 0
        %2140 = vmatpush1.bf16.msra.mxu0 0
        %2141 = vmatprep.subr.bf16.mxu0 0
        %2142 = vmatpush1.bf16.msra.mxu0 0
        %2143 = vmatprep.subr.bf16.mxu0 0
        %2144 = vmatpush1.bf16.msra.mxu0 0
        %2145 = vmatprep.subr.bf16.mxu0 0
        %2146 = vmatpush1.bf16.msra.mxu0 0
        %2147 = vmatprep.subr.bf16.mxu0 0
        %2148 = vmatpush1.bf16.msra.mxu0 0
        %2149 = vmatprep.subr.bf16.mxu0 0
        %2150 = vmatpush1.bf16.msra.mxu0 0
        %2151 = vmatprep.subr.bf16.mxu0 0
        %2152 = vmatpush1.bf16.msra.mxu0 0
        %2153 = vmatprep.subr.bf16.mxu0 0
        %2154 = vmatpush1.bf16.msra.mxu0 0
        %2155 = vmatprep.mubr.bf16.mxu0 0
        %2156 = vmatmul.mubr.bf16.gmra.mrb[0].mxu0 %v613
        %v2157 = vpop.f32.mrb[0].mxu0
        %v2158 = vadd.f32 0.0, %v2157
        %v2159 = vpop.f32.mrb[0].mxu0
        %v2160 = vpop.f32.mrb[0].mxu0
        %v2161 = vpop.f32.mrb[0].mxu0
        %2162 = vdwg.mxu0
        %2164 = vrot.lane.b32.xlu0 %v2057, 96
        %v2165 = vpop.permute.xlu0 %2164
        %v2167 = vsel %vm568, %v2165, 0
        %2169 = vmatprep.subr.bf16.mxu0 0
        %2170 = vmatpush1.bf16.msra.mxu0 %v2167
        %2171 = vmatprep.subr.bf16.mxu0 0
        %2172 = vmatpush1.bf16.msra.mxu0 0
        %2173 = vmatprep.subr.bf16.mxu0 0
        %2174 = vmatpush1.bf16.msra.mxu0 0
        %2175 = vmatprep.subr.bf16.mxu0 0
        %2176 = vmatpush1.bf16.msra.mxu0 0
        %2177 = vmatprep.subr.bf16.mxu0 0
        %2178 = vmatpush1.bf16.msra.mxu0 0
        %2179 = vmatprep.subr.bf16.mxu0 0
        %2180 = vmatpush1.bf16.msra.mxu0 0
        %2181 = vmatprep.subr.bf16.mxu0 0
        %2182 = vmatpush1.bf16.msra.mxu0 0
        %2183 = vmatprep.subr.bf16.mxu0 0
        %2184 = vmatpush1.bf16.msra.mxu0 0
        %2185 = vmatprep.subr.bf16.mxu0 0
        %2186 = vmatpush1.bf16.msra.mxu0 0
        %2187 = vmatprep.subr.bf16.mxu0 0
        %2188 = vmatpush1.bf16.msra.mxu0 0
        %2189 = vmatprep.subr.bf16.mxu0 0
        %2190 = vmatpush1.bf16.msra.mxu0 0
        %2191 = vmatprep.subr.bf16.mxu0 0
        %2192 = vmatpush1.bf16.msra.mxu0 0
        %2193 = vmatprep.subr.bf16.mxu0 0
        %2194 = vmatpush1.bf16.msra.mxu0 0
        %2195 = vmatprep.subr.bf16.mxu0 0
        %2196 = vmatpush1.bf16.msra.mxu0 0
        %2197 = vmatprep.subr.bf16.mxu0 0
        %2198 = vmatpush1.bf16.msra.mxu0 0
        %2199 = vmatprep.subr.bf16.mxu0 0
        %2200 = vmatpush1.bf16.msra.mxu0 0
        %2201 = vmatprep.mubr.bf16.mxu0 0
        %2202 = vmatmul.mubr.bf16.gmra.mrb[0].mxu0 %v659
        %v2203 = vpop.f32.mrb[0].mxu0
        %v2204 = vadd.f32 0.0, %v2203
        %v2205 = vpop.f32.mrb[0].mxu0
        %v2206 = vpop.f32.mrb[0].mxu0
        %v2207 = vpop.f32.mrb[0].mxu0
        %2208 = vdwg.mxu0
        %2210 = vrot.lane.b32.xlu0 %v2058, 96
        %v2211 = vpop.permute.xlu0 %2210
        %v2213 = vsel %vm568, %v2211, 0
        %2215 = vmatprep.subr.bf16.mxu0 0
        %2216 = vmatpush1.bf16.msra.mxu0 %v2213
        %2217 = vmatprep.subr.bf16.mxu0 0
        %2218 = vmatpush1.bf16.msra.mxu0 0
        %2219 = vmatprep.subr.bf16.mxu0 0
        %2220 = vmatpush1.bf16.msra.mxu0 0
        %2221 = vmatprep.subr.bf16.mxu0 0
        %2222 = vmatpush1.bf16.msra.mxu0 0
        %2223 = vmatprep.subr.bf16.mxu0 0
        %2224 = vmatpush1.bf16.msra.mxu0 0
        %2225 = vmatprep.subr.bf16.mxu0 0
        %2226 = vmatpush1.bf16.msra.mxu0 0
        %2227 = vmatprep.subr.bf16.mxu0 0
        %2228 = vmatpush1.bf16.msra.mxu0 0
        %2229 = vmatprep.subr.bf16.mxu0 0
        %2230 = vmatpush1.bf16.msra.mxu0 0
        %2231 = vmatprep.subr.bf16.mxu0 0
        %2232 = vmatpush1.bf16.msra.mxu0 0
        %2233 = vmatprep.subr.bf16.mxu0 0
        %2234 = vmatpush1.bf16.msra.mxu0 0
        %2235 = vmatprep.subr.bf16.mxu0 0
        %2236 = vmatpush1.bf16.msra.mxu0 0
        %2237 = vmatprep.subr.bf16.mxu0 0
        %2238 = vmatpush1.bf16.msra.mxu0 0
        %2239 = vmatprep.subr.bf16.mxu0 0
        %2240 = vmatpush1.bf16.msra.mxu0 0
        %2241 = vmatprep.subr.bf16.mxu0 0
        %2242 = vmatpush1.bf16.msra.mxu0 0
        %2243 = vmatprep.subr.bf16.mxu0 0
        %2244 = vmatpush1.bf16.msra.mxu0 0
        %2245 = vmatprep.subr.bf16.mxu0 0
        %2246 = vmatpush1.bf16.msra.mxu0 0
        %2247 = vmatprep.mubr.bf16.mxu0 0
        %2248 = vmatmul.mubr.bf16.gmra.mrb[0].mxu0 %v705
        %v2249 = vpop.f32.mrb[0].mxu0
        %v2250 = vadd.f32 0.0, %v2249
        %v2251 = vpop.f32.mrb[0].mxu0
        %v2252 = vpop.f32.mrb[0].mxu0
        %v2253 = vpop.f32.mrb[0].mxu0
        %2254 = vdwg.mxu0
        %2256 = vrot.lane.b32.xlu0 %v2059, 96
        %v2257 = vpop.permute.xlu0 %2256
        %v2259 = vsel %vm568, %v2257, 0
        %2261 = vmatprep.subr.bf16.mxu0 0
        %2262 = vmatpush1.bf16.msra.mxu0 %v2259
        %2263 = vmatprep.subr.bf16.mxu0 0
        %2264 = vmatpush1.bf16.msra.mxu0 0
        %2265 = vmatprep.subr.bf16.mxu0 0
        %2266 = vmatpush1.bf16.msra.mxu0 0
        %2267 = vmatprep.subr.bf16.mxu0 0
        %2268 = vmatpush1.bf16.msra.mxu0 0
        %2269 = vmatprep.subr.bf16.mxu0 0
        %2270 = vmatpush1.bf16.msra.mxu0 0
        %2271 = vmatprep.subr.bf16.mxu0 0
        %2272 = vmatpush1.bf16.msra.mxu0 0
        %2273 = vmatprep.subr.bf16.mxu0 0
        %2274 = vmatpush1.bf16.msra.mxu0 0
        %2275 = vmatprep.subr.bf16.mxu0 0
        %2276 = vmatpush1.bf16.msra.mxu0 0
        %2277 = vmatprep.subr.bf16.mxu0 0
        %2278 = vmatpush1.bf16.msra.mxu0 0
        %2279 = vmatprep.subr.bf16.mxu0 0
        %2280 = vmatpush1.bf16.msra.mxu0 0
        %2281 = vmatprep.subr.bf16.mxu0 0
        %2282 = vmatpush1.bf16.msra.mxu0 0
        %2283 = vmatprep.subr.bf16.mxu0 0
        %2284 = vmatpush1.bf16.msra.mxu0 0
        %2285 = vmatprep.subr.bf16.mxu0 0
        %2286 = vmatpush1.bf16.msra.mxu0 0
        %2287 = vmatprep.subr.bf16.mxu0 0
        %2288 = vmatpush1.bf16.msra.mxu0 0
        %2289 = vmatprep.subr.bf16.mxu0 0
        %2290 = vmatpush1.bf16.msra.mxu0 0
        %2291 = vmatprep.subr.bf16.mxu0 0
        %2292 = vmatpush1.bf16.msra.mxu0 0
        %2293 = vmatprep.mubr.bf16.mxu0 0
        %2294 = vmatmul.mubr.bf16.gmra.mrb[0].mxu0 %v751
        %v2295 = vpop.f32.mrb[0].mxu0
        %v2296 = vadd.f32 0.0, %v2295
        %v2297 = vpop.f32.mrb[0].mxu0
        %v2298 = vpop.f32.mrb[0].mxu0
        %v2299 = vpop.f32.mrb[0].mxu0
        %2300 = vdwg.mxu0
        %2302 = vrot.lane.b32.xlu0 %v2060, 96
        %v2303 = vpop.permute.xlu0 %2302
        %v2305 = vsel %vm568, %v2303, 0
        %2307 = vmatprep.subr.bf16.mxu0 0
        %2308 = vmatpush1.bf16.msra.mxu0 %v2305
        %2309 = vmatprep.subr.bf16.mxu0 0
        %2310 = vmatpush1.bf16.msra.mxu0 0
        %2311 = vmatprep.subr.bf16.mxu0 0
        %2312 = vmatpush1.bf16.msra.mxu0 0
        %2313 = vmatprep.subr.bf16.mxu0 0
        %2314 = vmatpush1.bf16.msra.mxu0 0
        %2315 = vmatprep.subr.bf16.mxu0 0
        %2316 = vmatpush1.bf16.msra.mxu0 0
        %2317 = vmatprep.subr.bf16.mxu0 0
        %2318 = vmatpush1.bf16.msra.mxu0 0
        %2319 = vmatprep.subr.bf16.mxu0 0
        %2320 = vmatpush1.bf16.msra.mxu0 0
        %2321 = vmatprep.subr.bf16.mxu0 0
        %2322 = vmatpush1.bf16.msra.mxu0 0
        %2323 = vmatprep.subr.bf16.mxu0 0
        %2324 = vmatpush1.bf16.msra.mxu0 0
        %2325 = vmatprep.subr.bf16.mxu0 0
        %2326 = vmatpush1.bf16.msra.mxu0 0
        %2327 = vmatprep.subr.bf16.mxu0 0
        %2328 = vmatpush1.bf16.msra.mxu0 0
        %2329 = vmatprep.subr.bf16.mxu0 0
        %2330 = vmatpush1.bf16.msra.mxu0 0
        %2331 = vmatprep.subr.bf16.mxu0 0
        %2332 = vmatpush1.bf16.msra.mxu0 0
        %2333 = vmatprep.subr.bf16.mxu0 0
        %2334 = vmatpush1.bf16.msra.mxu0 0
        %2335 = vmatprep.subr.bf16.mxu0 0
        %2336 = vmatpush1.bf16.msra.mxu0 0
        %2337 = vmatprep.subr.bf16.mxu0 0
        %2338 = vmatpush1.bf16.msra.mxu0 0
        %2339 = vmatprep.mubr.bf16.mxu0 0
        %2340 = vmatmul.mubr.bf16.gmra.mrb[0].mxu0 %v797
        %v2341 = vpop.f32.mrb[0].mxu0
        %v2342 = vadd.f32 0.0, %v2341
        %v2343 = vpop.f32.mrb[0].mxu0
        %v2344 = vpop.f32.mrb[0].mxu0
        %v2345 = vpop.f32.mrb[0].mxu0
        %2346 = vdwg.mxu0
        %2348 = vrot.lane.b32.xlu0 %v2061, 96
        %v2349 = vpop.permute.xlu0 %2348
        %v2351 = vsel %vm568, %v2349, 0
        %2353 = vmatprep.subr.bf16.mxu0 0
        %2354 = vmatpush1.bf16.msra.mxu0 %v2351
        %2355 = vmatprep.subr.bf16.mxu0 0
        %2356 = vmatpush1.bf16.msra.mxu0 0
        %2357 = vmatprep.subr.bf16.mxu0 0
        %2358 = vmatpush1.bf16.msra.mxu0 0
        %2359 = vmatprep.subr.bf16.mxu0 0
        %2360 = vmatpush1.bf16.msra.mxu0 0
        %2361 = vmatprep.subr.bf16.mxu0 0
        %2362 = vmatpush1.bf16.msra.mxu0 0
        %2363 = vmatprep.subr.bf16.mxu0 0
        %2364 = vmatpush1.bf16.msra.mxu0 0
        %2365 = vmatprep.subr.bf16.mxu0 0
        %2366 = vmatpush1.bf16.msra.mxu0 0
        %2367 = vmatprep.subr.bf16.mxu0 0
        %2368 = vmatpush1.bf16.msra.mxu0 0
        %2369 = vmatprep.subr.bf16.mxu0 0
        %2370 = vmatpush1.bf16.msra.mxu0 0
        %2371 = vmatprep.subr.bf16.mxu0 0
        %2372 = vmatpush1.bf16.msra.mxu0 0
        %2373 = vmatprep.subr.bf16.mxu0 0
        %2374 = vmatpush1.bf16.msra.mxu0 0
        %2375 = vmatprep.subr.bf16.mxu0 0
        %2376 = vmatpush1.bf16.msra.mxu0 0
        %2377 = vmatprep.subr.bf16.mxu0 0
        %2378 = vmatpush1.bf16.msra.mxu0 0
        %2379 = vmatprep.subr.bf16.mxu0 0
        %2380 = vmatpush1.bf16.msra.mxu0 0
        %2381 = vmatprep.subr.bf16.mxu0 0
        %2382 = vmatpush1.bf16.msra.mxu0 0
        %2383 = vmatprep.subr.bf16.mxu0 0
        %2384 = vmatpush1.bf16.msra.mxu0 0
        %2385 = vmatprep.mubr.bf16.mxu0 0
        %2386 = vmatmul.mubr.bf16.gmra.mrb[0].mxu0 %v843
        %v2387 = vpop.f32.mrb[0].mxu0
        %v2388 = vadd.f32 0.0, %v2387
        %v2389 = vpop.f32.mrb[0].mxu0
        %v2390 = vpop.f32.mrb[0].mxu0
        %v2391 = vpop.f32.mrb[0].mxu0
        %2392 = vdwg.mxu0
        %2394 = vrot.lane.b32.xlu0 %v2062, 96
        %v2395 = vpop.permute.xlu0 %2394
        %v2397 = vsel %vm568, %v2395, 0
        %2399 = vmatprep.subr.bf16.mxu0 0
        %2400 = vmatpush1.bf16.msra.mxu0 %v2397
        %2401 = vmatprep.subr.bf16.mxu0 0
        %2402 = vmatpush1.bf16.msra.mxu0 0
        %2403 = vmatprep.subr.bf16.mxu0 0
        %2404 = vmatpush1.bf16.msra.mxu0 0
        %2405 = vmatprep.subr.bf16.mxu0 0
        %2406 = vmatpush1.bf16.msra.mxu0 0
        %2407 = vmatprep.subr.bf16.mxu0 0
        %2408 = vmatpush1.bf16.msra.mxu0 0
        %2409 = vmatprep.subr.bf16.mxu0 0
        %2410 = vmatpush1.bf16.msra.mxu0 0
        %2411 = vmatprep.subr.bf16.mxu0 0
        %2412 = vmatpush1.bf16.msra.mxu0 0
        %2413 = vmatprep.subr.bf16.mxu0 0
        %2414 = vmatpush1.bf16.msra.mxu0 0
        %2415 = vmatprep.subr.bf16.mxu0 0
        %2416 = vmatpush1.bf16.msra.mxu0 0
        %2417 = vmatprep.subr.bf16.mxu0 0
        %2418 = vmatpush1.bf16.msra.mxu0 0
        %2419 = vmatprep.subr.bf16.mxu0 0
        %2420 = vmatpush1.bf16.msra.mxu0 0
        %2421 = vmatprep.subr.bf16.mxu0 0
        %2422 = vmatpush1.bf16.msra.mxu0 0
        %2423 = vmatprep.subr.bf16.mxu0 0
        %2424 = vmatpush1.bf16.msra.mxu0 0
        %2425 = vmatprep.subr.bf16.mxu0 0
        %2426 = vmatpush1.bf16.msra.mxu0 0
        %2427 = vmatprep.subr.bf16.mxu0 0
        %2428 = vmatpush1.bf16.msra.mxu0 0
        %2429 = vmatprep.subr.bf16.mxu0 0
        %2430 = vmatpush1.bf16.msra.mxu0 0
        %2431 = vmatprep.mubr.bf16.mxu0 0
        %2432 = vmatmul.mubr.bf16.gmra.mrb[0].mxu0 %v889
        %v2433 = vpop.f32.mrb[0].mxu0
        %v2434 = vadd.f32 0.0, %v2433
        %v2435 = vpop.f32.mrb[0].mxu0
        %v2436 = vpop.f32.mrb[0].mxu0
        %v2437 = vpop.f32.mrb[0].mxu0
        %2438 = vdwg.mxu0
        %2440 = vrot.lane.b32.xlu0 %v2063, 96
        %v2441 = vpop.permute.xlu0 %2440
        %v2443 = vsel %vm568, %v2441, 0
        %2445 = vmatprep.subr.bf16.mxu0 0
        %2446 = vmatpush1.bf16.msra.mxu0 %v2443
        %2447 = vmatprep.subr.bf16.mxu0 0
        %2448 = vmatpush1.bf16.msra.mxu0 0
        %2449 = vmatprep.subr.bf16.mxu0 0
        %2450 = vmatpush1.bf16.msra.mxu0 0
        %2451 = vmatprep.subr.bf16.mxu0 0
        %2452 = vmatpush1.bf16.msra.mxu0 0
        %2453 = vmatprep.subr.bf16.mxu0 0
        %2454 = vmatpush1.bf16.msra.mxu0 0
        %2455 = vmatprep.subr.bf16.mxu0 0
        %2456 = vmatpush1.bf16.msra.mxu0 0
        %2457 = vmatprep.subr.bf16.mxu0 0
        %2458 = vmatpush1.bf16.msra.mxu0 0
        %2459 = vmatprep.subr.bf16.mxu0 0
        %2460 = vmatpush1.bf16.msra.mxu0 0
        %2461 = vmatprep.subr.bf16.mxu0 0
        %2462 = vmatpush1.bf16.msra.mxu0 0
        %2463 = vmatprep.subr.bf16.mxu0 0
        %2464 = vmatpush1.bf16.msra.mxu0 0
        %2465 = vmatprep.subr.bf16.mxu0 0
        %2466 = vmatpush1.bf16.msra.mxu0 0
        %2467 = vmatprep.subr.bf16.mxu0 0
        %2468 = vmatpush1.bf16.msra.mxu0 0
        %2469 = vmatprep.subr.bf16.mxu0 0
        %2470 = vmatpush1.bf16.msra.mxu0 0
        %2471 = vmatprep.subr.bf16.mxu0 0
        %2472 = vmatpush1.bf16.msra.mxu0 0
        %2473 = vmatprep.subr.bf16.mxu0 0
        %2474 = vmatpush1.bf16.msra.mxu0 0
        %2475 = vmatprep.subr.bf16.mxu0 0
        %2476 = vmatpush1.bf16.msra.mxu0 0
        %2477 = vmatprep.mubr.bf16.mxu0 0
        %2478 = vmatmul.mubr.bf16.gmra.mrb[0].mxu0 %v935
        %v2479 = vpop.f32.mrb[0].mxu0
        %v2480 = vadd.f32 0.0, %v2479
        %v2481 = vpop.f32.mrb[0].mxu0
        %v2482 = vpop.f32.mrb[0].mxu0
        %v2483 = vpop.f32.mrb[0].mxu0
        %2484 = vdwg.mxu0
        %2486 = vrot.lane.b32.xlu0 %v2064, 96
        %v2487 = vpop.permute.xlu0 %2486
        %v2489 = vsel %vm568, %v2487, 0
        %2491 = vmatprep.subr.bf16.mxu0 0
        %2492 = vmatpush1.bf16.msra.mxu0 %v2489
        %2493 = vmatprep.subr.bf16.mxu0 0
        %2494 = vmatpush1.bf16.msra.mxu0 0
        %2495 = vmatprep.subr.bf16.mxu0 0
        %2496 = vmatpush1.bf16.msra.mxu0 0
        %2497 = vmatprep.subr.bf16.mxu0 0
        %2498 = vmatpush1.bf16.msra.mxu0 0
        %2499 = vmatprep.subr.bf16.mxu0 0
        %2500 = vmatpush1.bf16.msra.mxu0 0
        %2501 = vmatprep.subr.bf16.mxu0 0
        %2502 = vmatpush1.bf16.msra.mxu0 0
        %2503 = vmatprep.subr.bf16.mxu0 0
        %2504 = vmatpush1.bf16.msra.mxu0 0
        %2505 = vmatprep.subr.bf16.mxu0 0
        %2506 = vmatpush1.bf16.msra.mxu0 0
        %2507 = vmatprep.subr.bf16.mxu0 0
        %2508 = vmatpush1.bf16.msra.mxu0 0
        %2509 = vmatprep.subr.bf16.mxu0 0
        %2510 = vmatpush1.bf16.msra.mxu0 0
        %2511 = vmatprep.subr.bf16.mxu0 0
        %2512 = vmatpush1.bf16.msra.mxu0 0
        %2513 = vmatprep.subr.bf16.mxu0 0
        %2514 = vmatpush1.bf16.msra.mxu0 0
        %2515 = vmatprep.subr.bf16.mxu0 0
        %2516 = vmatpush1.bf16.msra.mxu0 0
        %2517 = vmatprep.subr.bf16.mxu0 0
        %2518 = vmatpush1.bf16.msra.mxu0 0
        %2519 = vmatprep.subr.bf16.mxu0 0
        %2520 = vmatpush1.bf16.msra.mxu0 0
        %2521 = vmatprep.subr.bf16.mxu0 0
        %2522 = vmatpush1.bf16.msra.mxu0 0
        %2523 = vmatprep.mubr.bf16.mxu0 0
        %2524 = vmatmul.mubr.bf16.gmra.mrb[0].mxu0 %v981
        %v2525 = vpop.f32.mrb[0].mxu0
        %v2526 = vadd.f32 0.0, %v2525
        %v2527 = vpop.f32.mrb[0].mxu0
        %v2528 = vpop.f32.mrb[0].mxu0
        %v2529 = vpop.f32.mrb[0].mxu0
        %2530 = vdwg.mxu0
        %2532 = vrot.lane.b32.xlu0 %v2065, 96
        %v2533 = vpop.permute.xlu0 %2532
        %v2535 = vsel %vm568, %v2533, 0
        %2537 = vmatprep.subr.bf16.mxu0 0
        %2538 = vmatpush1.bf16.msra.mxu0 %v2535
        %2539 = vmatprep.subr.bf16.mxu0 0
        %2540 = vmatpush1.bf16.msra.mxu0 0
        %2541 = vmatprep.subr.bf16.mxu0 0
        %2542 = vmatpush1.bf16.msra.mxu0 0
        %2543 = vmatprep.subr.bf16.mxu0 0
        %2544 = vmatpush1.bf16.msra.mxu0 0
        %2545 = vmatprep.subr.bf16.mxu0 0
        %2546 = vmatpush1.bf16.msra.mxu0 0
        %2547 = vmatprep.subr.bf16.mxu0 0
        %2548 = vmatpush1.bf16.msra.mxu0 0
        %2549 = vmatprep.subr.bf16.mxu0 0
        %2550 = vmatpush1.bf16.msra.mxu0 0
        %2551 = vmatprep.subr.bf16.mxu0 0
        %2552 = vmatpush1.bf16.msra.mxu0 0
        %2553 = vmatprep.subr.bf16.mxu0 0
        %2554 = vmatpush1.bf16.msra.mxu0 0
        %2555 = vmatprep.subr.bf16.mxu0 0
        %2556 = vmatpush1.bf16.msra.mxu0 0
        %2557 = vmatprep.subr.bf16.mxu0 0
        %2558 = vmatpush1.bf16.msra.mxu0 0
        %2559 = vmatprep.subr.bf16.mxu0 0
        %2560 = vmatpush1.bf16.msra.mxu0 0
        %2561 = vmatprep.subr.bf16.mxu0 0
        %2562 = vmatpush1.bf16.msra.mxu0 0
        %2563 = vmatprep.subr.bf16.mxu0 0
        %2564 = vmatpush1.bf16.msra.mxu0 0
        %2565 = vmatprep.subr.bf16.mxu0 0
        %2566 = vmatpush1.bf16.msra.mxu0 0
        %2567 = vmatprep.subr.bf16.mxu0 0
        %2568 = vmatpush1.bf16.msra.mxu0 0
        %2569 = vmatprep.mubr.bf16.mxu0 0
        %2570 = vmatmul.mubr.bf16.gmra.mrb[0].mxu0 %v1027
        %v2571 = vpop.f32.mrb[0].mxu0
        %v2572 = vadd.f32 0.0, %v2571
        %v2573 = vpop.f32.mrb[0].mxu0
        %v2574 = vpop.f32.mrb[0].mxu0
        %v2575 = vpop.f32.mrb[0].mxu0
        %2576 = vdwg.mxu0
        %2578 = vrot.lane.b32.xlu0 %v2066, 96
        %v2579 = vpop.permute.xlu0 %2578
        %v2581 = vsel %vm568, %v2579, 0
        %2583 = vmatprep.subr.bf16.mxu0 0
        %2584 = vmatpush1.bf16.msra.mxu0 %v2581
        %2585 = vmatprep.subr.bf16.mxu0 0
        %2586 = vmatpush1.bf16.msra.mxu0 0
        %2587 = vmatprep.subr.bf16.mxu0 0
        %2588 = vmatpush1.bf16.msra.mxu0 0
        %2589 = vmatprep.subr.bf16.mxu0 0
        %2590 = vmatpush1.bf16.msra.mxu0 0
        %2591 = vmatprep.subr.bf16.mxu0 0
        %2592 = vmatpush1.bf16.msra.mxu0 0
        %2593 = vmatprep.subr.bf16.mxu0 0
        %2594 = vmatpush1.bf16.msra.mxu0 0
        %2595 = vmatprep.subr.bf16.mxu0 0
        %2596 = vmatpush1.bf16.msra.mxu0 0
        %2597 = vmatprep.subr.bf16.mxu0 0
        %2598 = vmatpush1.bf16.msra.mxu0 0
        %2599 = vmatprep.subr.bf16.mxu0 0
        %2600 = vmatpush1.bf16.msra.mxu0 0
        %2601 = vmatprep.subr.bf16.mxu0 0
        %2602 = vmatpush1.bf16.msra.mxu0 0
        %2603 = vmatprep.subr.bf16.mxu0 0
        %2604 = vmatpush1.bf16.msra.mxu0 0
        %2605 = vmatprep.subr.bf16.mxu0 0
        %2606 = vmatpush1.bf16.msra.mxu0 0
        %2607 = vmatprep.subr.bf16.mxu0 0
        %2608 = vmatpush1.bf16.msra.mxu0 0
        %2609 = vmatprep.subr.bf16.mxu0 0
        %2610 = vmatpush1.bf16.msra.mxu0 0
        %2611 = vmatprep.subr.bf16.mxu0 0
        %2612 = vmatpush1.bf16.msra.mxu0 0
        %2613 = vmatprep.subr.bf16.mxu0 0
        %2614 = vmatpush1.bf16.msra.mxu0 0
        %2615 = vmatprep.mubr.bf16.mxu0 0
        %2616 = vmatmul.mubr.bf16.gmra.mrb[0].mxu0 %v1073
        %v2617 = vpop.f32.mrb[0].mxu0
        %v2618 = vadd.f32 0.0, %v2617
        %v2619 = vpop.f32.mrb[0].mxu0
        %v2620 = vpop.f32.mrb[0].mxu0
        %v2621 = vpop.f32.mrb[0].mxu0
        %2622 = vdwg.mxu0
        %2624 = vrot.lane.b32.xlu0 %v2067, 96
        %v2625 = vpop.permute.xlu0 %2624
        %v2627 = vsel %vm568, %v2625, 0
        %2629 = vmatprep.subr.bf16.mxu0 0
        %2630 = vmatpush1.bf16.msra.mxu0 %v2627
        %2631 = vmatprep.subr.bf16.mxu0 0
        %2632 = vmatpush1.bf16.msra.mxu0 0
        %2633 = vmatprep.subr.bf16.mxu0 0
        %2634 = vmatpush1.bf16.msra.mxu0 0
        %2635 = vmatprep.subr.bf16.mxu0 0
        %2636 = vmatpush1.bf16.msra.mxu0 0
        %2637 = vmatprep.subr.bf16.mxu0 0
        %2638 = vmatpush1.bf16.msra.mxu0 0
        %2639 = vmatprep.subr.bf16.mxu0 0
        %2640 = vmatpush1.bf16.msra.mxu0 0
        %2641 = vmatprep.subr.bf16.mxu0 0
        %2642 = vmatpush1.bf16.msra.mxu0 0
        %2643 = vmatprep.subr.bf16.mxu0 0
        %2644 = vmatpush1.bf16.msra.mxu0 0
        %2645 = vmatprep.subr.bf16.mxu0 0
        %2646 = vmatpush1.bf16.msra.mxu0 0
        %2647 = vmatprep.subr.bf16.mxu0 0
        %2648 = vmatpush1.bf16.msra.mxu0 0
        %2649 = vmatprep.subr.bf16.mxu0 0
        %2650 = vmatpush1.bf16.msra.mxu0 0
        %2651 = vmatprep.subr.bf16.mxu0 0
        %2652 = vmatpush1.bf16.msra.mxu0 0
        %2653 = vmatprep.subr.bf16.mxu0 0
        %2654 = vmatpush1.bf16.msra.mxu0 0
        %2655 = vmatprep.subr.bf16.mxu0 0
        %2656 = vmatpush1.bf16.msra.mxu0 0
        %2657 = vmatprep.subr.bf16.mxu0 0
        %2658 = vmatpush1.bf16.msra.mxu0 0
        %2659 = vmatprep.subr.bf16.mxu0 0
        %2660 = vmatpush1.bf16.msra.mxu0 0
        %2661 = vmatprep.mubr.bf16.mxu0 0
        %2662 = vmatmul.mubr.bf16.gmra.mrb[0].mxu0 %v1119
        %v2663 = vpop.f32.mrb[0].mxu0
        %v2664 = vadd.f32 0.0, %v2663
        %v2665 = vpop.f32.mrb[0].mxu0
        %v2666 = vpop.f32.mrb[0].mxu0
        %v2667 = vpop.f32.mrb[0].mxu0
        %2668 = vdwg.mxu0
        %2670 = vrot.lane.b32.xlu0 %v2068, 96
        %v2671 = vpop.permute.xlu0 %2670
        %v2673 = vsel %vm568, %v2671, 0
        %2675 = vmatprep.subr.bf16.mxu0 0
        %2676 = vmatpush1.bf16.msra.mxu0 %v2673
        %2677 = vmatprep.subr.bf16.mxu0 0
        %2678 = vmatpush1.bf16.msra.mxu0 0
        %2679 = vmatprep.subr.bf16.mxu0 0
        %2680 = vmatpush1.bf16.msra.mxu0 0
        %2681 = vmatprep.subr.bf16.mxu0 0
        %2682 = vmatpush1.bf16.msra.mxu0 0
        %2683 = vmatprep.subr.bf16.mxu0 0
        %2684 = vmatpush1.bf16.msra.mxu0 0
        %2685 = vmatprep.subr.bf16.mxu0 0
        %2686 = vmatpush1.bf16.msra.mxu0 0
        %2687 = vmatprep.subr.bf16.mxu0 0
        %2688 = vmatpush1.bf16.msra.mxu0 0
        %2689 = vmatprep.subr.bf16.mxu0 0
        %2690 = vmatpush1.bf16.msra.mxu0 0
        %2691 = vmatprep.subr.bf16.mxu0 0
        %2692 = vmatpush1.bf16.msra.mxu0 0
        %2693 = vmatprep.subr.bf16.mxu0 0
        %2694 = vmatpush1.bf16.msra.mxu0 0
        %2695 = vmatprep.subr.bf16.mxu0 0
        %2696 = vmatpush1.bf16.msra.mxu0 0
        %2697 = vmatprep.subr.bf16.mxu0 0
        %2698 = vmatpush1.bf16.msra.mxu0 0
        %2699 = vmatprep.subr.bf16.mxu0 0
        %2700 = vmatpush1.bf16.msra.mxu0 0
        %2701 = vmatprep.subr.bf16.mxu0 0
        %2702 = vmatpush1.bf16.msra.mxu0 0
        %2703 = vmatprep.subr.bf16.mxu0 0
        %2704 = vmatpush1.bf16.msra.mxu0 0
        %2705 = vmatprep.subr.bf16.mxu0 0
        %2706 = vmatpush1.bf16.msra.mxu0 0
        %2707 = vmatprep.mubr.bf16.mxu0 0
        %2708 = vmatmul.mubr.bf16.gmra.mrb[0].mxu0 %v1165
        %v2709 = vpop.f32.mrb[0].mxu0
        %v2710 = vadd.f32 0.0, %v2709
        %v2711 = vpop.f32.mrb[0].mxu0
        %v2712 = vpop.f32.mrb[0].mxu0
        %v2713 = vpop.f32.mrb[0].mxu0
        %2714 = vdwg.mxu0
        %2716 = vrot.lane.b32.xlu0 %v2069, 96
        %v2717 = vpop.permute.xlu0 %2716
        %v2719 = vsel %vm568, %v2717, 0
        %2721 = vmatprep.subr.bf16.mxu0 0
        %2722 = vmatpush1.bf16.msra.mxu0 %v2719
        %2723 = vmatprep.subr.bf16.mxu0 0
        %2724 = vmatpush1.bf16.msra.mxu0 0
        %2725 = vmatprep.subr.bf16.mxu0 0
        %2726 = vmatpush1.bf16.msra.mxu0 0
        %2727 = vmatprep.subr.bf16.mxu0 0
        %2728 = vmatpush1.bf16.msra.mxu0 0
        %2729 = vmatprep.subr.bf16.mxu0 0
        %2730 = vmatpush1.bf16.msra.mxu0 0
        %2731 = vmatprep.subr.bf16.mxu0 0
        %2732 = vmatpush1.bf16.msra.mxu0 0
        %2733 = vmatprep.subr.bf16.mxu0 0
        %2734 = vmatpush1.bf16.msra.mxu0 0
        %2735 = vmatprep.subr.bf16.mxu0 0
        %2736 = vmatpush1.bf16.msra.mxu0 0
        %2737 = vmatprep.subr.bf16.mxu0 0
        %2738 = vmatpush1.bf16.msra.mxu0 0
        %2739 = vmatprep.subr.bf16.mxu0 0
        %2740 = vmatpush1.bf16.msra.mxu0 0
        %2741 = vmatprep.subr.bf16.mxu0 0
        %2742 = vmatpush1.bf16.msra.mxu0 0
        %2743 = vmatprep.subr.bf16.mxu0 0
        %2744 = vmatpush1.bf16.msra.mxu0 0
        %2745 = vmatprep.subr.bf16.mxu0 0
        %2746 = vmatpush1.bf16.msra.mxu0 0
        %2747 = vmatprep.subr.bf16.mxu0 0
        %2748 = vmatpush1.bf16.msra.mxu0 0
        %2749 = vmatprep.subr.bf16.mxu0 0
        %2750 = vmatpush1.bf16.msra.mxu0 0
        %2751 = vmatprep.subr.bf16.mxu0 0
        %2752 = vmatpush1.bf16.msra.mxu0 0
        %2753 = vmatprep.mubr.bf16.mxu0 0
        %2754 = vmatmul.mubr.bf16.gmra.mrb[0].mxu0 %v1211
        %v2755 = vpop.f32.mrb[0].mxu0
        %v2756 = vadd.f32 0.0, %v2755
        %v2757 = vpop.f32.mrb[0].mxu0
        %v2758 = vpop.f32.mrb[0].mxu0
        %v2759 = vpop.f32.mrb[0].mxu0
        %2760 = vdwg.mxu0
        %2762 = vrot.lane.b32.xlu0 %v2070, 96
        %v2763 = vpop.permute.xlu0 %2762
        %v2765 = vsel %vm568, %v2763, 0
        %2767 = vmatprep.subr.bf16.mxu0 0
        %2768 = vmatpush1.bf16.msra.mxu0 %v2765
        %2769 = vmatprep.subr.bf16.mxu0 0
        %2770 = vmatpush1.bf16.msra.mxu0 0
        %2771 = vmatprep.subr.bf16.mxu0 0
        %2772 = vmatpush1.bf16.msra.mxu0 0
        %2773 = vmatprep.subr.bf16.mxu0 0
        %2774 = vmatpush1.bf16.msra.mxu0 0
        %2775 = vmatprep.subr.bf16.mxu0 0
        %2776 = vmatpush1.bf16.msra.mxu0 0
        %2777 = vmatprep.subr.bf16.mxu0 0
        %2778 = vmatpush1.bf16.msra.mxu0 0
        %2779 = vmatprep.subr.bf16.mxu0 0
        %2780 = vmatpush1.bf16.msra.mxu0 0
        %2781 = vmatprep.subr.bf16.mxu0 0
        %2782 = vmatpush1.bf16.msra.mxu0 0
        %2783 = vmatprep.subr.bf16.mxu0 0
        %2784 = vmatpush1.bf16.msra.mxu0 0
        %2785 = vmatprep.subr.bf16.mxu0 0
        %2786 = vmatpush1.bf16.msra.mxu0 0
        %2787 = vmatprep.subr.bf16.mxu0 0
        %2788 = vmatpush1.bf16.msra.mxu0 0
        %2789 = vmatprep.subr.bf16.mxu0 0
        %2790 = vmatpush1.bf16.msra.mxu0 0
        %2791 = vmatprep.subr.bf16.mxu0 0
        %2792 = vmatpush1.bf16.msra.mxu0 0
        %2793 = vmatprep.subr.bf16.mxu0 0
        %2794 = vmatpush1.bf16.msra.mxu0 0
        %2795 = vmatprep.subr.bf16.mxu0 0
        %2796 = vmatpush1.bf16.msra.mxu0 0
        %2797 = vmatprep.subr.bf16.mxu0 0
        %2798 = vmatpush1.bf16.msra.mxu0 0
        %2799 = vmatprep.mubr.bf16.mxu0 0
        %2800 = vmatmul.mubr.bf16.gmra.mrb[0].mxu0 %v1257
        %v2801 = vpop.f32.mrb[0].mxu0
        %v2802 = vadd.f32 0.0, %v2801
        %v2803 = vpop.f32.mrb[0].mxu0
        %v2804 = vpop.f32.mrb[0].mxu0
        %v2805 = vpop.f32.mrb[0].mxu0
        %2806 = vdwg.mxu0
        %v2807 = vpack.c.bf16 %v2158, %v2112
        %v2808 = vpack.c.bf16 %v2250, %v2204
        %v2809 = vpack.c.bf16 %v2342, %v2296
        %v2810 = vpack.c.bf16 %v2434, %v2388
        %v2811 = vpack.c.bf16 %v2526, %v2480
        %v2812 = vpack.c.bf16 %v2618, %v2572
        %v2813 = vpack.c.bf16 %v2710, %v2664
        %v2814 = vpack.c.bf16 %v2802, %v2756
        %v2816 = vsel %vm1322, %v2807, 0
        %v2819 = vsel %vm1322, %v2808, 0
        %v2822 = vsel %vm1322, %v2809, 0
        %v2825 = vsel %vm1322, %v2810, 0
        %v2828 = vsel %vm1322, %v2811, 0
        %v2831 = vsel %vm1322, %v2812, 0
        %v2834 = vsel %vm1322, %v2813, 0
        %v2837 = vsel %vm1322, %v2814, 0
        %2839 = vmatprep.subr.bf16.mxu0 0
        %2840 = vmatpush1.bf16.msra.mxu0 %v1318
        %2841 = vmatprep.subr.bf16.mxu0 0
        %2842 = vmatpush1.bf16.msra.mxu0 %v1319
        %2843 = vmatprep.subr.bf16.mxu0 0
        %2844 = vmatpush1.bf16.msra.mxu0 0
        %2845 = vmatprep.subr.bf16.mxu0 0
        %2846 = vmatpush1.bf16.msra.mxu0 0
        %2847 = vmatprep.subr.bf16.mxu0 0
        %2848 = vmatpush1.bf16.msra.mxu0 0
        %2849 = vmatprep.subr.bf16.mxu0 0
        %2850 = vmatpush1.bf16.msra.mxu0 0
        %2851 = vmatprep.subr.bf16.mxu0 0
        %2852 = vmatpush1.bf16.msra.mxu0 0
        %2853 = vmatprep.subr.bf16.mxu0 0
        %2854 = vmatpush1.bf16.msra.mxu0 0
        %2855 = vmatprep.subr.bf16.mxu0 0
        %2856 = vmatpush1.bf16.msra.mxu0 0
        %2857 = vmatprep.subr.bf16.mxu0 0
        %2858 = vmatpush1.bf16.msra.mxu0 0
        %2859 = vmatprep.subr.bf16.mxu0 0
        %2860 = vmatpush1.bf16.msra.mxu0 0
        %2861 = vmatprep.subr.bf16.mxu0 0
        %2862 = vmatpush1.bf16.msra.mxu0 0
        %2863 = vmatprep.subr.bf16.mxu0 0
        %2864 = vmatpush1.bf16.msra.mxu0 0
        %2865 = vmatprep.subr.bf16.mxu0 0
        %2866 = vmatpush1.bf16.msra.mxu0 0
        %2867 = vmatprep.subr.bf16.mxu0 0
        %2868 = vmatpush1.bf16.msra.mxu0 0
        %2869 = vmatprep.subr.bf16.mxu0 0
        %2870 = vmatpush1.bf16.msra.mxu0 0
        %2871 = vmatprep.mubr.bf16.mxu0 0
        %2872 = vmatmul.mubr.bf16.gmra.mrb[0].mxu0 %v2816
        %v2873 = vpop.f32.mrb[0].mxu0
        %v2874 = vadd.f32 %v532, %v2873
        %v2875 = vpop.f32.mrb[0].mxu0
        %v2876 = vpop.f32.mrb[0].mxu0
        %v2877 = vadd.f32 %v533, %v2876
        %v2878 = vpop.f32.mrb[0].mxu0
        %2879 = vmatprep.mubr.bf16.mxu0 0
        %2880 = vmatmul.mubr.bf16.gmra.mrb[0].mxu0 %v2819
        %v2881 = vpop.f32.mrb[0].mxu0
        %v2882 = vadd.f32 %v534, %v2881
        %v2883 = vpop.f32.mrb[0].mxu0
        %v2884 = vpop.f32.mrb[0].mxu0
        %v2885 = vadd.f32 %v535, %v2884
        %v2886 = vpop.f32.mrb[0].mxu0
        %2887 = vmatprep.mubr.bf16.mxu0 0
        %2888 = vmatmul.mubr.bf16.gmra.mrb[0].mxu0 %v2822
        %v2889 = vpop.f32.mrb[0].mxu0
        %v2890 = vadd.f32 %v536, %v2889
        %v2891 = vpop.f32.mrb[0].mxu0
        %v2892 = vpop.f32.mrb[0].mxu0
        %v2893 = vadd.f32 %v537, %v2892
        %v2894 = vpop.f32.mrb[0].mxu0
        %2895 = vmatprep.mubr.bf16.mxu0 0
        %2896 = vmatmul.mubr.bf16.gmra.mrb[0].mxu0 %v2825
        %v2897 = vpop.f32.mrb[0].mxu0
        %v2898 = vadd.f32 %v538, %v2897
        %v2899 = vpop.f32.mrb[0].mxu0
        %v2900 = vpop.f32.mrb[0].mxu0
        %v2901 = vadd.f32 %v539, %v2900
        %v2902 = vpop.f32.mrb[0].mxu0
        %2903 = vmatprep.mubr.bf16.mxu0 0
        %2904 = vmatmul.mubr.bf16.gmra.mrb[0].mxu0 %v2828
        %v2905 = vpop.f32.mrb[0].mxu0
        %v2906 = vadd.f32 %v540, %v2905
        %v2907 = vpop.f32.mrb[0].mxu0
        %v2908 = vpop.f32.mrb[0].mxu0
        %v2909 = vadd.f32 %v541, %v2908
        %v2910 = vpop.f32.mrb[0].mxu0
        %2911 = vmatprep.mubr.bf16.mxu0 0
        %2912 = vmatmul.mubr.bf16.gmra.mrb[0].mxu0 %v2831
        %v2913 = vpop.f32.mrb[0].mxu0
        %v2914 = vadd.f32 %v542, %v2913
        %v2915 = vpop.f32.mrb[0].mxu0
        %v2916 = vpop.f32.mrb[0].mxu0
        %v2917 = vadd.f32 %v543, %v2916
        %v2918 = vpop.f32.mrb[0].mxu0
        %2919 = vmatprep.mubr.bf16.mxu0 0
        %2920 = vmatmul.mubr.bf16.gmra.mrb[0].mxu0 %v2834
        %v2921 = vpop.f32.mrb[0].mxu0
        %v2922 = vadd.f32 %v544, %v2921
        %v2923 = vpop.f32.mrb[0].mxu0
        %v2924 = vpop.f32.mrb[0].mxu0
        %v2925 = vadd.f32 %v545, %v2924
        %v2926 = vpop.f32.mrb[0].mxu0
        %2927 = vmatprep.mubr.bf16.mxu0 0
        %2928 = vmatmul.mubr.bf16.gmra.mrb[0].mxu0 %v2837
        %v2929 = vpop.f32.mrb[0].mxu0
        %v2930 = vadd.f32 %v546, %v2929
        %v2931 = vpop.f32.mrb[0].mxu0
        %v2932 = vpop.f32.mrb[0].mxu0
        %v2933 = vadd.f32 %v547, %v2932
        %v2934 = vpop.f32.mrb[0].mxu0
        %2935 = vdwg.mxu0
        %v2936 = vpack.c.bf16 %v2040, %v2039
        %v2937 = vpack.c.bf16 %v2042, %v2041
        %v2938 = vpack.c.bf16 %v2044, %v2043
        %v2939 = vpack.c.bf16 %v2046, %v2045
        %v2940 = vpack.c.bf16 %v2048, %v2047
        %v2941 = vpack.c.bf16 %v2050, %v2049
        %v2942 = vpack.c.bf16 %v2052, %v2051
        %v2943 = vpack.c.bf16 %v2054, %v2053
        %2952 = vrot.lane.b32.xlu0 %v2936, 96
        %v2953 = vpop.permute.xlu0 %2952
        %2954 = vrot.lane.b32.xlu0 %v2937, 96
        %v2955 = vpop.permute.xlu0 %2954
        %2956 = vrot.lane.b32.xlu0 %v2938, 96
        %v2957 = vpop.permute.xlu0 %2956
        %2958 = vrot.lane.b32.xlu0 %v2939, 96
        %v2959 = vpop.permute.xlu0 %2958
        %2960 = vrot.lane.b32.xlu0 %v2940, 96
        %v2961 = vpop.permute.xlu0 %2960
        %2962 = vrot.lane.b32.xlu0 %v2941, 96
        %v2963 = vpop.permute.xlu0 %2962
        %2964 = vrot.lane.b32.xlu0 %v2942, 96
        %v2965 = vpop.permute.xlu0 %2964
        %2966 = vrot.lane.b32.xlu0 %v2943, 96
        %v2967 = vpop.permute.xlu0 %2966
        %v2969 = vsel %vm1322, %v2953, 0
        %v2972 = vsel %vm1322, %v2955, 0
        %v2975 = vsel %vm1322, %v2957, 0
        %v2978 = vsel %vm1322, %v2959, 0
        %v2981 = vsel %vm1322, %v2961, 0
        %v2984 = vsel %vm1322, %v2963, 0
        %v2987 = vsel %vm1322, %v2965, 0
        %v2990 = vsel %vm1322, %v2967, 0
        %2992 = vmatprep.subr.bf16.mxu0 0
        %2993 = vmatpush1.bf16.msra.mxu0 %v1466
        %2994 = vmatprep.subr.bf16.mxu0 0
        %2995 = vmatpush1.bf16.msra.mxu0 %v1467
        %2996 = vmatprep.subr.bf16.mxu0 0
        %2997 = vmatpush1.bf16.msra.mxu0 0
        %2998 = vmatprep.subr.bf16.mxu0 0
        %2999 = vmatpush1.bf16.msra.mxu0 0
        %3000 = vmatprep.subr.bf16.mxu0 0
        %3001 = vmatpush1.bf16.msra.mxu0 0
        %3002 = vmatprep.subr.bf16.mxu0 0
        %3003 = vmatpush1.bf16.msra.mxu0 0
        %3004 = vmatprep.subr.bf16.mxu0 0
        %3005 = vmatpush1.bf16.msra.mxu0 0
        %3006 = vmatprep.subr.bf16.mxu0 0
        %3007 = vmatpush1.bf16.msra.mxu0 0
        %3008 = vmatprep.subr.bf16.mxu0 0
        %3009 = vmatpush1.bf16.msra.mxu0 0
        %3010 = vmatprep.subr.bf16.mxu0 0
        %3011 = vmatpush1.bf16.msra.mxu0 0
        %3012 = vmatprep.subr.bf16.mxu0 0
        %3013 = vmatpush1.bf16.msra.mxu0 0
        %3014 = vmatprep.subr.bf16.mxu0 0
        %3015 = vmatpush1.bf16.msra.mxu0 0
        %3016 = vmatprep.subr.bf16.mxu0 0
        %3017 = vmatpush1.bf16.msra.mxu0 0
        %3018 = vmatprep.subr.bf16.mxu0 0
        %3019 = vmatpush1.bf16.msra.mxu0 0
        %3020 = vmatprep.subr.bf16.mxu0 0
        %3021 = vmatpush1.bf16.msra.mxu0 0
        %3022 = vmatprep.subr.bf16.mxu0 0
        %3023 = vmatpush1.bf16.msra.mxu0 0
        %3024 = vmatprep.mubr.bf16.mxu0 0
        %3025 = vmatmul.mubr.bf16.gmra.mrb[0].mxu0 %v2969
        %v3026 = vpop.f32.mrb[0].mxu0
        %v3027 = vadd.f32 %v1456, %v3026
        %v3028 = vpop.f32.mrb[0].mxu0
        %v3029 = vpop.f32.mrb[0].mxu0
        %v3030 = vadd.f32 %v1456, %v3029
        %v3031 = vpop.f32.mrb[0].mxu0
        %3032 = vmatprep.mubr.bf16.mxu0 0
        %3033 = vmatmul.mubr.bf16.gmra.mrb[0].mxu0 %v2972
        %v3034 = vpop.f32.mrb[0].mxu0
        %v3035 = vadd.f32 %v1456, %v3034
        %v3036 = vpop.f32.mrb[0].mxu0
        %v3037 = vpop.f32.mrb[0].mxu0
        %v3038 = vadd.f32 %v1456, %v3037
        %v3039 = vpop.f32.mrb[0].mxu0
        %3040 = vmatprep.mubr.bf16.mxu0 0
        %3041 = vmatmul.mubr.bf16.gmra.mrb[0].mxu0 %v2975
        %v3042 = vpop.f32.mrb[0].mxu0
        %v3043 = vadd.f32 %v1456, %v3042
        %v3044 = vpop.f32.mrb[0].mxu0
        %v3045 = vpop.f32.mrb[0].mxu0
        %v3046 = vadd.f32 %v1456, %v3045
        %v3047 = vpop.f32.mrb[0].mxu0
        %3048 = vmatprep.mubr.bf16.mxu0 0
        %3049 = vmatmul.mubr.bf16.gmra.mrb[0].mxu0 %v2978
        %v3050 = vpop.f32.mrb[0].mxu0
        %v3051 = vadd.f32 %v1456, %v3050
        %v3052 = vpop.f32.mrb[0].mxu0
        %v3053 = vpop.f32.mrb[0].mxu0
        %v3054 = vadd.f32 %v1456, %v3053
        %v3055 = vpop.f32.mrb[0].mxu0
        %3056 = vmatprep.mubr.bf16.mxu0 0
        %3057 = vmatmul.mubr.bf16.gmra.mrb[0].mxu0 %v2981
        %v3058 = vpop.f32.mrb[0].mxu0
        %v3059 = vadd.f32 %v1456, %v3058
        %v3060 = vpop.f32.mrb[0].mxu0
        %v3061 = vpop.f32.mrb[0].mxu0
        %v3062 = vadd.f32 %v1456, %v3061
        %v3063 = vpop.f32.mrb[0].mxu0
        %3064 = vmatprep.mubr.bf16.mxu0 0
        %3065 = vmatmul.mubr.bf16.gmra.mrb[0].mxu0 %v2984
        %v3066 = vpop.f32.mrb[0].mxu0
        %v3067 = vadd.f32 %v1456, %v3066
        %v3068 = vpop.f32.mrb[0].mxu0
        %v3069 = vpop.f32.mrb[0].mxu0
        %v3070 = vadd.f32 %v1456, %v3069
        %v3071 = vpop.f32.mrb[0].mxu0
        %3072 = vmatprep.mubr.bf16.mxu0 0
        %3073 = vmatmul.mubr.bf16.gmra.mrb[0].mxu0 %v2987
        %v3074 = vpop.f32.mrb[0].mxu0
        %v3075 = vadd.f32 %v1456, %v3074
        %v3076 = vpop.f32.mrb[0].mxu0
        %v3077 = vpop.f32.mrb[0].mxu0
        %v3078 = vadd.f32 %v1456, %v3077
        %v3079 = vpop.f32.mrb[0].mxu0
        %3080 = vmatprep.mubr.bf16.mxu0 0
        %3081 = vmatmul.mubr.bf16.gmra.mrb[0].mxu0 %v2990
        %v3082 = vpop.f32.mrb[0].mxu0
        %v3083 = vadd.f32 %v1456, %v3082
        %v3084 = vpop.f32.mrb[0].mxu0
        %v3085 = vpop.f32.mrb[0].mxu0
        %v3086 = vadd.f32 %v1456, %v3085
        %v3087 = vpop.f32.mrb[0].mxu0
        %3088 = vdwg.mxu0
        %v3089 = vadd.f32 %v2874, %v3027
        %v3090 = vadd.f32 %v2877, %v3030
        %v3091 = vadd.f32 %v2882, %v3035
        %v3092 = vadd.f32 %v2885, %v3038
        %v3093 = vadd.f32 %v2890, %v3043
        %v3094 = vadd.f32 %v2893, %v3046
        %v3095 = vadd.f32 %v2898, %v3051
        %v3096 = vadd.f32 %v2901, %v3054
        %v3097 = vadd.f32 %v2906, %v3059
        %v3098 = vadd.f32 %v2909, %v3062
        %v3099 = vadd.f32 %v2914, %v3067
        %v3100 = vadd.f32 %v2917, %v3070
        %v3101 = vadd.f32 %v2922, %v3075
        %v3102 = vadd.f32 %v2925, %v3078
        %v3103 = vadd.f32 %v2930, %v3083
        %v3104 = vadd.f32 %v2933, %v3086
        %v3105 = vsub.f32 0.0, %v3089
        %v3106 = vsub.f32 0.0, %v3090
        %v3107 = vsub.f32 0.0, %v3091
        %v3108 = vsub.f32 0.0, %v3092
        %v3109 = vsub.f32 0.0, %v3093
        %v3110 = vsub.f32 0.0, %v3094
        %v3111 = vsub.f32 0.0, %v3095
        %v3112 = vsub.f32 0.0, %v3096
        %v3113 = vsub.f32 0.0, %v3097
        %v3114 = vsub.f32 0.0, %v3098
        %v3115 = vsub.f32 0.0, %v3099
        %v3116 = vsub.f32 0.0, %v3100
        %v3117 = vsub.f32 0.0, %v3101
        %v3118 = vsub.f32 0.0, %v3102
        %v3119 = vsub.f32 0.0, %v3103
        %v3120 = vsub.f32 0.0, %v3104
        %v3121 = vmul.f32 %v3105, 1.442695
        %v3122 = vpow.pop %v3121
        %v3123 = vmul.f32 %v3106, 1.442695
        %v3124 = vpow.pop %v3123
        %v3125 = vmul.f32 %v3107, 1.442695
        %v3126 = vpow.pop %v3125
        %v3127 = vmul.f32 %v3108, 1.442695
        %v3128 = vpow.pop %v3127
        %v3129 = vmul.f32 %v3109, 1.442695
        %v3130 = vpow.pop %v3129
        %v3131 = vmul.f32 %v3110, 1.442695
        %v3132 = vpow.pop %v3131
        %v3133 = vmul.f32 %v3111, 1.442695
        %v3134 = vpow.pop %v3133
        %v3135 = vmul.f32 %v3112, 1.442695
        %v3136 = vpow.pop %v3135
        %v3137 = vmul.f32 %v3113, 1.442695
        %v3138 = vpow.pop %v3137
        %v3139 = vmul.f32 %v3114, 1.442695
        %v3140 = vpow.pop %v3139
        %v3141 = vmul.f32 %v3115, 1.442695
        %v3142 = vpow.pop %v3141
        %v3143 = vmul.f32 %v3116, 1.442695
        %v3144 = vpow.pop %v3143
        %v3145 = vmul.f32 %v3117, 1.442695
        %v3146 = vpow.pop %v3145
        %v3147 = vmul.f32 %v3118, 1.442695
        %v3148 = vpow.pop %v3147
        %v3149 = vmul.f32 %v3119, 1.442695
        %v3150 = vpow.pop %v3149
        %v3151 = vmul.f32 %v3120, 1.442695
        %v3152 = vpow.pop %v3151
        %v3153 = vadd.f32 %v3122, 1.0
        %v3154 = vadd.f32 %v3124, 1.0
        %v3155 = vadd.f32 %v3126, 1.0
        %v3156 = vadd.f32 %v3128, 1.0
        %v3157 = vadd.f32 %v3130, 1.0
        %v3158 = vadd.f32 %v3132, 1.0
        %v3159 = vadd.f32 %v3134, 1.0
        %v3160 = vadd.f32 %v3136, 1.0
        %v3161 = vadd.f32 %v3138, 1.0
        %v3162 = vadd.f32 %v3140, 1.0
        %v3163 = vadd.f32 %v3142, 1.0
        %v3164 = vadd.f32 %v3144, 1.0
        %v3165 = vadd.f32 %v3146, 1.0
        %v3166 = vadd.f32 %v3148, 1.0
        %v3167 = vadd.f32 %v3150, 1.0
        %v3168 = vadd.f32 %v3152, 1.0
        %v3169 = vrcp.pop %v3153
        %v3170 = vrcp.pop %v3154
        %v3171 = vrcp.pop %v3155
        %v3172 = vrcp.pop %v3156
        %v3173 = vrcp.pop %v3157
        %v3174 = vrcp.pop %v3158
        %v3175 = vrcp.pop %v3159
        %v3176 = vrcp.pop %v3160
        %v3177 = vrcp.pop %v3161
        %v3178 = vrcp.pop %v3162
        %v3179 = vrcp.pop %v3163
        %v3180 = vrcp.pop %v3164
        %v3181 = vrcp.pop %v3165
        %v3182 = vrcp.pop %v3166
        %v3183 = vrcp.pop %v3167
        %v3184 = vrcp.pop %v3168
        %3201 = vrot.lane.b32.xlu0 %v3027, 64
        %v3202 = vpop.permute.xlu0 %3201
        %3203 = vrot.lane.b32.xlu0 %v3030, 64
        %v3204 = vpop.permute.xlu0 %3203
        %3205 = vrot.lane.b32.xlu0 %v3035, 64
        %v3206 = vpop.permute.xlu0 %3205
        %3207 = vrot.lane.b32.xlu0 %v3038, 64
        %v3208 = vpop.permute.xlu0 %3207
        %3209 = vrot.lane.b32.xlu0 %v3043, 64
        %v3210 = vpop.permute.xlu0 %3209
        %3211 = vrot.lane.b32.xlu0 %v3046, 64
        %v3212 = vpop.permute.xlu0 %3211
        %3213 = vrot.lane.b32.xlu0 %v3051, 64
        %v3214 = vpop.permute.xlu0 %3213
        %3215 = vrot.lane.b32.xlu0 %v3054, 64
        %v3216 = vpop.permute.xlu0 %3215
        %3217 = vrot.lane.b32.xlu0 %v3059, 64
        %v3218 = vpop.permute.xlu0 %3217
        %3219 = vrot.lane.b32.xlu0 %v3062, 64
        %v3220 = vpop.permute.xlu0 %3219
        %3221 = vrot.lane.b32.xlu0 %v3067, 64
        %v3222 = vpop.permute.xlu0 %3221
        %3223 = vrot.lane.b32.xlu0 %v3070, 64
        %v3224 = vpop.permute.xlu0 %3223
        %3225 = vrot.lane.b32.xlu0 %v3075, 64
        %v3226 = vpop.permute.xlu0 %3225
        %3227 = vrot.lane.b32.xlu0 %v3078, 64
        %v3228 = vpop.permute.xlu0 %3227
        %3229 = vrot.lane.b32.xlu0 %v3083, 64
        %v3230 = vpop.permute.xlu0 %3229
        %3231 = vrot.lane.b32.xlu0 %v3086, 64
        %v3232 = vpop.permute.xlu0 %3231
        %v3249 = vmul.f32 %v3169, %v3202
        %v3250 = vmul.f32 %v3170, %v3204
        %v3251 = vmul.f32 %v3171, %v3206
        %v3252 = vmul.f32 %v3172, %v3208
        %v3253 = vmul.f32 %v3173, %v3210
        %v3254 = vmul.f32 %v3174, %v3212
        %v3255 = vmul.f32 %v3175, %v3214
        %v3256 = vmul.f32 %v3176, %v3216
        %v3257 = vmul.f32 %v3177, %v3218
        %v3258 = vmul.f32 %v3178, %v3220
        %v3259 = vmul.f32 %v3179, %v3222
        %v3260 = vmul.f32 %v3180, %v3224
        %v3261 = vmul.f32 %v3181, %v3226
        %v3262 = vmul.f32 %v3182, %v3228
        %v3263 = vmul.f32 %v3183, %v3230
        %v3264 = vmul.f32 %v3184, %v3232
        %3281 = vrot.lane.b32.xlu0 %v3249, 64
        %v3282 = vpop.permute.xlu0 %3281
        %3283 = vrot.lane.b32.xlu0 %v3250, 64
        %v3284 = vpop.permute.xlu0 %3283
        %3285 = vrot.lane.b32.xlu0 %v3251, 64
        %v3286 = vpop.permute.xlu0 %3285
        %3287 = vrot.lane.b32.xlu0 %v3252, 64
        %v3288 = vpop.permute.xlu0 %3287
        %3289 = vrot.lane.b32.xlu0 %v3253, 64
        %v3290 = vpop.permute.xlu0 %3289
        %3291 = vrot.lane.b32.xlu0 %v3254, 64
        %v3292 = vpop.permute.xlu0 %3291
        %3293 = vrot.lane.b32.xlu0 %v3255, 64
        %v3294 = vpop.permute.xlu0 %3293
        %3295 = vrot.lane.b32.xlu0 %v3256, 64
        %v3296 = vpop.permute.xlu0 %3295
        %3297 = vrot.lane.b32.xlu0 %v3257, 64
        %v3298 = vpop.permute.xlu0 %3297
        %3299 = vrot.lane.b32.xlu0 %v3258, 64
        %v3300 = vpop.permute.xlu0 %3299
        %3301 = vrot.lane.b32.xlu0 %v3259, 64
        %v3302 = vpop.permute.xlu0 %3301
        %3303 = vrot.lane.b32.xlu0 %v3260, 64
        %v3304 = vpop.permute.xlu0 %3303
        %3305 = vrot.lane.b32.xlu0 %v3261, 64
        %v3306 = vpop.permute.xlu0 %3305
        %3307 = vrot.lane.b32.xlu0 %v3262, 64
        %v3308 = vpop.permute.xlu0 %3307
        %3309 = vrot.lane.b32.xlu0 %v3263, 64
        %v3310 = vpop.permute.xlu0 %3309
        %3311 = vrot.lane.b32.xlu0 %v3264, 64
        %v3312 = vpop.permute.xlu0 %3311
        %v3329 = vadd.f32 %v2874, %v3282
        %v3330 = vadd.f32 %v2877, %v3284
        %v3331 = vadd.f32 %v2882, %v3286
        %v3332 = vadd.f32 %v2885, %v3288
        %v3333 = vadd.f32 %v2890, %v3290
        %v3334 = vadd.f32 %v2893, %v3292
        %v3335 = vadd.f32 %v2898, %v3294
        %v3336 = vadd.f32 %v2901, %v3296
        %v3337 = vadd.f32 %v2906, %v3298
        %v3338 = vadd.f32 %v2909, %v3300
        %v3339 = vadd.f32 %v2914, %v3302
        %v3340 = vadd.f32 %v2917, %v3304
        %v3341 = vadd.f32 %v2922, %v3306
        %v3342 = vadd.f32 %v2925, %v3308
        %v3343 = vadd.f32 %v2930, %v3310
        %v3344 = vadd.f32 %v2933, %v3312
        %v3345 = vtanh.pop %v3329
        %v3346 = vtanh.pop %v3330
        %v3347 = vtanh.pop %v3331
        %v3348 = vtanh.pop %v3332
        %v3349 = vtanh.pop %v3333
        %v3350 = vtanh.pop %v3334
        %v3351 = vtanh.pop %v3335
        %v3352 = vtanh.pop %v3336
        %v3353 = vtanh.pop %v3337
        %v3354 = vtanh.pop %v3338
        %v3355 = vtanh.pop %v3339
        %v3356 = vtanh.pop %v3340
        %v3357 = vtanh.pop %v3341
        %v3358 = vtanh.pop %v3342
        %v3359 = vtanh.pop %v3343
        %v3360 = vtanh.pop %v3344
        %v3361 = vsub.f32 1.0, %v3169
        %v3362 = vsub.f32 1.0, %v3170
        %v3363 = vsub.f32 1.0, %v3171
        %v3364 = vsub.f32 1.0, %v3172
        %v3365 = vsub.f32 1.0, %v3173
        %v3366 = vsub.f32 1.0, %v3174
        %v3367 = vsub.f32 1.0, %v3175
        %v3368 = vsub.f32 1.0, %v3176
        %v3369 = vsub.f32 1.0, %v3177
        %v3370 = vsub.f32 1.0, %v3178
        %v3371 = vsub.f32 1.0, %v3179
        %v3372 = vsub.f32 1.0, %v3180
        %v3373 = vsub.f32 1.0, %v3181
        %v3374 = vsub.f32 1.0, %v3182
        %v3375 = vsub.f32 1.0, %v3183
        %v3376 = vsub.f32 1.0, %v3184
        %3393 = vrot.lane.b32.xlu0 %v3345, 96
        %v3394 = vpop.permute.xlu0 %3393
        %3395 = vrot.lane.b32.xlu0 %v3346, 96
        %v3396 = vpop.permute.xlu0 %3395
        %3397 = vrot.lane.b32.xlu0 %v3347, 96
        %v3398 = vpop.permute.xlu0 %3397
        %3399 = vrot.lane.b32.xlu0 %v3348, 96
        %v3400 = vpop.permute.xlu0 %3399
        %3401 = vrot.lane.b32.xlu0 %v3349, 96
        %v3402 = vpop.permute.xlu0 %3401
        %3403 = vrot.lane.b32.xlu0 %v3350, 96
        %v3404 = vpop.permute.xlu0 %3403
        %3405 = vrot.lane.b32.xlu0 %v3351, 96
        %v3406 = vpop.permute.xlu0 %3405
        %3407 = vrot.lane.b32.xlu0 %v3352, 96
        %v3408 = vpop.permute.xlu0 %3407
        %3409 = vrot.lane.b32.xlu0 %v3353, 96
        %v3410 = vpop.permute.xlu0 %3409
        %3411 = vrot.lane.b32.xlu0 %v3354, 96
        %v3412 = vpop.permute.xlu0 %3411
        %3413 = vrot.lane.b32.xlu0 %v3355, 96
        %v3414 = vpop.permute.xlu0 %3413
        %3415 = vrot.lane.b32.xlu0 %v3356, 96
        %v3416 = vpop.permute.xlu0 %3415
        %3417 = vrot.lane.b32.xlu0 %v3357, 96
        %v3418 = vpop.permute.xlu0 %3417
        %3419 = vrot.lane.b32.xlu0 %v3358, 96
        %v3420 = vpop.permute.xlu0 %3419
        %3421 = vrot.lane.b32.xlu0 %v3359, 96
        %v3422 = vpop.permute.xlu0 %3421
        %3423 = vrot.lane.b32.xlu0 %v3360, 96
        %v3424 = vpop.permute.xlu0 %3423
        %v3441 = vmul.f32 %v3361, %v3394
        %v3442 = vmul.f32 %v3362, %v3396
        %v3443 = vmul.f32 %v3363, %v3398
        %v3444 = vmul.f32 %v3364, %v3400
        %v3445 = vmul.f32 %v3365, %v3402
        %v3446 = vmul.f32 %v3366, %v3404
        %v3447 = vmul.f32 %v3367, %v3406
        %v3448 = vmul.f32 %v3368, %v3408
        %v3449 = vmul.f32 %v3369, %v3410
        %v3450 = vmul.f32 %v3370, %v3412
        %v3451 = vmul.f32 %v3371, %v3414
        %v3452 = vmul.f32 %v3372, %v3416
        %v3453 = vmul.f32 %v3373, %v3418
        %v3454 = vmul.f32 %v3374, %v3420
        %v3455 = vmul.f32 %v3375, %v3422
        %v3456 = vmul.f32 %v3376, %v3424
        %v3457 = vmul.f32 %v3169, %v2039
        %v3458 = vmul.f32 %v3170, %v2040
        %v3459 = vmul.f32 %v3171, %v2041
        %v3460 = vmul.f32 %v3172, %v2042
        %v3461 = vmul.f32 %v3173, %v2043
        %v3462 = vmul.f32 %v3174, %v2044
        %v3463 = vmul.f32 %v3175, %v2045
        %v3464 = vmul.f32 %v3176, %v2046
        %v3465 = vmul.f32 %v3177, %v2047
        %v3466 = vmul.f32 %v3178, %v2048
        %v3467 = vmul.f32 %v3179, %v2049
        %v3468 = vmul.f32 %v3180, %v2050
        %v3469 = vmul.f32 %v3181, %v2051
        %v3470 = vmul.f32 %v3182, %v2052
        %v3471 = vmul.f32 %v3183, %v2053
        %v3472 = vmul.f32 %v3184, %v2054
        %v3473 = vadd.f32 %v3441, %v3457
        %v3474 = vadd.f32 %v3442, %v3458
        %v3475 = vadd.f32 %v3443, %v3459
        %v3476 = vadd.f32 %v3444, %v3460
        %v3477 = vadd.f32 %v3445, %v3461
        %v3478 = vadd.f32 %v3446, %v3462
        %v3479 = vadd.f32 %v3447, %v3463
        %v3480 = vadd.f32 %v3448, %v3464
        %v3481 = vadd.f32 %v3449, %v3465
        %v3482 = vadd.f32 %v3450, %v3466
        %v3483 = vadd.f32 %v3451, %v3467
        %v3484 = vadd.f32 %v3452, %v3468
        %v3485 = vadd.f32 %v3453, %v3469
        %v3486 = vadd.f32 %v3454, %v3470
        %v3487 = vadd.f32 %v3455, %v3471
        %v3488 = vadd.f32 %v3456, %v3472
        %v3489 = vadd.f32 %v3473, %v1976
        %v3490 = vadd.f32 %v3474, %v1978
        %v3491 = vadd.f32 %v3475, %v1980
        %v3492 = vadd.f32 %v3476, %v1982
        %v3493 = vadd.f32 %v3477, %v1984
        %v3494 = vadd.f32 %v3478, %v1986
        %v3495 = vadd.f32 %v3479, %v1988
        %v3496 = vadd.f32 %v3480, %v1990
        %v3497 = vadd.f32 %v3481, %v1992
        %v3498 = vadd.f32 %v3482, %v1994
        %v3499 = vadd.f32 %v3483, %v1996
        %v3500 = vadd.f32 %v3484, %v1998
        %v3501 = vadd.f32 %v3485, %v2000
        %v3502 = vadd.f32 %v3486, %v2002
        %v3503 = vadd.f32 %v3487, %v2004
        %v3504 = vadd.f32 %v3488, %v2006
        %3521 = vrot.lane.b32.xlu0 %v3489, 96
        %v3522 = vpop.permute.xlu0 %3521
        %3523 = vrot.lane.b32.xlu0 %v3490, 96
        %v3524 = vpop.permute.xlu0 %3523
        %3525 = vrot.lane.b32.xlu0 %v3491, 96
        %v3526 = vpop.permute.xlu0 %3525
        %3527 = vrot.lane.b32.xlu0 %v3492, 96
        %v3528 = vpop.permute.xlu0 %3527
        %3529 = vrot.lane.b32.xlu0 %v3493, 96
        %v3530 = vpop.permute.xlu0 %3529
        %3531 = vrot.lane.b32.xlu0 %v3494, 96
        %v3532 = vpop.permute.xlu0 %3531
        %3533 = vrot.lane.b32.xlu0 %v3495, 96
        %v3534 = vpop.permute.xlu0 %3533
        %3535 = vrot.lane.b32.xlu0 %v3496, 96
        %v3536 = vpop.permute.xlu0 %3535
        %3537 = vrot.lane.b32.xlu0 %v3497, 96
        %v3538 = vpop.permute.xlu0 %3537
        %3539 = vrot.lane.b32.xlu0 %v3498, 96
        %v3540 = vpop.permute.xlu0 %3539
        %3541 = vrot.lane.b32.xlu0 %v3499, 96
        %v3542 = vpop.permute.xlu0 %3541
        %3543 = vrot.lane.b32.xlu0 %v3500, 96
        %v3544 = vpop.permute.xlu0 %3543
        %3545 = vrot.lane.b32.xlu0 %v3501, 96
        %v3546 = vpop.permute.xlu0 %3545
        %3547 = vrot.lane.b32.xlu0 %v3502, 96
        %v3548 = vpop.permute.xlu0 %3547
        %3549 = vrot.lane.b32.xlu0 %v3503, 96
        %v3550 = vpop.permute.xlu0 %3549
        %3551 = vrot.lane.b32.xlu0 %v3504, 96
        %v3552 = vpop.permute.xlu0 %3551
        %v3569 = vsel %vm1322, %v3522, 0.0
        %3570 = vadd.xlane.f32.xlu0 %v3569
        %v3571 = vpop.xlane.xlu0 %3570
        %v3572 = vsel %vm1322, %v3524, 0.0
        %3573 = vadd.xlane.f32.xlu0 %v3572
        %v3574 = vpop.xlane.xlu0 %3573
        %v3575 = vsel %vm1322, %v3526, 0.0
        %3576 = vadd.xlane.f32.xlu0 %v3575
        %v3577 = vpop.xlane.xlu0 %3576
        %v3578 = vsel %vm1322, %v3528, 0.0
        %3579 = vadd.xlane.f32.xlu0 %v3578
        %v3580 = vpop.xlane.xlu0 %3579
        %v3581 = vsel %vm1322, %v3530, 0.0
        %3582 = vadd.xlane.f32.xlu0 %v3581
        %v3583 = vpop.xlane.xlu0 %3582
        %v3584 = vsel %vm1322, %v3532, 0.0
        %3585 = vadd.xlane.f32.xlu0 %v3584
        %v3586 = vpop.xlane.xlu0 %3585
        %v3587 = vsel %vm1322, %v3534, 0.0
        %3588 = vadd.xlane.f32.xlu0 %v3587
        %v3589 = vpop.xlane.xlu0 %3588
        %v3590 = vsel %vm1322, %v3536, 0.0
        %3591 = vadd.xlane.f32.xlu0 %v3590
        %v3592 = vpop.xlane.xlu0 %3591
        %v3593 = vsel %vm1322, %v3538, 0.0
        %3594 = vadd.xlane.f32.xlu0 %v3593
        %v3595 = vpop.xlane.xlu0 %3594
        %v3596 = vsel %vm1322, %v3540, 0.0
        %3597 = vadd.xlane.f32.xlu0 %v3596
        %v3598 = vpop.xlane.xlu0 %3597
        %v3599 = vsel %vm1322, %v3542, 0.0
        %3600 = vadd.xlane.f32.xlu0 %v3599
        %v3601 = vpop.xlane.xlu0 %3600
        %v3602 = vsel %vm1322, %v3544, 0.0
        %3603 = vadd.xlane.f32.xlu0 %v3602
        %v3604 = vpop.xlane.xlu0 %3603
        %v3605 = vsel %vm1322, %v3546, 0.0
        %3606 = vadd.xlane.f32.xlu0 %v3605
        %v3607 = vpop.xlane.xlu0 %3606
        %v3608 = vsel %vm1322, %v3548, 0.0
        %3609 = vadd.xlane.f32.xlu0 %v3608
        %v3610 = vpop.xlane.xlu0 %3609
        %v3611 = vsel %vm1322, %v3550, 0.0
        %3612 = vadd.xlane.f32.xlu0 %v3611
        %v3613 = vpop.xlane.xlu0 %3612
        %v3614 = vsel %vm1322, %v3552, 0.0
        %3615 = vadd.xlane.f32.xlu0 %v3614
        %v3616 = vpop.xlane.xlu0 %3615
        %v3617 = vrcp.pop 32.0
        %v3618 = vmul.f32 %v3571, %v3617
        %v3619 = vmul.f32 %v3574, %v3617
        %v3620 = vmul.f32 %v3577, %v3617
        %v3621 = vmul.f32 %v3580, %v3617
        %v3622 = vmul.f32 %v3583, %v3617
        %v3623 = vmul.f32 %v3586, %v3617
        %v3624 = vmul.f32 %v3589, %v3617
        %v3625 = vmul.f32 %v3592, %v3617
        %v3626 = vmul.f32 %v3595, %v3617
        %v3627 = vmul.f32 %v3598, %v3617
        %v3628 = vmul.f32 %v3601, %v3617
        %v3629 = vmul.f32 %v3604, %v3617
        %v3630 = vmul.f32 %v3607, %v3617
        %v3631 = vmul.f32 %v3610, %v3617
        %v3632 = vmul.f32 %v3613, %v3617
        %v3633 = vmul.f32 %v3616, %v3617
        %v3634 = vsub.f32 %v3489, %v3618
        %v3635 = vsub.f32 %v3490, %v3619
        %v3636 = vsub.f32 %v3491, %v3620
        %v3637 = vsub.f32 %v3492, %v3621
        %v3638 = vsub.f32 %v3493, %v3622
        %v3639 = vsub.f32 %v3494, %v3623
        %v3640 = vsub.f32 %v3495, %v3624
        %v3641 = vsub.f32 %v3496, %v3625
        %v3642 = vsub.f32 %v3497, %v3626
        %v3643 = vsub.f32 %v3498, %v3627
        %v3644 = vsub.f32 %v3499, %v3628
        %v3645 = vsub.f32 %v3500, %v3629
        %v3646 = vsub.f32 %v3501, %v3630
        %v3647 = vsub.f32 %v3502, %v3631
        %v3648 = vsub.f32 %v3503, %v3632
        %v3649 = vsub.f32 %v3504, %v3633
        %v3650 = vmul.f32 %v3634, %v3634
        %v3651 = vmul.f32 %v3635, %v3635
        %v3652 = vmul.f32 %v3636, %v3636
        %v3653 = vmul.f32 %v3637, %v3637
        %v3654 = vmul.f32 %v3638, %v3638
        %v3655 = vmul.f32 %v3639, %v3639
        %v3656 = vmul.f32 %v3640, %v3640
        %v3657 = vmul.f32 %v3641, %v3641
        %v3658 = vmul.f32 %v3642, %v3642
        %v3659 = vmul.f32 %v3643, %v3643
        %v3660 = vmul.f32 %v3644, %v3644
        %v3661 = vmul.f32 %v3645, %v3645
        %v3662 = vmul.f32 %v3646, %v3646
        %v3663 = vmul.f32 %v3647, %v3647
        %v3664 = vmul.f32 %v3648, %v3648
        %v3665 = vmul.f32 %v3649, %v3649
        %3682 = vrot.lane.b32.xlu0 %v3650, 96
        %v3683 = vpop.permute.xlu0 %3682
        %3684 = vrot.lane.b32.xlu0 %v3651, 96
        %v3685 = vpop.permute.xlu0 %3684
        %3686 = vrot.lane.b32.xlu0 %v3652, 96
        %v3687 = vpop.permute.xlu0 %3686
        %3688 = vrot.lane.b32.xlu0 %v3653, 96
        %v3689 = vpop.permute.xlu0 %3688
        %3690 = vrot.lane.b32.xlu0 %v3654, 96
        %v3691 = vpop.permute.xlu0 %3690
        %3692 = vrot.lane.b32.xlu0 %v3655, 96
        %v3693 = vpop.permute.xlu0 %3692
        %3694 = vrot.lane.b32.xlu0 %v3656, 96
        %v3695 = vpop.permute.xlu0 %3694
        %3696 = vrot.lane.b32.xlu0 %v3657, 96
        %v3697 = vpop.permute.xlu0 %3696
        %3698 = vrot.lane.b32.xlu0 %v3658, 96
        %v3699 = vpop.permute.xlu0 %3698
        %3700 = vrot.lane.b32.xlu0 %v3659, 96
        %v3701 = vpop.permute.xlu0 %3700
        %3702 = vrot.lane.b32.xlu0 %v3660, 96
        %v3703 = vpop.permute.xlu0 %3702
        %3704 = vrot.lane.b32.xlu0 %v3661, 96
        %v3705 = vpop.permute.xlu0 %3704
        %3706 = vrot.lane.b32.xlu0 %v3662, 96
        %v3707 = vpop.permute.xlu0 %3706
        %3708 = vrot.lane.b32.xlu0 %v3663, 96
        %v3709 = vpop.permute.xlu0 %3708
        %3710 = vrot.lane.b32.xlu0 %v3664, 96
        %v3711 = vpop.permute.xlu0 %3710
        %3712 = vrot.lane.b32.xlu0 %v3665, 96
        %v3713 = vpop.permute.xlu0 %3712
        %v3730 = vsel %vm1322, %v3683, 0.0
        %3731 = vadd.xlane.f32.xlu0 %v3730
        %v3732 = vpop.xlane.xlu0 %3731
        %v3733 = vsel %vm1322, %v3685, 0.0
        %3734 = vadd.xlane.f32.xlu0 %v3733
        %v3735 = vpop.xlane.xlu0 %3734
        %v3736 = vsel %vm1322, %v3687, 0.0
        %3737 = vadd.xlane.f32.xlu0 %v3736
        %v3738 = vpop.xlane.xlu0 %3737
        %v3739 = vsel %vm1322, %v3689, 0.0
        %3740 = vadd.xlane.f32.xlu0 %v3739
        %v3741 = vpop.xlane.xlu0 %3740
        %v3742 = vsel %vm1322, %v3691, 0.0
        %3743 = vadd.xlane.f32.xlu0 %v3742
        %v3744 = vpop.xlane.xlu0 %3743
        %v3745 = vsel %vm1322, %v3693, 0.0
        %3746 = vadd.xlane.f32.xlu0 %v3745
        %v3747 = vpop.xlane.xlu0 %3746
        %v3748 = vsel %vm1322, %v3695, 0.0
        %3749 = vadd.xlane.f32.xlu0 %v3748
        %v3750 = vpop.xlane.xlu0 %3749
        %v3751 = vsel %vm1322, %v3697, 0.0
        %3752 = vadd.xlane.f32.xlu0 %v3751
        %v3753 = vpop.xlane.xlu0 %3752
        %v3754 = vsel %vm1322, %v3699, 0.0
        %3755 = vadd.xlane.f32.xlu0 %v3754
        %v3756 = vpop.xlane.xlu0 %3755
        %v3757 = vsel %vm1322, %v3701, 0.0
        %3758 = vadd.xlane.f32.xlu0 %v3757
        %v3759 = vpop.xlane.xlu0 %3758
        %v3760 = vsel %vm1322, %v3703, 0.0
        %3761 = vadd.xlane.f32.xlu0 %v3760
        %v3762 = vpop.xlane.xlu0 %3761
        %v3763 = vsel %vm1322, %v3705, 0.0
        %3764 = vadd.xlane.f32.xlu0 %v3763
        %v3765 = vpop.xlane.xlu0 %3764
        %v3766 = vsel %vm1322, %v3707, 0.0
        %3767 = vadd.xlane.f32.xlu0 %v3766
        %v3768 = vpop.xlane.xlu0 %3767
        %v3769 = vsel %vm1322, %v3709, 0.0
        %3770 = vadd.xlane.f32.xlu0 %v3769
        %v3771 = vpop.xlane.xlu0 %3770
        %v3772 = vsel %vm1322, %v3711, 0.0
        %3773 = vadd.xlane.f32.xlu0 %v3772
        %v3774 = vpop.xlane.xlu0 %3773
        %v3775 = vsel %vm1322, %v3713, 0.0
        %3776 = vadd.xlane.f32.xlu0 %v3775
        %v3777 = vpop.xlane.xlu0 %3776
        %v3778 = vmul.f32 %v3732, %v3617
        %v3779 = vmul.f32 %v3735, %v3617
        %v3780 = vmul.f32 %v3738, %v3617
        %v3781 = vmul.f32 %v3741, %v3617
        %v3782 = vmul.f32 %v3744, %v3617
        %v3783 = vmul.f32 %v3747, %v3617
        %v3784 = vmul.f32 %v3750, %v3617
        %v3785 = vmul.f32 %v3753, %v3617
        %v3786 = vmul.f32 %v3756, %v3617
        %v3787 = vmul.f32 %v3759, %v3617
        %v3788 = vmul.f32 %v3762, %v3617
        %v3789 = vmul.f32 %v3765, %v3617
        %v3790 = vmul.f32 %v3768, %v3617
        %v3791 = vmul.f32 %v3771, %v3617
        %v3792 = vmul.f32 %v3774, %v3617
        %v3793 = vmul.f32 %v3777, %v3617
        %v3794 = vadd.f32 %v3778, 1e-05
        %v3795 = vadd.f32 %v3779, 1e-05
        %v3796 = vadd.f32 %v3780, 1e-05
        %v3797 = vadd.f32 %v3781, 1e-05
        %v3798 = vadd.f32 %v3782, 1e-05
        %v3799 = vadd.f32 %v3783, 1e-05
        %v3800 = vadd.f32 %v3784, 1e-05
        %v3801 = vadd.f32 %v3785, 1e-05
        %v3802 = vadd.f32 %v3786, 1e-05
        %v3803 = vadd.f32 %v3787, 1e-05
        %v3804 = vadd.f32 %v3788, 1e-05
        %v3805 = vadd.f32 %v3789, 1e-05
        %v3806 = vadd.f32 %v3790, 1e-05
        %v3807 = vadd.f32 %v3791, 1e-05
        %v3808 = vadd.f32 %v3792, 1e-05
        %v3809 = vadd.f32 %v3793, 1e-05
        %v3810 = vrsqrt.pop %v3794
        %v3811 = vrsqrt.pop %v3795
        %v3812 = vrsqrt.pop %v3796
        %v3813 = vrsqrt.pop %v3797
        %v3814 = vrsqrt.pop %v3798
        %v3815 = vrsqrt.pop %v3799
        %v3816 = vrsqrt.pop %v3800
        %v3817 = vrsqrt.pop %v3801
        %v3818 = vrsqrt.pop %v3802
        %v3819 = vrsqrt.pop %v3803
        %v3820 = vrsqrt.pop %v3804
        %v3821 = vrsqrt.pop %v3805
        %v3822 = vrsqrt.pop %v3806
        %v3823 = vrsqrt.pop %v3807
        %v3824 = vrsqrt.pop %v3808
        %v3825 = vrsqrt.pop %v3809
        %v3826 = vmul.f32 %v3634, %v3810
        %v3827 = vmul.f32 %v3635, %v3811
        %v3828 = vmul.f32 %v3636, %v3812
        %v3829 = vmul.f32 %v3637, %v3813
        %v3830 = vmul.f32 %v3638, %v3814
        %v3831 = vmul.f32 %v3639, %v3815
        %v3832 = vmul.f32 %v3640, %v3816
        %v3833 = vmul.f32 %v3641, %v3817
        %v3834 = vmul.f32 %v3642, %v3818
        %v3835 = vmul.f32 %v3643, %v3819
        %v3836 = vmul.f32 %v3644, %v3820
        %v3837 = vmul.f32 %v3645, %v3821
        %v3838 = vmul.f32 %v3646, %v3822
        %v3839 = vmul.f32 %v3647, %v3823
        %v3840 = vmul.f32 %v3648, %v3824
        %v3841 = vmul.f32 %v3649, %v3825
        %v3842 = vld [vmem:[%s7] sm:$0x1]
        %v3844 = vlaneseq
        %v3845 = vshrl.u32 %v3844, 7
        %v3846 = vsub.s32 0, %v3845
        %v3847 = vrot.slane %v3842, %v3846
        %3848 = vrot.lane.b32.xlu0 %v3847, 32
        %v3849 = vpop.permute.xlu0 %3848
        %v3851 = vmul.f32 %v3826, %v3849
        %v3852 = vmul.f32 %v3827, %v3849
        %v3853 = vmul.f32 %v3828, %v3849
        %v3854 = vmul.f32 %v3829, %v3849
        %v3855 = vmul.f32 %v3830, %v3849
        %v3856 = vmul.f32 %v3831, %v3849
        %v3857 = vmul.f32 %v3832, %v3849
        %v3858 = vmul.f32 %v3833, %v3849
        %v3859 = vmul.f32 %v3834, %v3849
        %v3860 = vmul.f32 %v3835, %v3849
        %v3861 = vmul.f32 %v3836, %v3849
        %v3862 = vmul.f32 %v3837, %v3849
        %v3863 = vmul.f32 %v3838, %v3849
        %v3864 = vmul.f32 %v3839, %v3849
        %v3865 = vmul.f32 %v3840, %v3849
        %v3866 = vmul.f32 %v3841, %v3849
        %v3867 = vld [vmem:[#allocation7] sm:$0x1]
        %v3869 = vlaneseq
        %v3870 = vshrl.u32 %v3869, 7
        %v3871 = vsub.s32 0, %v3870
        %v3872 = vrot.slane %v3867, %v3871
        %3873 = vrot.lane.b32.xlu0 %v3872, 32
        %v3874 = vpop.permute.xlu0 %3873
        %v3876 = vadd.f32 %v3851, %v3874
        %v3877 = vadd.f32 %v3852, %v3874
        %v3878 = vadd.f32 %v3853, %v3874
        %v3879 = vadd.f32 %v3854, %v3874
        %v3880 = vadd.f32 %v3855, %v3874
        %v3881 = vadd.f32 %v3856, %v3874
        %v3882 = vadd.f32 %v3857, %v3874
        %v3883 = vadd.f32 %v3858, %v3874
        %v3884 = vadd.f32 %v3859, %v3874
        %v3885 = vadd.f32 %v3860, %v3874
        %v3886 = vadd.f32 %v3861, %v3874
        %v3887 = vadd.f32 %v3862, %v3874
        %v3888 = vadd.f32 %v3863, %v3874
        %v3889 = vadd.f32 %v3864, %v3874
        %v3890 = vadd.f32 %v3865, %v3874
        %v3891 = vadd.f32 %v3866, %v3874
        %vm3892 = vcmp.gt.f32.partialorder %v3876, 0.0
        %vm3893 = vcmp.gt.f32.partialorder %v3877, 0.0
        %vm3894 = vcmp.gt.f32.partialorder %v3878, 0.0
        %vm3895 = vcmp.gt.f32.partialorder %v3879, 0.0
        %vm3896 = vcmp.gt.f32.partialorder %v3880, 0.0
        %vm3897 = vcmp.gt.f32.partialorder %v3881, 0.0
        %vm3898 = vcmp.gt.f32.partialorder %v3882, 0.0
        %vm3899 = vcmp.gt.f32.partialorder %v3883, 0.0
        %vm3900 = vcmp.gt.f32.partialorder %v3884, 0.0
        %vm3901 = vcmp.gt.f32.partialorder %v3885, 0.0
        %vm3902 = vcmp.gt.f32.partialorder %v3886, 0.0
        %vm3903 = vcmp.gt.f32.partialorder %v3887, 0.0
        %vm3904 = vcmp.gt.f32.partialorder %v3888, 0.0
        %vm3905 = vcmp.gt.f32.partialorder %v3889, 0.0
        %vm3906 = vcmp.gt.f32.partialorder %v3890, 0.0
        %vm3907 = vcmp.gt.f32.partialorder %v3891, 0.0
        %v3908 = vmul.f32 %v3876, 0.01
        %v3909 = vmul.f32 %v3877, 0.01
        %v3910 = vmul.f32 %v3878, 0.01
        %v3911 = vmul.f32 %v3879, 0.01
        %v3912 = vmul.f32 %v3880, 0.01
        %v3913 = vmul.f32 %v3881, 0.01
        %v3914 = vmul.f32 %v3882, 0.01
        %v3915 = vmul.f32 %v3883, 0.01
        %v3916 = vmul.f32 %v3884, 0.01
        %v3917 = vmul.f32 %v3885, 0.01
        %v3918 = vmul.f32 %v3886, 0.01
        %v3919 = vmul.f32 %v3887, 0.01
        %v3920 = vmul.f32 %v3888, 0.01
        %v3921 = vmul.f32 %v3889, 0.01
        %v3922 = vmul.f32 %v3890, 0.01
        %v3923 = vmul.f32 %v3891, 0.01
        %v3924 = vsel %vm3892, %v3876, %v3908
        %v3925 = vsel %vm3893, %v3877, %v3909
        %v3926 = vsel %vm3894, %v3878, %v3910
        %v3927 = vsel %vm3895, %v3879, %v3911
        %v3928 = vsel %vm3896, %v3880, %v3912
        %v3929 = vsel %vm3897, %v3881, %v3913
        %v3930 = vsel %vm3898, %v3882, %v3914
        %v3931 = vsel %vm3899, %v3883, %v3915
        %v3932 = vsel %vm3900, %v3884, %v3916
        %v3933 = vsel %vm3901, %v3885, %v3917
        %v3934 = vsel %vm3902, %v3886, %v3918
        %v3935 = vsel %vm3903, %v3887, %v3919
        %v3936 = vsel %vm3904, %v3888, %v3920
        %v3937 = vsel %vm3905, %v3889, %v3921
        %v3938 = vsel %vm3906, %v3890, %v3922
        %v3939 = vsel %vm3907, %v3891, %v3923
        %3956 = vrot.lane.b32.xlu0 %v3924, 96
        %v3957 = vpop.permute.xlu0 %3956
        %3958 = vrot.lane.b32.xlu0 %v3925, 96
        %v3959 = vpop.permute.xlu0 %3958
        %3960 = vrot.lane.b32.xlu0 %v3926, 96
        %v3961 = vpop.permute.xlu0 %3960
        %3962 = vrot.lane.b32.xlu0 %v3927, 96
        %v3963 = vpop.permute.xlu0 %3962
        %3964 = vrot.lane.b32.xlu0 %v3928, 96
        %v3965 = vpop.permute.xlu0 %3964
        %3966 = vrot.lane.b32.xlu0 %v3929, 96
        %v3967 = vpop.permute.xlu0 %3966
        %3968 = vrot.lane.b32.xlu0 %v3930, 96
        %v3969 = vpop.permute.xlu0 %3968
        %3970 = vrot.lane.b32.xlu0 %v3931, 96
        %v3971 = vpop.permute.xlu0 %3970
        %3972 = vrot.lane.b32.xlu0 %v3932, 96
        %v3973 = vpop.permute.xlu0 %3972
        %3974 = vrot.lane.b32.xlu0 %v3933, 96
        %v3975 = vpop.permute.xlu0 %3974
        %3976 = vrot.lane.b32.xlu0 %v3934, 96
        %v3977 = vpop.permute.xlu0 %3976
        %3978 = vrot.lane.b32.xlu0 %v3935, 96
        %v3979 = vpop.permute.xlu0 %3978
        %3980 = vrot.lane.b32.xlu0 %v3936, 96
        %v3981 = vpop.permute.xlu0 %3980
        %3982 = vrot.lane.b32.xlu0 %v3937, 96
        %v3983 = vpop.permute.xlu0 %3982
        %3984 = vrot.lane.b32.xlu0 %v3938, 96
        %v3985 = vpop.permute.xlu0 %3984
        %3986 = vrot.lane.b32.xlu0 %v3939, 96
        %v3987 = vpop.permute.xlu0 %3986
        %4004 = vst.msk [vmem:[%s382] sm:$0xff] %vm1322, %v3957
        %4005 = vst.msk [vmem:[%s382 + $0x8] sm:$0xff] %vm1322, %v3959
        %4006 = vst.msk [vmem:[%s382 + $0x10] sm:$0xff] %vm1322, %v3961
        %4007 = vst.msk [vmem:[%s382 + $0x18] sm:$0xff] %vm1322, %v3963
        %4008 = vst.msk [vmem:[%s382 + $0x20] sm:$0xff] %vm1322, %v3965
        %4009 = vst.msk [vmem:[%s382 + $0x28] sm:$0xff] %vm1322, %v3967
        %4010 = vst.msk [vmem:[%s382 + $0x30] sm:$0xff] %vm1322, %v3969
        %4011 = vst.msk [vmem:[%s382 + $0x38] sm:$0xff] %vm1322, %v3971
        %4012 = vst.msk [vmem:[%s382 + $0x40] sm:$0xff] %vm1322, %v3973
        %4013 = vst.msk [vmem:[%s382 + $0x48] sm:$0xff] %vm1322, %v3975
        %4014 = vst.msk [vmem:[%s382 + $0x50] sm:$0xff] %vm1322, %v3977
        %4015 = vst.msk [vmem:[%s382 + $0x58] sm:$0xff] %vm1322, %v3979
        %4016 = vst.msk [vmem:[%s382 + $0x60] sm:$0xff] %vm1322, %v3981
        %4017 = vst.msk [vmem:[%s382 + $0x68] sm:$0xff] %vm1322, %v3983
        %4018 = vst.msk [vmem:[%s382 + $0x70] sm:$0xff] %vm1322, %v3985
        %4019 = vst.msk [vmem:[%s382 + $0x78] sm:$0xff] %vm1322, %v3987
        %s4020 = sand.u32 %s232, 1
        %s4021 = scalar_lea.sflag [#allocation4], %s4020
        %s4022 = sand.u32 %s232, 1
        %s4023 = smul.addr %s4022, 128
        %s4024 = scalar_lea.vmem [#allocation8], %s4023
        // Predicated region
        $region69: #{homo_layer.1} parent=55 // pred_check
          %p4025 = pneg %p242
        $region70: #{homo_layer.1} parent=55 // pred_check_branch
          %4027 = sbr.rel (%p4025) target = $region72
        $region71: #{homo_layer.1} parent=55 // pred_region
          %s4028 = smul.u32 16, %s25
          %s4030 = ssub.s32 2048, 2048
          %4031 = vsyncadd %s4021, %s4030
          %s4032 = smul.addr %s4028, 128
          %s4033 = scalar_lea.hbm %s9, %s4032
          %s4034 = sshll.u32 %s4024, 4
          %s4035 = int_to_ptr.vmem [resolvable:$true] %s4034
          %4040 = dma.vmem_to_hbm [thread:$0]  %s4035, 2048, %s4033, %s4021, 128, 128, 8
        $region72: #{homo_layer.1} parent=55 // pred_fallthru
          _
      $region56: #{homo_layer.1} parent=5 // pred_fallthru
        _
      %p4041 = scmp.le.s32.totalorder 2, %s20
      // Predicated region
      $region73: #{homo_layer.1} parent=5 // pred_check
        %p4042 = pneg %p4041
      $region74: #{homo_layer.1} parent=5 // pred_check_branch
        %4044 = sbr.rel (%p4042) target = $region76
      $region75: #{homo_layer.1} parent=5 // pred_region
        %s4045 = ssub.s32 %s20, 2
        // Predicated region
        $region77: #{homo_layer.1} parent=75 // pred_check
          %p4046 = pneg %p248
        $region78: #{homo_layer.1} parent=75 // pred_check_branch
          %4048 = sbr.rel (%p4046) target = $region80
        $region79: #{homo_layer.1} parent=75 // pred_region
          %s4049 = sand.u32 %s233, 1
          %s4050 = scalar_lea.sflag [#allocation4], %s4049
          %s4051 = sand.u32 %s233, 1
          %s4052 = smul.addr %s4051, 128
          %s4053 = scalar_lea.vmem [#allocation8], %s4052
          %4054 = dma.done %s4050, 2048
        $region80: #{homo_layer.1} parent=75 // pred_fallthru
          _
      $region76: #{homo_layer.1} parent=5 // pred_fallthru
        _
    $region6: #{homo_layer.1} parent=1 // loop_footer
      %s24 = sadd.s32 1, %s20
    $region7: #{homo_layer.1} parent=1 // loop_footer_branch
      %19 = sbr.rel target = $region3
    $region8: #{homo_layer.1} parent=1 // loop_exit
      _
    %4055 = vsyncpa [#allocation3], 1
    %s4056 = scalar_lea.sflag [#allocation3], 1
    %4057 = vsyncpa %s4056, 1
    %4058 = vsyncpa [#allocation6], 1
    %4059 = vsyncpa [#allocation4], 1
    %s4060 = scalar_lea.sflag [#allocation4], 1
    %4061 = vsyncpa %s4060, 1

</llo_original>
